<compile_context>
chip_gen: v7x
topology: tpu7x:2x2x1
jax: 0.10.0
libtpu: 0.0.40
codegen_flags: <defaults>
</compile_context>

<pallas_src>
import jax
import jax.numpy as jnp
import numpy as np
from jax.experimental import pallas as pl
from jax.experimental.pallas import tpu as pltpu

C_IN = 256   # glu input/output channels (fixed by the module)
C_H = 64     # hidden channels (fixed by the module)
EPS = 1e-5   # nn.InstanceNorm1d default eps


def make_glu_kernel(ori_dila, ssc_k, Lp, L_true):
    D = ori_dila
    inv_L = 1.0 / float(L_true)

    def kernel(x_ref, w_in_ref,
               oa_ref, og_ref, ob_ref, ossc_ref, owd_ref,
               aa_ref, ag_ref, ab_ref, assc_ref, awd_ref,
               pa_ref, pg_ref, pb_ref, w_out_ref,
               o_ref):
        # Hoisted constants: JAX does not CSE iota/broadcasts, so build once.
        lane = jax.lax.broadcasted_iota(jnp.int32, (1, Lp), 1)
        len_mask = (lane < L_true).astype(jnp.float32)       # true-length mask

        def shift_right(h, s):
            # causal shift along lanes: out[:, t] = h[:, t - s], zeros for t < s.
            # XLU rotate + one VPU select; no MXU work, no LxL matrices.
            if s == 0:
                return h
            return jnp.where(lane >= s, pltpu.roll(h, s, 1), 0.0)

        def prelu(h, a):
            return jnp.where(h > 0, h, a * h)

        def inorm(h, g, b):
            # InstanceNorm1d (biased variance) over the *true* length only:
            # padded lanes are masked out of the statistics.
            hm = h * len_mask
            m = jnp.sum(hm, axis=1, keepdims=True) * inv_L
            d = (h - m) * len_mask
            v = jnp.sum(d * d, axis=1, keepdims=True) * inv_L
            return (h - m) * jax.lax.rsqrt(v + EPS) * g + b

        def branch(y, a_ref, g_ref, b_ref, ssc_ref, wd_ref):
            h = prelu(y, a_ref[...])
            h = inorm(h, g_ref[...], b_ref[...])
            # ShareSepConv: causal depthwise conv, one tap vector shared across
            # channels (left pad ssc_k - 1) -> scalar * vector FMAs on the VPU.
            acc = ssc_ref[ssc_k - 1] * h                      # tap with shift 0
            for k in range(ssc_k - 1):
                acc = acc + ssc_ref[k] * shift_right(h, ssc_k - 1 - k)
            # Causal dilated Conv1d(64, 64, kernel=5, dilation=D): stack the 5
            # causally shifted copies along channels and do ONE K=320 bf16 MXU
            # matmul instead of 5 small K=64 matmuls.
            taps = [shift_right(acc, (4 - k) * D) for k in range(5)]
            stacked = jnp.concatenate(taps, axis=0).astype(jnp.bfloat16)  # (320, Lp)
            return jnp.dot(wd_ref[...], stacked,
                           preferred_element_type=jnp.float32)            # (64, Lp)

        x = x_ref[...]                                                    # (256, Lp) f32
        y = jnp.dot(w_in_ref[...], x.astype(jnp.bfloat16),
                    preferred_element_type=jnp.float32)                   # 1x1 in_conv
        yo = branch(y, oa_ref, og_ref, ob_ref, ossc_ref, owd_ref)         # ori_conv path
        ya = branch(y, aa_ref, ag_ref, ab_ref, assc_ref, awd_ref)         # att_ori path
        g = yo * jax.nn.sigmoid(ya)                                       # gated
        h = prelu(g, pa_ref[...])
        h = inorm(h, pg_ref[...], pb_ref[...])
        out = jnp.dot(w_out_ref[...], h.astype(jnp.bfloat16),
                      preferred_element_type=jnp.float32)                 # 1x1 out_conv
        o_ref[...] = out + x                                              # residual (f32)

    return kernel


def glu_forward(x, params, ori_dila):
    N, Cin, L = x.shape
    assert Cin == C_IN
    ssc_k = params["ori"]["ssc"].shape[0]
    Lp = ((L + 127) // 128) * 128                        # lane-dense time axis
    kernel = make_glu_kernel(ori_dila, ssc_k, Lp, L)

    xp = jnp.pad(x, ((0, 0), (0, 0), (0, Lp - L))) if Lp != L else x

    def vspec(shape):
        nd = len(shape)
        return pl.BlockSpec(shape, lambda n, _nd=nd: (0,) * _nd)

    smem_spec = pl.BlockSpec(memory_space=pltpu.MemorySpace.SMEM)
    col = lambda v: v.reshape(C_H, 1)
    bf16 = lambda w: w.astype(jnp.bfloat16)
    # Fuse the 5 dilated-conv taps: (5, o, i) -> (o, 5*i), column block k = wd[k].
    fuse_wd = lambda wd: bf16(jnp.transpose(wd, (1, 0, 2)).reshape(C_H, 5 * C_H))

    inputs = (
        xp,
        bf16(params["w_in"]),
        col(params["ori"]["a"]), col(params["ori"]["g"]), col(params["ori"]["b"]),
        params["ori"]["ssc"], fuse_wd(params["ori"]["wd"]),
        col(params["att"]["a"]), col(params["att"]["g"]), col(params["att"]["b"]),
        params["att"]["ssc"], fuse_wd(params["att"]["wd"]),
        col(params["out_a"]), col(params["out_g"]), col(params["out_b"]),
        bf16(params["w_out"]),
    )

    in_specs = [
        pl.BlockSpec((None, C_IN, Lp), lambda n: (n, 0, 0)),   # x, per-batch tile
        vspec((C_H, C_IN)),                                    # in_conv weight (bf16)
        vspec((C_H, 1)), vspec((C_H, 1)), vspec((C_H, 1)),     # ori PReLU / IN gamma / IN beta
        smem_spec, vspec((C_H, 5 * C_H)),                      # ori SSC taps / fused dilated conv
        vspec((C_H, 1)), vspec((C_H, 1)), vspec((C_H, 1)),     # att PReLU / IN gamma / IN beta
        smem_spec, vspec((C_H, 5 * C_H)),                      # att SSC taps / fused dilated conv
        vspec((C_H, 1)), vspec((C_H, 1)), vspec((C_H, 1)),     # out PReLU / IN gamma / IN beta
        vspec((C_IN, C_H)),                                    # out_conv weight (bf16)
    ]

    # VMEM budget: double-buffered (C_IN, Lp) x/out blocks + ~20 (C_H, Lp) f32
    # temporaries + resident weights.  Clamp with headroom under v7x's 64 MiB.
    est = 4 * Lp * (4 * C_IN + 24 * C_H) + (2 << 20)
    vmem_limit = int(min(60 * 2**20, max(32 * 2**20, 2 * est)))
    # TODO(synk): for very long sequences (Lp >~ 8k) add an L-tiling pass with a
    # two-pass (carried-stats) InstanceNorm instead of holding the full (C, Lp) row.

    out = pl.pallas_call(
        kernel,
        out_shape=jax.ShapeDtypeStruct((N, C_IN, Lp), x.dtype),
        grid=(N,),
        in_specs=in_specs,
        out_specs=pl.BlockSpec((None, C_IN, Lp), lambda n: (n, 0, 0)),
        compiler_params=pltpu.CompilerParams(
            dimension_semantics=("parallel",),   # batch across megacore / v7x TCs
            vmem_limit_bytes=vmem_limit,
        ),
    )(*inputs)
    return out[:, :, :L] if Lp != L else out


def init_params(key, dila_rate):
    ori_dila = 2 ** dila_rate
    K = 2 * ori_dila - 1
    ks = jax.random.split(key, 4)
    ssc = np.zeros((K,), np.float32)
    ssc[(K - 1) // 2] = 1.0                      # ShareSepConv init: delta at center
    ssc = jnp.asarray(ssc)

    def branch_params(k):
        return dict(
            a=jnp.full((C_H,), 0.25, jnp.float32),   # PReLU default init
            g=jnp.ones((C_H,), jnp.float32),         # InstanceNorm affine weight
            b=jnp.zeros((C_H,), jnp.float32),        # InstanceNorm affine bias
            ssc=ssc,
            wd=(0.05 * jax.random.normal(k, (C_H, C_H, 5), jnp.float32)).transpose(2, 0, 1),
        )

    params = dict(
        w_in=0.05 * jax.random.normal(ks[0], (C_H, C_IN), jnp.float32),
        ori=branch_params(ks[1]),
        att=branch_params(ks[2]),
        out_a=jnp.full((C_H,), 0.25, jnp.float32),
        out_g=jnp.ones((C_H,), jnp.float32),
        out_b=jnp.zeros((C_H,), jnp.float32),
        w_out=0.05 * jax.random.normal(ks[3], (C_IN, C_H), jnp.float32),
    )
    return params, ori_dila


def ref_forward(x, params, d, matmul_dtype=None):
    # Pure-JAX reference.  matmul_dtype=bf16 mimics the kernel's bf16 matmul
    # inputs (with f32 accumulation) for a tight structural check; None gives
    # the exact f32 module math.
    def mm(w, h):
        if matmul_dtype is not None:
            w = w.astype(matmul_dtype)
            h = h.astype(matmul_dtype)
        return jnp.einsum("oi,nil->nol", w, h, preferred_element_type=jnp.float32)

    def shift(h, s):
        if s == 0:
            return h
        return jnp.concatenate(
            [jnp.zeros(h.shape[:-1] + (s,), h.dtype), h[..., :-s]], axis=-1)

    def prelu(h, a):
        return jnp.where(h > 0, h, a[None, :, None] * h)

    def inorm(h, g, b):
        m = h.mean(axis=-1, keepdims=True)
        v = ((h - m) ** 2).mean(axis=-1, keepdims=True)
        return (h - m) / jnp.sqrt(v + EPS) * g[None, :, None] + b[None, :, None]

    def branch(y, p):
        h = inorm(prelu(y, p["a"]), p["g"], p["b"])
        K = p["ssc"].shape[0]
        acc = jnp.zeros_like(h)
        for k in range(K):
            acc = acc + p["ssc"][k] * shift(h, K - 1 - k)
        out = jnp.zeros_like(acc)
        for k in range(5):
            out = out + mm(p["wd"][k], shift(acc, (4 - k) * d))
        return out

    y = mm(params["w_in"], x)
    g = branch(y, params["ori"]) * jax.nn.sigmoid(branch(y, params["att"]))
    h = inorm(prelu(g, params["out_a"]), params["out_g"], params["out_b"])
    return mm(params["w_out"], h) + x


if __name__ == "__main__":
    key = jax.random.PRNGKey(0)
    k_x, k_p = jax.random.split(key)

    dila_rate = 1          # ori_dila = 2, ShareSepConv kernel_size = 3
    N, L = 2, 32           # small test shapes (time axis padded to 128 lanes inside)
    params, ori_dila = init_params(k_p, dila_rate)
    x = jax.random.normal(k_x, (N, C_IN, L), jnp.float32)

    out = glu_forward(x, params, ori_dila)
    out = np.asarray(jax.block_until_ready(out))

    # Structural check: reference with the same bf16-matmul-input policy.
    ref_bf16 = np.asarray(ref_forward(x, params, ori_dila, matmul_dtype=jnp.bfloat16))
    np.testing.assert_allclose(out, ref_bf16, rtol=5e-3, atol=5e-3)

    # Semantic check vs the full-f32 module math (bf16 matmuls => loose tol).
    ref_f32 = np.asarray(ref_forward(x, params, ori_dila))
    np.testing.assert_allclose(out, ref_f32, rtol=5e-2, atol=5e-2)

    print("KERNEL_OK")
</pallas_src>

<mosaic_0001>
module attributes {stable_mosaic.version = 11 : i64} {
  func.func @kernel(%arg0: i32, %arg1: memref<1x256x128xf32, #tpu.memory_space<vmem>>, %arg2: memref<64x256xbf16, #tpu.memory_space<vmem>>, %arg3: memref<64x1xf32, #tpu.memory_space<vmem>>, %arg4: memref<64x1xf32, #tpu.memory_space<vmem>>, %arg5: memref<64x1xf32, #tpu.memory_space<vmem>>, %arg6: memref<3xf32, #tpu.memory_space<smem>>, %arg7: memref<64x320xbf16, #tpu.memory_space<vmem>>, %arg8: memref<64x1xf32, #tpu.memory_space<vmem>>, %arg9: memref<64x1xf32, #tpu.memory_space<vmem>>, %arg10: memref<64x1xf32, #tpu.memory_space<vmem>>, %arg11: memref<3xf32, #tpu.memory_space<smem>>, %arg12: memref<64x320xbf16, #tpu.memory_space<vmem>>, %arg13: memref<64x1xf32, #tpu.memory_space<vmem>>, %arg14: memref<64x1xf32, #tpu.memory_space<vmem>>, %arg15: memref<64x1xf32, #tpu.memory_space<vmem>>, %arg16: memref<256x64xbf16, #tpu.memory_space<vmem>>, %arg17: memref<1x256x128xf32, #tpu.memory_space<vmem>>) attributes {dimension_semantics = [#tpu.dimension_semantics<parallel>], iteration_bounds = array<i64: 2>, scalar_prefetch = 0 : i64, scratch_operands = 0 : i64, tpu.core_type = #tpu.core_type<tc>, window_params = [{transform_indices = @transform_0, window_bounds = array<i64: 1, 256, 128>}, {pipeline_mode = #tpu.pipeline_mode<synchronous>, transform_indices = @transform_1, window_bounds = array<i64: 64, 256>}, {pipeline_mode = #tpu.pipeline_mode<synchronous>, transform_indices = @transform_2, window_bounds = array<i64: 64, 1>}, {pipeline_mode = #tpu.pipeline_mode<synchronous>, transform_indices = @transform_3, window_bounds = array<i64: 64, 1>}, {pipeline_mode = #tpu.pipeline_mode<synchronous>, transform_indices = @transform_4, window_bounds = array<i64: 64, 1>}, {transform_indices = @transform_5, window_bounds = array<i64: 3>}, {pipeline_mode = #tpu.pipeline_mode<synchronous>, transform_indices = @transform_6, window_bounds = array<i64: 64, 320>}, {pipeline_mode = #tpu.pipeline_mode<synchronous>, transform_indices = @transform_7, window_bounds = array<i64: 64, 1>}, {pipeline_mode = #tpu.pipeline_mode<synchronous>, transform_indices = @transform_8, window_bounds = array<i64: 64, 1>}, {pipeline_mode = #tpu.pipeline_mode<synchronous>, transform_indices = @transform_9, window_bounds = array<i64: 64, 1>}, {transform_indices = @transform_10, window_bounds = array<i64: 3>}, {pipeline_mode = #tpu.pipeline_mode<synchronous>, transform_indices = @transform_11, window_bounds = array<i64: 64, 320>}, {pipeline_mode = #tpu.pipeline_mode<synchronous>, transform_indices = @transform_12, window_bounds = array<i64: 64, 1>}, {pipeline_mode = #tpu.pipeline_mode<synchronous>, transform_indices = @transform_13, window_bounds = array<i64: 64, 1>}, {pipeline_mode = #tpu.pipeline_mode<synchronous>, transform_indices = @transform_14, window_bounds = array<i64: 64, 1>}, {pipeline_mode = #tpu.pipeline_mode<synchronous>, transform_indices = @transform_15, window_bounds = array<i64: 256, 64>}, {transform_indices = @transform_16, window_bounds = array<i64: 1, 256, 128>}]} {
    %0 = tpu.iota {dimensions = array<i32: 1>} : vector<1x128xi32>
    %c32_i32 = arith.constant 32 : i32
    %1 = vector.broadcast %c32_i32 : i32 to vector<1x128xi32>
    %2 = arith.cmpi slt, %0, %1 : vector<1x128xi32>
    %3 = arith.extui %2 : vector<1x128xi1> to vector<1x128xi32>
    %4 = arith.sitofp %3 : vector<1x128xi32> to vector<1x128xf32>
    %c0 = arith.constant 0 : index
    %c0_0 = arith.constant 0 : index
    %c0_1 = arith.constant 0 : index
    %5 = vector.load %arg1[%c0, %c0_0, %c0_1] : memref<1x256x128xf32, #tpu.memory_space<vmem>>, vector<1x256x128xf32>
    %6 = vector.shape_cast %5 : vector<1x256x128xf32> to vector<256x128xf32>
    %c0_2 = arith.constant 0 : index
    %c0_3 = arith.constant 0 : index
    %7 = vector.load %arg2[%c0_2, %c0_3] : memref<64x256xbf16, #tpu.memory_space<vmem>>, vector<64x256xbf16>
    %8 = arith.truncf %6 : vector<256x128xf32> to vector<256x128xbf16>
    %cst = arith.constant dense<0.000000e+00> : vector<64x128xf32>
    %9 = tpu.matmul %7, %8, %cst {dimension_numbers = #tpu.dot_dimension_numbers<[1], [0], [0], [1], [0, 0, 1, 1], [], []>} : vector<64x256xbf16>, vector<256x128xbf16>, vector<64x128xf32> -> vector<64x128xf32>
    %c0_4 = arith.constant 0 : index
    %c0_5 = arith.constant 0 : index
    %10 = vector.load %arg3[%c0_4, %c0_5] : memref<64x1xf32, #tpu.memory_space<vmem>>, vector<64x1xf32>
    %cst_6 = arith.constant 0.000000e+00 : f32
    %11 = vector.broadcast %cst_6 : f32 to vector<64x128xf32>
    %12 = arith.cmpf ogt, %9, %11 : vector<64x128xf32>
    %13 = vector.broadcast %10 : vector<64x1xf32> to vector<64x128xf32>
    %14 = arith.mulf %13, %9 : vector<64x128xf32>
    %15 = arith.select %12, %9, %14 : vector<64x128xi1>, vector<64x128xf32>
    %c0_7 = arith.constant 0 : index
    %c0_8 = arith.constant 0 : index
    %16 = vector.load %arg4[%c0_7, %c0_8] : memref<64x1xf32, #tpu.memory_space<vmem>>, vector<64x1xf32>
    %c0_9 = arith.constant 0 : index
    %c0_10 = arith.constant 0 : index
    %17 = vector.load %arg5[%c0_9, %c0_10] : memref<64x1xf32, #tpu.memory_space<vmem>>, vector<64x1xf32>
    %18 = vector.broadcast %4 : vector<1x128xf32> to vector<64x128xf32>
    %19 = arith.mulf %15, %18 : vector<64x128xf32>
    %cst_11 = arith.constant dense<0.000000e+00> : vector<64xf32>
    %20 = vector.multi_reduction <add>, %19, %cst_11 [1] : vector<64x128xf32> to vector<64xf32>
    %21 = vector.shape_cast %20 : vector<64xf32> to vector<64x1xf32>
    %cst_12 = arith.constant 3.125000e-02 : f32
    %22 = vector.broadcast %cst_12 : f32 to vector<64x1xf32>
    %23 = arith.mulf %21, %22 : vector<64x1xf32>
    %24 = vector.broadcast %23 : vector<64x1xf32> to vector<64x128xf32>
    %25 = arith.subf %15, %24 : vector<64x128xf32>
    %26 = vector.broadcast %4 : vector<1x128xf32> to vector<64x128xf32>
    %27 = arith.mulf %25, %26 : vector<64x128xf32>
    %28 = arith.mulf %27, %27 : vector<64x128xf32>
    %cst_13 = arith.constant dense<0.000000e+00> : vector<64xf32>
    %29 = vector.multi_reduction <add>, %28, %cst_13 [1] : vector<64x128xf32> to vector<64xf32>
    %30 = vector.shape_cast %29 : vector<64xf32> to vector<64x1xf32>
    %cst_14 = arith.constant 3.125000e-02 : f32
    %31 = vector.broadcast %cst_14 : f32 to vector<64x1xf32>
    %32 = arith.mulf %30, %31 : vector<64x1xf32>
    %33 = vector.broadcast %23 : vector<64x1xf32> to vector<64x128xf32>
    %34 = arith.subf %15, %33 : vector<64x128xf32>
    %cst_15 = arith.constant 9.99999974E-6 : f32
    %35 = vector.broadcast %cst_15 : f32 to vector<64x1xf32>
    %36 = arith.addf %32, %35 : vector<64x1xf32>
    %37 = math.rsqrt %36 : vector<64x1xf32>
    %38 = vector.broadcast %37 : vector<64x1xf32> to vector<64x128xf32>
    %39 = arith.mulf %34, %38 : vector<64x128xf32>
    %40 = vector.broadcast %16 : vector<64x1xf32> to vector<64x128xf32>
    %41 = arith.mulf %39, %40 : vector<64x128xf32>
    %42 = vector.broadcast %17 : vector<64x1xf32> to vector<64x128xf32>
    %43 = arith.addf %41, %42 : vector<64x128xf32>
    %c2 = arith.constant 2 : index
    %44 = memref.load %arg6[%c2] : memref<3xf32, #tpu.memory_space<smem>>
    %45 = vector.broadcast %44 : f32 to vector<64x128xf32>
    %46 = arith.mulf %45, %43 : vector<64x128xf32>
    %c0_16 = arith.constant 0 : index
    %47 = memref.load %arg6[%c0_16] : memref<3xf32, #tpu.memory_space<smem>>
    %c2_i32 = arith.constant 2 : i32
    %48 = vector.broadcast %c2_i32 : i32 to vector<1x128xi32>
    %49 = arith.cmpi sge, %0, %48 : vector<1x128xi32>
    %c2_i32_17 = arith.constant 2 : i32
    %50 = tpu.dynamic_rotate %43 by %c2_i32_17 dim 1 : vector<64x128xf32>, i32 -> vector<64x128xf32>
    %cst_18 = arith.constant 0.000000e+00 : f32
    %51 = vector.shape_cast %49 : vector<1x128xi1> to vector<1x128xi1>
    %52 = vector.broadcast %51 : vector<1x128xi1> to vector<64x128xi1>
    %53 = vector.broadcast %cst_18 : f32 to vector<64x128xf32>
    %54 = arith.select %52, %50, %53 : vector<64x128xi1>, vector<64x128xf32>
    %55 = vector.broadcast %47 : f32 to vector<64x128xf32>
    %56 = arith.mulf %55, %54 : vector<64x128xf32>
    %57 = arith.addf %46, %56 : vector<64x128xf32>
    %c1 = arith.constant 1 : index
    %58 = memref.load %arg6[%c1] : memref<3xf32, #tpu.memory_space<smem>>
    %c1_i32 = arith.constant 1 : i32
    %59 = vector.broadcast %c1_i32 : i32 to vector<1x128xi32>
    %60 = arith.cmpi sge, %0, %59 : vector<1x128xi32>
    %c1_i32_19 = arith.constant 1 : i32
    %61 = tpu.dynamic_rotate %43 by %c1_i32_19 dim 1 : vector<64x128xf32>, i32 -> vector<64x128xf32>
    %cst_20 = arith.constant 0.000000e+00 : f32
    %62 = vector.shape_cast %60 : vector<1x128xi1> to vector<1x128xi1>
    %63 = vector.broadcast %62 : vector<1x128xi1> to vector<64x128xi1>
    %64 = vector.broadcast %cst_20 : f32 to vector<64x128xf32>
    %65 = arith.select %63, %61, %64 : vector<64x128xi1>, vector<64x128xf32>
    %66 = vector.broadcast %58 : f32 to vector<64x128xf32>
    %67 = arith.mulf %66, %65 : vector<64x128xf32>
    %68 = arith.addf %57, %67 : vector<64x128xf32>
    %c8_i32 = arith.constant 8 : i32
    %69 = vector.broadcast %c8_i32 : i32 to vector<1x128xi32>
    %70 = arith.cmpi sge, %0, %69 : vector<1x128xi32>
    %c8_i32_21 = arith.constant 8 : i32
    %71 = tpu.dynamic_rotate %68 by %c8_i32_21 dim 1 : vector<64x128xf32>, i32 -> vector<64x128xf32>
    %cst_22 = arith.constant 0.000000e+00 : f32
    %72 = vector.shape_cast %70 : vector<1x128xi1> to vector<1x128xi1>
    %73 = vector.broadcast %72 : vector<1x128xi1> to vector<64x128xi1>
    %74 = vector.broadcast %cst_22 : f32 to vector<64x128xf32>
    %75 = arith.select %73, %71, %74 : vector<64x128xi1>, vector<64x128xf32>
    %c6_i32 = arith.constant 6 : i32
    %76 = vector.broadcast %c6_i32 : i32 to vector<1x128xi32>
    %77 = arith.cmpi sge, %0, %76 : vector<1x128xi32>
    %c6_i32_23 = arith.constant 6 : i32
    %78 = tpu.dynamic_rotate %68 by %c6_i32_23 dim 1 : vector<64x128xf32>, i32 -> vector<64x128xf32>
    %cst_24 = arith.constant 0.000000e+00 : f32
    %79 = vector.shape_cast %77 : vector<1x128xi1> to vector<1x128xi1>
    %80 = vector.broadcast %79 : vector<1x128xi1> to vector<64x128xi1>
    %81 = vector.broadcast %cst_24 : f32 to vector<64x128xf32>
    %82 = arith.select %80, %78, %81 : vector<64x128xi1>, vector<64x128xf32>
    %c4_i32 = arith.constant 4 : i32
    %83 = vector.broadcast %c4_i32 : i32 to vector<1x128xi32>
    %84 = arith.cmpi sge, %0, %83 : vector<1x128xi32>
    %c4_i32_25 = arith.constant 4 : i32
    %85 = tpu.dynamic_rotate %68 by %c4_i32_25 dim 1 : vector<64x128xf32>, i32 -> vector<64x128xf32>
    %cst_26 = arith.constant 0.000000e+00 : f32
    %86 = vector.shape_cast %84 : vector<1x128xi1> to vector<1x128xi1>
    %87 = vector.broadcast %86 : vector<1x128xi1> to vector<64x128xi1>
    %88 = vector.broadcast %cst_26 : f32 to vector<64x128xf32>
    %89 = arith.select %87, %85, %88 : vector<64x128xi1>, vector<64x128xf32>
    %c2_i32_27 = arith.constant 2 : i32
    %90 = vector.broadcast %c2_i32_27 : i32 to vector<1x128xi32>
    %91 = arith.cmpi sge, %0, %90 : vector<1x128xi32>
    %c2_i32_28 = arith.constant 2 : i32
    %92 = tpu.dynamic_rotate %68 by %c2_i32_28 dim 1 : vector<64x128xf32>, i32 -> vector<64x128xf32>
    %cst_29 = arith.constant 0.000000e+00 : f32
    %93 = vector.shape_cast %91 : vector<1x128xi1> to vector<1x128xi1>
    %94 = vector.broadcast %93 : vector<1x128xi1> to vector<64x128xi1>
    %95 = vector.broadcast %cst_29 : f32 to vector<64x128xf32>
    %96 = arith.select %94, %92, %95 : vector<64x128xi1>, vector<64x128xf32>
    %97 = tpu.concatenate %75, %82, %89, %96, %68 in 0 : vector<64x128xf32>, vector<64x128xf32>, vector<64x128xf32>, vector<64x128xf32>, vector<64x128xf32> -> vector<320x128xf32>
    %98 = arith.truncf %97 : vector<320x128xf32> to vector<320x128xbf16>
    %c0_30 = arith.constant 0 : index
    %c0_31 = arith.constant 0 : index
    %99 = vector.load %arg7[%c0_30, %c0_31] : memref<64x320xbf16, #tpu.memory_space<vmem>>, vector<64x320xbf16>
    %cst_32 = arith.constant dense<0.000000e+00> : vector<64x128xf32>
    %100 = tpu.matmul %99, %98, %cst_32 {dimension_numbers = #tpu.dot_dimension_numbers<[1], [0], [0], [1], [0, 0, 1, 1], [], []>} : vector<64x320xbf16>, vector<320x128xbf16>, vector<64x128xf32> -> vector<64x128xf32>
    %c0_33 = arith.constant 0 : index
    %c0_34 = arith.constant 0 : index
    %101 = vector.load %arg8[%c0_33, %c0_34] : memref<64x1xf32, #tpu.memory_space<vmem>>, vector<64x1xf32>
    %cst_35 = arith.constant 0.000000e+00 : f32
    %102 = vector.broadcast %cst_35 : f32 to vector<64x128xf32>
    %103 = arith.cmpf ogt, %9, %102 : vector<64x128xf32>
    %104 = vector.broadcast %101 : vector<64x1xf32> to vector<64x128xf32>
    %105 = arith.mulf %104, %9 : vector<64x128xf32>
    %106 = arith.select %103, %9, %105 : vector<64x128xi1>, vector<64x128xf32>
    %c0_36 = arith.constant 0 : index
    %c0_37 = arith.constant 0 : index
    %107 = vector.load %arg9[%c0_36, %c0_37] : memref<64x1xf32, #tpu.memory_space<vmem>>, vector<64x1xf32>
    %c0_38 = arith.constant 0 : index
    %c0_39 = arith.constant 0 : index
    %108 = vector.load %arg10[%c0_38, %c0_39] : memref<64x1xf32, #tpu.memory_space<vmem>>, vector<64x1xf32>
    %109 = vector.broadcast %4 : vector<1x128xf32> to vector<64x128xf32>
    %110 = arith.mulf %106, %109 : vector<64x128xf32>
    %cst_40 = arith.constant dense<0.000000e+00> : vector<64xf32>
    %111 = vector.multi_reduction <add>, %110, %cst_40 [1] : vector<64x128xf32> to vector<64xf32>
    %112 = vector.shape_cast %111 : vector<64xf32> to vector<64x1xf32>
    %cst_41 = arith.constant 3.125000e-02 : f32
    %113 = vector.broadcast %cst_41 : f32 to vector<64x1xf32>
    %114 = arith.mulf %112, %113 : vector<64x1xf32>
    %115 = vector.broadcast %114 : vector<64x1xf32> to vector<64x128xf32>
    %116 = arith.subf %106, %115 : vector<64x128xf32>
    %117 = vector.broadcast %4 : vector<1x128xf32> to vector<64x128xf32>
    %118 = arith.mulf %116, %117 : vector<64x128xf32>
    %119 = arith.mulf %118, %118 : vector<64x128xf32>
    %cst_42 = arith.constant dense<0.000000e+00> : vector<64xf32>
    %120 = vector.multi_reduction <add>, %119, %cst_42 [1] : vector<64x128xf32> to vector<64xf32>
    %121 = vector.shape_cast %120 : vector<64xf32> to vector<64x1xf32>
    %cst_43 = arith.constant 3.125000e-02 : f32
    %122 = vector.broadcast %cst_43 : f32 to vector<64x1xf32>
    %123 = arith.mulf %121, %122 : vector<64x1xf32>
    %124 = vector.broadcast %114 : vector<64x1xf32> to vector<64x128xf32>
    %125 = arith.subf %106, %124 : vector<64x128xf32>
    %cst_44 = arith.constant 9.99999974E-6 : f32
    %126 = vector.broadcast %cst_44 : f32 to vector<64x1xf32>
    %127 = arith.addf %123, %126 : vector<64x1xf32>
    %128 = math.rsqrt %127 : vector<64x1xf32>
    %129 = vector.broadcast %128 : vector<64x1xf32> to vector<64x128xf32>
    %130 = arith.mulf %125, %129 : vector<64x128xf32>
    %131 = vector.broadcast %107 : vector<64x1xf32> to vector<64x128xf32>
    %132 = arith.mulf %130, %131 : vector<64x128xf32>
    %133 = vector.broadcast %108 : vector<64x1xf32> to vector<64x128xf32>
    %134 = arith.addf %132, %133 : vector<64x128xf32>
    %c2_45 = arith.constant 2 : index
    %135 = memref.load %arg11[%c2_45] : memref<3xf32, #tpu.memory_space<smem>>
    %136 = vector.broadcast %135 : f32 to vector<64x128xf32>
    %137 = arith.mulf %136, %134 : vector<64x128xf32>
    %c0_46 = arith.constant 0 : index
    %138 = memref.load %arg11[%c0_46] : memref<3xf32, #tpu.memory_space<smem>>
    %c2_i32_47 = arith.constant 2 : i32
    %139 = vector.broadcast %c2_i32_47 : i32 to vector<1x128xi32>
    %140 = arith.cmpi sge, %0, %139 : vector<1x128xi32>
    %c2_i32_48 = arith.constant 2 : i32
    %141 = tpu.dynamic_rotate %134 by %c2_i32_48 dim 1 : vector<64x128xf32>, i32 -> vector<64x128xf32>
    %cst_49 = arith.constant 0.000000e+00 : f32
    %142 = vector.shape_cast %140 : vector<1x128xi1> to vector<1x128xi1>
    %143 = vector.broadcast %142 : vector<1x128xi1> to vector<64x128xi1>
    %144 = vector.broadcast %cst_49 : f32 to vector<64x128xf32>
    %145 = arith.select %143, %141, %144 : vector<64x128xi1>, vector<64x128xf32>
    %146 = vector.broadcast %138 : f32 to vector<64x128xf32>
    %147 = arith.mulf %146, %145 : vector<64x128xf32>
    %148 = arith.addf %137, %147 : vector<64x128xf32>
    %c1_50 = arith.constant 1 : index
    %149 = memref.load %arg11[%c1_50] : memref<3xf32, #tpu.memory_space<smem>>
    %c1_i32_51 = arith.constant 1 : i32
    %150 = vector.broadcast %c1_i32_51 : i32 to vector<1x128xi32>
    %151 = arith.cmpi sge, %0, %150 : vector<1x128xi32>
    %c1_i32_52 = arith.constant 1 : i32
    %152 = tpu.dynamic_rotate %134 by %c1_i32_52 dim 1 : vector<64x128xf32>, i32 -> vector<64x128xf32>
    %cst_53 = arith.constant 0.000000e+00 : f32
    %153 = vector.shape_cast %151 : vector<1x128xi1> to vector<1x128xi1>
    %154 = vector.broadcast %153 : vector<1x128xi1> to vector<64x128xi1>
    %155 = vector.broadcast %cst_53 : f32 to vector<64x128xf32>
    %156 = arith.select %154, %152, %155 : vector<64x128xi1>, vector<64x128xf32>
    %157 = vector.broadcast %149 : f32 to vector<64x128xf32>
    %158 = arith.mulf %157, %156 : vector<64x128xf32>
    %159 = arith.addf %148, %158 : vector<64x128xf32>
    %c8_i32_54 = arith.constant 8 : i32
    %160 = vector.broadcast %c8_i32_54 : i32 to vector<1x128xi32>
    %161 = arith.cmpi sge, %0, %160 : vector<1x128xi32>
    %c8_i32_55 = arith.constant 8 : i32
    %162 = tpu.dynamic_rotate %159 by %c8_i32_55 dim 1 : vector<64x128xf32>, i32 -> vector<64x128xf32>
    %cst_56 = arith.constant 0.000000e+00 : f32
    %163 = vector.shape_cast %161 : vector<1x128xi1> to vector<1x128xi1>
    %164 = vector.broadcast %163 : vector<1x128xi1> to vector<64x128xi1>
    %165 = vector.broadcast %cst_56 : f32 to vector<64x128xf32>
    %166 = arith.select %164, %162, %165 : vector<64x128xi1>, vector<64x128xf32>
    %c6_i32_57 = arith.constant 6 : i32
    %167 = vector.broadcast %c6_i32_57 : i32 to vector<1x128xi32>
    %168 = arith.cmpi sge, %0, %167 : vector<1x128xi32>
    %c6_i32_58 = arith.constant 6 : i32
    %169 = tpu.dynamic_rotate %159 by %c6_i32_58 dim 1 : vector<64x128xf32>, i32 -> vector<64x128xf32>
    %cst_59 = arith.constant 0.000000e+00 : f32
    %170 = vector.shape_cast %168 : vector<1x128xi1> to vector<1x128xi1>
    %171 = vector.broadcast %170 : vector<1x128xi1> to vector<64x128xi1>
    %172 = vector.broadcast %cst_59 : f32 to vector<64x128xf32>
    %173 = arith.select %171, %169, %172 : vector<64x128xi1>, vector<64x128xf32>
    %c4_i32_60 = arith.constant 4 : i32
    %174 = vector.broadcast %c4_i32_60 : i32 to vector<1x128xi32>
    %175 = arith.cmpi sge, %0, %174 : vector<1x128xi32>
    %c4_i32_61 = arith.constant 4 : i32
    %176 = tpu.dynamic_rotate %159 by %c4_i32_61 dim 1 : vector<64x128xf32>, i32 -> vector<64x128xf32>
    %cst_62 = arith.constant 0.000000e+00 : f32
    %177 = vector.shape_cast %175 : vector<1x128xi1> to vector<1x128xi1>
    %178 = vector.broadcast %177 : vector<1x128xi1> to vector<64x128xi1>
    %179 = vector.broadcast %cst_62 : f32 to vector<64x128xf32>
    %180 = arith.select %178, %176, %179 : vector<64x128xi1>, vector<64x128xf32>
    %c2_i32_63 = arith.constant 2 : i32
    %181 = vector.broadcast %c2_i32_63 : i32 to vector<1x128xi32>
    %182 = arith.cmpi sge, %0, %181 : vector<1x128xi32>
    %c2_i32_64 = arith.constant 2 : i32
    %183 = tpu.dynamic_rotate %159 by %c2_i32_64 dim 1 : vector<64x128xf32>, i32 -> vector<64x128xf32>
    %cst_65 = arith.constant 0.000000e+00 : f32
    %184 = vector.shape_cast %182 : vector<1x128xi1> to vector<1x128xi1>
    %185 = vector.broadcast %184 : vector<1x128xi1> to vector<64x128xi1>
    %186 = vector.broadcast %cst_65 : f32 to vector<64x128xf32>
    %187 = arith.select %185, %183, %186 : vector<64x128xi1>, vector<64x128xf32>
    %188 = tpu.concatenate %166, %173, %180, %187, %159 in 0 : vector<64x128xf32>, vector<64x128xf32>, vector<64x128xf32>, vector<64x128xf32>, vector<64x128xf32> -> vector<320x128xf32>
    %189 = arith.truncf %188 : vector<320x128xf32> to vector<320x128xbf16>
    %c0_66 = arith.constant 0 : index
    %c0_67 = arith.constant 0 : index
    %190 = vector.load %arg12[%c0_66, %c0_67] : memref<64x320xbf16, #tpu.memory_space<vmem>>, vector<64x320xbf16>
    %cst_68 = arith.constant dense<0.000000e+00> : vector<64x128xf32>
    %191 = tpu.matmul %190, %189, %cst_68 {dimension_numbers = #tpu.dot_dimension_numbers<[1], [0], [0], [1], [0, 0, 1, 1], [], []>} : vector<64x320xbf16>, vector<320x128xbf16>, vector<64x128xf32> -> vector<64x128xf32>
    %192 = arith.negf %191 : vector<64x128xf32>
    %193 = math.exp %192 : vector<64x128xf32>
    %cst_69 = arith.constant 1.000000e+00 : f32
    %194 = vector.broadcast %cst_69 : f32 to vector<64x128xf32>
    %195 = arith.addf %194, %193 : vector<64x128xf32>
    %196 = arith.divf %194, %195 : vector<64x128xf32>
    %197 = arith.mulf %100, %196 : vector<64x128xf32>
    %c0_70 = arith.constant 0 : index
    %c0_71 = arith.constant 0 : index
    %198 = vector.load %arg13[%c0_70, %c0_71] : memref<64x1xf32, #tpu.memory_space<vmem>>, vector<64x1xf32>
    %cst_72 = arith.constant 0.000000e+00 : f32
    %199 = vector.broadcast %cst_72 : f32 to vector<64x128xf32>
    %200 = arith.cmpf ogt, %197, %199 : vector<64x128xf32>
    %201 = vector.broadcast %198 : vector<64x1xf32> to vector<64x128xf32>
    %202 = arith.mulf %201, %197 : vector<64x128xf32>
    %203 = arith.select %200, %197, %202 : vector<64x128xi1>, vector<64x128xf32>
    %c0_73 = arith.constant 0 : index
    %c0_74 = arith.constant 0 : index
    %204 = vector.load %arg14[%c0_73, %c0_74] : memref<64x1xf32, #tpu.memory_space<vmem>>, vector<64x1xf32>
    %c0_75 = arith.constant 0 : index
    %c0_76 = arith.constant 0 : index
    %205 = vector.load %arg15[%c0_75, %c0_76] : memref<64x1xf32, #tpu.memory_space<vmem>>, vector<64x1xf32>
    %206 = vector.broadcast %4 : vector<1x128xf32> to vector<64x128xf32>
    %207 = arith.mulf %203, %206 : vector<64x128xf32>
    %cst_77 = arith.constant dense<0.000000e+00> : vector<64xf32>
    %208 = vector.multi_reduction <add>, %207, %cst_77 [1] : vector<64x128xf32> to vector<64xf32>
    %209 = vector.shape_cast %208 : vector<64xf32> to vector<64x1xf32>
    %cst_78 = arith.constant 3.125000e-02 : f32
    %210 = vector.broadcast %cst_78 : f32 to vector<64x1xf32>
    %211 = arith.mulf %209, %210 : vector<64x1xf32>
    %212 = vector.broadcast %211 : vector<64x1xf32> to vector<64x128xf32>
    %213 = arith.subf %203, %212 : vector<64x128xf32>
    %214 = vector.broadcast %4 : vector<1x128xf32> to vector<64x128xf32>
    %215 = arith.mulf %213, %214 : vector<64x128xf32>
    %216 = arith.mulf %215, %215 : vector<64x128xf32>
    %cst_79 = arith.constant dense<0.000000e+00> : vector<64xf32>
    %217 = vector.multi_reduction <add>, %216, %cst_79 [1] : vector<64x128xf32> to vector<64xf32>
    %218 = vector.shape_cast %217 : vector<64xf32> to vector<64x1xf32>
    %cst_80 = arith.constant 3.125000e-02 : f32
    %219 = vector.broadcast %cst_80 : f32 to vector<64x1xf32>
    %220 = arith.mulf %218, %219 : vector<64x1xf32>
    %221 = vector.broadcast %211 : vector<64x1xf32> to vector<64x128xf32>
    %222 = arith.subf %203, %221 : vector<64x128xf32>
    %cst_81 = arith.constant 9.99999974E-6 : f32
    %223 = vector.broadcast %cst_81 : f32 to vector<64x1xf32>
    %224 = arith.addf %220, %223 : vector<64x1xf32>
    %225 = math.rsqrt %224 : vector<64x1xf32>
    %226 = vector.broadcast %225 : vector<64x1xf32> to vector<64x128xf32>
    %227 = arith.mulf %222, %226 : vector<64x128xf32>
    %228 = vector.broadcast %204 : vector<64x1xf32> to vector<64x128xf32>
    %229 = arith.mulf %227, %228 : vector<64x128xf32>
    %230 = vector.broadcast %205 : vector<64x1xf32> to vector<64x128xf32>
    %231 = arith.addf %229, %230 : vector<64x128xf32>
    %c0_82 = arith.constant 0 : index
    %c0_83 = arith.constant 0 : index
    %232 = vector.load %arg16[%c0_82, %c0_83] : memref<256x64xbf16, #tpu.memory_space<vmem>>, vector<256x64xbf16>
    %233 = arith.truncf %231 : vector<64x128xf32> to vector<64x128xbf16>
    %cst_84 = arith.constant dense<0.000000e+00> : vector<256x128xf32>
    %234 = tpu.matmul %232, %233, %cst_84 {dimension_numbers = #tpu.dot_dimension_numbers<[1], [0], [0], [1], [0, 0, 1, 1], [], []>} : vector<256x64xbf16>, vector<64x128xbf16>, vector<256x128xf32> -> vector<256x128xf32>
    %235 = arith.addf %234, %6 : vector<256x128xf32>
    %c0_85 = arith.constant 0 : index
    %c0_86 = arith.constant 0 : index
    %c0_87 = arith.constant 0 : index
    %236 = vector.load %arg17[%c0_85, %c0_86, %c0_87] : memref<1x256x128xf32, #tpu.memory_space<vmem>>, vector<1x256x128xf32>
    %237 = vector.shape_cast %236 : vector<1x256x128xf32> to vector<256x128xf32>
    %238 = vector.shape_cast %235 : vector<256x128xf32> to vector<1x256x128xf32>
    tpu.vector_store %arg17[%c0_85, %c0_86, %c0_87], %238 {strides = array<i32>} : memref<1x256x128xf32, #tpu.memory_space<vmem>>, vector<1x256x128xf32>,
    return
  }
  func.func @transform_0(%arg0: i32) -> (i32, i32, i32) {
    %c0_i32 = arith.constant 0 : i32
    %c0_i32_0 = arith.constant 0 : i32
    %c0_i32_1 = arith.constant 0 : i32
    return %arg0, %c0_i32, %c0_i32_0 : i32, i32, i32
  }
  func.func @transform_1(%arg0: i32) -> (i32, i32) {
    %c0_i32 = arith.constant 0 : i32
    %c0_i32_0 = arith.constant 0 : i32
    %c0_i32_1 = arith.constant 0 : i32
    return %c0_i32, %c0_i32_0 : i32, i32
  }
  func.func @transform_2(%arg0: i32) -> (i32, i32) {
    %c0_i32 = arith.constant 0 : i32
    %c0_i32_0 = arith.constant 0 : i32
    %c0_i32_1 = arith.constant 0 : i32
    return %c0_i32, %c0_i32_0 : i32, i32
  }
  func.func @transform_3(%arg0: i32) -> (i32, i32) {
    %c0_i32 = arith.constant 0 : i32
    %c0_i32_0 = arith.constant 0 : i32
    %c0_i32_1 = arith.constant 0 : i32
    return %c0_i32, %c0_i32_0 : i32, i32
  }
  func.func @transform_4(%arg0: i32) -> (i32, i32) {
    %c0_i32 = arith.constant 0 : i32
    %c0_i32_0 = arith.constant 0 : i32
    %c0_i32_1 = arith.constant 0 : i32
    return %c0_i32, %c0_i32_0 : i32, i32
  }
  func.func @transform_5(%arg0: i32) -> i32 {
    %c0_i32 = arith.constant 0 : i32
    %c0_i32_0 = arith.constant 0 : i32
    return %c0_i32 : i32
  }
  func.func @transform_6(%arg0: i32) -> (i32, i32) {
    %c0_i32 = arith.constant 0 : i32
    %c0_i32_0 = arith.constant 0 : i32
    %c0_i32_1 = arith.constant 0 : i32
    return %c0_i32, %c0_i32_0 : i32, i32
  }
  func.func @transform_7(%arg0: i32) -> (i32, i32) {
    %c0_i32 = arith.constant 0 : i32
    %c0_i32_0 = arith.constant 0 : i32
    %c0_i32_1 = arith.constant 0 : i32
    return %c0_i32, %c0_i32_0 : i32, i32
  }
  func.func @transform_8(%arg0: i32) -> (i32, i32) {
    %c0_i32 = arith.constant 0 : i32
    %c0_i32_0 = arith.constant 0 : i32
    %c0_i32_1 = arith.constant 0 : i32
    return %c0_i32, %c0_i32_0 : i32, i32
  }
  func.func @transform_9(%arg0: i32) -> (i32, i32) {
    %c0_i32 = arith.constant 0 : i32
    %c0_i32_0 = arith.constant 0 : i32
    %c0_i32_1 = arith.constant 0 : i32
    return %c0_i32, %c0_i32_0 : i32, i32
  }
  func.func @transform_10(%arg0: i32) -> i32 {
    %c0_i32 = arith.constant 0 : i32
    %c0_i32_0 = arith.constant 0 : i32
    return %c0_i32 : i32
  }
  func.func @transform_11(%arg0: i32) -> (i32, i32) {
    %c0_i32 = arith.constant 0 : i32
    %c0_i32_0 = arith.constant 0 : i32
    %c0_i32_1 = arith.constant 0 : i32
    return %c0_i32, %c0_i32_0 : i32, i32
  }
  func.func @transform_12(%arg0: i32) -> (i32, i32) {
    %c0_i32 = arith.constant 0 : i32
    %c0_i32_0 = arith.constant 0 : i32
    %c0_i32_1 = arith.constant 0 : i32
    return %c0_i32, %c0_i32_0 : i32, i32
  }
  func.func @transform_13(%arg0: i32) -> (i32, i32) {
    %c0_i32 = arith.constant 0 : i32
    %c0_i32_0 = arith.constant 0 : i32
    %c0_i32_1 = arith.constant 0 : i32
    return %c0_i32, %c0_i32_0 : i32, i32
  }
  func.func @transform_14(%arg0: i32) -> (i32, i32) {
    %c0_i32 = arith.constant 0 : i32
    %c0_i32_0 = arith.constant 0 : i32
    %c0_i32_1 = arith.constant 0 : i32
    return %c0_i32, %c0_i32_0 : i32, i32
  }
  func.func @transform_15(%arg0: i32) -> (i32, i32) {
    %c0_i32 = arith.constant 0 : i32
    %c0_i32_0 = arith.constant 0 : i32
    %c0_i32_1 = arith.constant 0 : i32
    return %c0_i32, %c0_i32_0 : i32, i32
  }
  func.func @transform_16(%arg0: i32) -> (i32, i32, i32) {
    %c0_i32 = arith.constant 0 : i32
    %c0_i32_0 = arith.constant 0 : i32
    %c0_i32_1 = arith.constant 0 : i32
    return %arg0, %c0_i32, %c0_i32_0 : i32, i32, i32
  }
}

</mosaic_0001>

<llo_original>
// kernel: tpu_custom_call.1
$region0: #{tpu_custom_call.1}
  #allocation0 [shape = 'u32[]', space=smem, size = 0x4, offset = 0x4, fixed_abs, tag = 'smem constant byte address 0x4 - core index']
  #allocation1 [shape = 'u32[144,128]{1,0:T(1,128)}', space=vmem, size = 0x12000, scoped, tag = 'internal scratch']
  %s0 = inlined_call_operand.vmem [shape: f32[2,256,128], index: 0, kind: input, shape index: {}]
  %s1 = inlined_call_operand.hbm [shape: bf16[64,256], index: 1, kind: input, shape index: {}]
  %s2 = inlined_call_operand.vmem [shape: f32[64,1], index: 2, kind: input, shape index: {}]
  %s3 = inlined_call_operand.vmem [shape: f32[64,1], index: 3, kind: input, shape index: {}]
  %s4 = inlined_call_operand.vmem [shape: f32[64,1], index: 4, kind: input, shape index: {}]
  %s5 = inlined_call_operand.vmem [shape: f32[3], index: 5, kind: input, shape index: {}]
  %s6 = inlined_call_operand.vmem [shape: bf16[64,320], index: 6, kind: input, shape index: {}]
  %s7 = inlined_call_operand.vmem [shape: f32[64,1], index: 7, kind: input, shape index: {}]
  %s8 = inlined_call_operand.vmem [shape: f32[64,1], index: 8, kind: input, shape index: {}]
  %s9 = inlined_call_operand.vmem [shape: f32[64,1], index: 9, kind: input, shape index: {}]
  %s10 = inlined_call_operand.vmem [shape: f32[3], index: 10, kind: input, shape index: {}]
  %s11 = inlined_call_operand.vmem [shape: bf16[64,320], index: 11, kind: input, shape index: {}]
  %s12 = inlined_call_operand.vmem [shape: f32[64,1], index: 12, kind: input, shape index: {}]
  %s13 = inlined_call_operand.vmem [shape: f32[64,1], index: 13, kind: input, shape index: {}]
  %s14 = inlined_call_operand.vmem [shape: f32[64,1], index: 14, kind: input, shape index: {}]
  %s15 = inlined_call_operand.vmem [shape: bf16[256,64], index: 15, kind: input, shape index: {}]
  %s16 = inlined_call_operand.hbm [shape: f32[2,256,128], index: 16, kind: output, shape index: {}]
  %s17 = sld [smem:[#allocation0]]
  $region109: #{tpu_custom_call.1} parent=0
    _
  %s19 = ssub.s32 1, %s17
  %s20 = scalar_select 0, %s19, %s17
  $region1: #{tpu_custom_call.1} parent=0
    #allocation2 [shape = 'u8[32768]{0}', space=vmem, size = 0x8000, scoped, tag = 'input window, operand 1, single buffered']
    #allocation3 [shape = 's32[2]{0}', space=sflag, size = 0x8, scoped, tag = 'scoped memory for tpu_custom_call.1']
    #allocation4 [shape = 's32[2]{0}', space=sflag, size = 0x8, scoped, tag = 'scoped memory for tpu_custom_call.1']
    #allocation5 [shape = 's32[2]{0}', space=sflag, size = 0x8, scoped, tag = 'scoped memory for tpu_custom_call.1']
    #allocation6 [shape = 'u8[512]{0}', space=smem, size = 0x200, scoped, tag = 'input window, operand 5, single buffered']
    #allocation7 [shape = 'u8[512]{0}', space=smem, size = 0x200, scoped, tag = 'input window, operand 10, single buffered']
    #allocation8 [shape = 's32[1]{0}', space=sflag, size = 0x4, scoped, tag = 'scoped memory for tpu_custom_call.1']
    #allocation9 [shape = 'u8[262144]{0}', space=vmem, size = 0x40000, scoped, tag = 'output window, operand 0']
    %21 = vsyncpa [#allocation3], 0
    %22 = vsyncpa [#allocation5], 0
    %23 = vsyncpa [#allocation8], 0
    %24 = vsyncpa [#allocation4], 0
    %s25 = scalar_lea.sflag [#allocation4], 1
    %26 = vsyncpa %s25, 0
    loop: start=0, step=1, limit=4
    $region2: #{tpu_custom_call.1} parent=1 // loop_pre_header
      _
    $region3: #{tpu_custom_call.1} parent=1 // loop_header
      %s28 = sphi 0, %s32
      %p29 = scmp.ge.s32.totalorder %s28, 4
      %s38 = sphi 0, %s40
      %s41 = sphi 0, %s38
      %s42 = sphi 0, %s41
      %s58 = sphi 0, %s42
      %s62 = sphi 0, %s62
      %s64 = sphi 0, %s62
      %s65 = sphi 0, %s64
      %s79 = sphi 0, %s65
      %s83 = sphi 0, %s83
      %s85 = sphi 0, %s83
      %s86 = sphi 0, %s85
      %s100 = sphi 0, %s86
      %s104 = sphi 0, %s104
      %s106 = sphi 0, %s104
      %s107 = sphi 0, %s106
      %s121 = sphi 0, %s107
      %s125 = sphi 0, %s125
      %s127 = sphi 0, %s125
      %s128 = sphi 0, %s127
      %s142 = sphi 0, %s128
      %s146 = sphi 0, %s146
      %s148 = sphi 0, %s146
      %s149 = sphi 0, %s148
      %s163 = sphi 0, %s149
      %s167 = sphi 0, %s167
      %s169 = sphi 0, %s167
      %s170 = sphi 0, %s169
      %s184 = sphi 0, %s170
      %s188 = sphi 0, %s188
      %s190 = sphi 0, %s188
      %s191 = sphi 0, %s190
      %s205 = sphi 0, %s191
      %s209 = sphi 0, %s209
      %s211 = sphi 0, %s209
      %s212 = sphi 0, %s211
      %s226 = sphi 0, %s212
      %s230 = sphi 0, %s230
      %s232 = sphi 0, %s230
      %s233 = sphi 0, %s232
      %s247 = sphi 0, %s233
      %s251 = sphi 0, %s251
      %s253 = sphi 0, %s251
      %s254 = sphi 0, %s253
      %s268 = sphi 0, %s254
      %s272 = sphi 0, %s272
      %s274 = sphi 0, %s272
      %s275 = sphi 0, %s274
      %s289 = sphi 0, %s275
      %s293 = sphi 0, %s293
      %s295 = sphi 0, %s293
      %s296 = sphi 0, %s295
      %s310 = sphi 0, %s296
      %s314 = sphi 0, %s314
      %s316 = sphi 0, %s314
      %s317 = sphi 0, %s316
      %s331 = sphi 0, %s317
      %s335 = sphi 0, %s335
      %s337 = sphi 0, %s335
      %s338 = sphi 0, %s337
      %s352 = sphi 0, %s338
      %s356 = sphi 0, %s356
      %s358 = sphi 0, %s356
      %s359 = sphi 0, %s358
      %s373 = sphi 0, %s359
      %s379 = sphi 0, %s381
      %s382 = sphi 0, %s379
      %s383 = sphi 0, %s382
      %s399 = sphi 0, %s383
    $region4: #{tpu_custom_call.1} parent=1 // loop_header_branch
      %31 = sbr.rel (%p29) target = $region8
    $region5: #{tpu_custom_call.1} parent=1 // loop_body
      %s33 = ssub.s32 %s28, 1
      %s34 = ssub.s32 %s28, 2
      %s35 = sadd.s32 %s28, 1
      %s36 = ssub.s32 %s28, %s35
      %p37 = scmp.eq.s32.totalorder %s36, 0
      %s39 = sadd.s32 %s38, 1
      %s40 = scalar_select %p37, %s38, %s39
      %p43 = pneg %p37
      %p44 = scmp.eq.s32.totalorder %s28, 1
      %p45 = por %p43, %p44
      %p46 = scmp.ne.s32.totalorder %s38, %s41
      %p47 = scmp.eq.s32.totalorder %s28, 0
      %p48 = por %p46, %p47
      %p49 = scmp.ne.s32.totalorder %s38, %s41
      %p50 = scmp.eq.s32.totalorder %s33, 1
      %p51 = por %p49, %p50
      %p52 = scmp.ne.s32.totalorder %s41, %s42
      %p53 = scmp.eq.s32.totalorder %s33, 0
      %p54 = por %p52, %p53
      %p55 = scmp.ne.s32.totalorder %s41, %s42
      %p56 = scmp.eq.s32.totalorder %s34, 1
      %p57 = por %p55, %p56
      %p59 = scmp.ne.s32.totalorder %s42, %s58
      %p60 = scmp.eq.s32.totalorder %s34, 0
      %p61 = por %p59, %p60
      %s63 = sadd.s32 %s62, 1
      %p66 = scmp.eq.s32.totalorder %s28, 1
      %p67 = scmp.ne.s32.totalorder %s62, %s64
      %p68 = scmp.eq.s32.totalorder %s28, 0
      %p69 = por %p67, %p68
      %p70 = scmp.ne.s32.totalorder %s62, %s64
      %p71 = scmp.eq.s32.totalorder %s33, 1
      %p72 = por %p70, %p71
      %p73 = scmp.ne.s32.totalorder %s64, %s65
      %p74 = scmp.eq.s32.totalorder %s33, 0
      %p75 = por %p73, %p74
      %p76 = scmp.ne.s32.totalorder %s64, %s65
      %p77 = scmp.eq.s32.totalorder %s34, 1
      %p78 = por %p76, %p77
      %p80 = scmp.ne.s32.totalorder %s65, %s79
      %p81 = scmp.eq.s32.totalorder %s34, 0
      %p82 = por %p80, %p81
      %s84 = sadd.s32 %s83, 1
      %p87 = scmp.eq.s32.totalorder %s28, 1
      %p88 = scmp.ne.s32.totalorder %s83, %s85
      %p89 = scmp.eq.s32.totalorder %s28, 0
      %p90 = por %p88, %p89
      %p91 = scmp.ne.s32.totalorder %s83, %s85
      %p92 = scmp.eq.s32.totalorder %s33, 1
      %p93 = por %p91, %p92
      %p94 = scmp.ne.s32.totalorder %s85, %s86
      %p95 = scmp.eq.s32.totalorder %s33, 0
      %p96 = por %p94, %p95
      %p97 = scmp.ne.s32.totalorder %s85, %s86
      %p98 = scmp.eq.s32.totalorder %s34, 1
      %p99 = por %p97, %p98
      %p101 = scmp.ne.s32.totalorder %s86, %s100
      %p102 = scmp.eq.s32.totalorder %s34, 0
      %p103 = por %p101, %p102
      %s105 = sadd.s32 %s104, 1
      %p108 = scmp.eq.s32.totalorder %s28, 1
      %p109 = scmp.ne.s32.totalorder %s104, %s106
      %p110 = scmp.eq.s32.totalorder %s28, 0
      %p111 = por %p109, %p110
      %p112 = scmp.ne.s32.totalorder %s104, %s106
      %p113 = scmp.eq.s32.totalorder %s33, 1
      %p114 = por %p112, %p113
      %p115 = scmp.ne.s32.totalorder %s106, %s107
      %p116 = scmp.eq.s32.totalorder %s33, 0
      %p117 = por %p115, %p116
      %p118 = scmp.ne.s32.totalorder %s106, %s107
      %p119 = scmp.eq.s32.totalorder %s34, 1
      %p120 = por %p118, %p119
      %p122 = scmp.ne.s32.totalorder %s107, %s121
      %p123 = scmp.eq.s32.totalorder %s34, 0
      %p124 = por %p122, %p123
      %s126 = sadd.s32 %s125, 1
      %p129 = scmp.eq.s32.totalorder %s28, 1
      %p130 = scmp.ne.s32.totalorder %s125, %s127
      %p131 = scmp.eq.s32.totalorder %s28, 0
      %p132 = por %p130, %p131
      %p133 = scmp.ne.s32.totalorder %s125, %s127
      %p134 = scmp.eq.s32.totalorder %s33, 1
      %p135 = por %p133, %p134
      %p136 = scmp.ne.s32.totalorder %s127, %s128
      %p137 = scmp.eq.s32.totalorder %s33, 0
      %p138 = por %p136, %p137
      %p139 = scmp.ne.s32.totalorder %s127, %s128
      %p140 = scmp.eq.s32.totalorder %s34, 1
      %p141 = por %p139, %p140
      %p143 = scmp.ne.s32.totalorder %s128, %s142
      %p144 = scmp.eq.s32.totalorder %s34, 0
      %p145 = por %p143, %p144
      %s147 = sadd.s32 %s146, 1
      %p150 = scmp.eq.s32.totalorder %s28, 1
      %p151 = scmp.ne.s32.totalorder %s146, %s148
      %p152 = scmp.eq.s32.totalorder %s28, 0
      %p153 = por %p151, %p152
      %p154 = scmp.ne.s32.totalorder %s146, %s148
      %p155 = scmp.eq.s32.totalorder %s33, 1
      %p156 = por %p154, %p155
      %p157 = scmp.ne.s32.totalorder %s148, %s149
      %p158 = scmp.eq.s32.totalorder %s33, 0
      %p159 = por %p157, %p158
      %p160 = scmp.ne.s32.totalorder %s148, %s149
      %p161 = scmp.eq.s32.totalorder %s34, 1
      %p162 = por %p160, %p161
      %p164 = scmp.ne.s32.totalorder %s149, %s163
      %p165 = scmp.eq.s32.totalorder %s34, 0
      %p166 = por %p164, %p165
      %s168 = sadd.s32 %s167, 1
      %p171 = scmp.eq.s32.totalorder %s28, 1
      %p172 = scmp.ne.s32.totalorder %s167, %s169
      %p173 = scmp.eq.s32.totalorder %s28, 0
      %p174 = por %p172, %p173
      %p175 = scmp.ne.s32.totalorder %s167, %s169
      %p176 = scmp.eq.s32.totalorder %s33, 1
      %p177 = por %p175, %p176
      %p178 = scmp.ne.s32.totalorder %s169, %s170
      %p179 = scmp.eq.s32.totalorder %s33, 0
      %p180 = por %p178, %p179
      %p181 = scmp.ne.s32.totalorder %s169, %s170
      %p182 = scmp.eq.s32.totalorder %s34, 1
      %p183 = por %p181, %p182
      %p185 = scmp.ne.s32.totalorder %s170, %s184
      %p186 = scmp.eq.s32.totalorder %s34, 0
      %p187 = por %p185, %p186
      %s189 = sadd.s32 %s188, 1
      %p192 = scmp.eq.s32.totalorder %s28, 1
      %p193 = scmp.ne.s32.totalorder %s188, %s190
      %p194 = scmp.eq.s32.totalorder %s28, 0
      %p195 = por %p193, %p194
      %p196 = scmp.ne.s32.totalorder %s188, %s190
      %p197 = scmp.eq.s32.totalorder %s33, 1
      %p198 = por %p196, %p197
      %p199 = scmp.ne.s32.totalorder %s190, %s191
      %p200 = scmp.eq.s32.totalorder %s33, 0
      %p201 = por %p199, %p200
      %p202 = scmp.ne.s32.totalorder %s190, %s191
      %p203 = scmp.eq.s32.totalorder %s34, 1
      %p204 = por %p202, %p203
      %p206 = scmp.ne.s32.totalorder %s191, %s205
      %p207 = scmp.eq.s32.totalorder %s34, 0
      %p208 = por %p206, %p207
      %s210 = sadd.s32 %s209, 1
      %p213 = scmp.eq.s32.totalorder %s28, 1
      %p214 = scmp.ne.s32.totalorder %s209, %s211
      %p215 = scmp.eq.s32.totalorder %s28, 0
      %p216 = por %p214, %p215
      %p217 = scmp.ne.s32.totalorder %s209, %s211
      %p218 = scmp.eq.s32.totalorder %s33, 1
      %p219 = por %p217, %p218
      %p220 = scmp.ne.s32.totalorder %s211, %s212
      %p221 = scmp.eq.s32.totalorder %s33, 0
      %p222 = por %p220, %p221
      %p223 = scmp.ne.s32.totalorder %s211, %s212
      %p224 = scmp.eq.s32.totalorder %s34, 1
      %p225 = por %p223, %p224
      %p227 = scmp.ne.s32.totalorder %s212, %s226
      %p228 = scmp.eq.s32.totalorder %s34, 0
      %p229 = por %p227, %p228
      %s231 = sadd.s32 %s230, 1
      %p234 = scmp.eq.s32.totalorder %s28, 1
      %p235 = scmp.ne.s32.totalorder %s230, %s232
      %p236 = scmp.eq.s32.totalorder %s28, 0
      %p237 = por %p235, %p236
      %p238 = scmp.ne.s32.totalorder %s230, %s232
      %p239 = scmp.eq.s32.totalorder %s33, 1
      %p240 = por %p238, %p239
      %p241 = scmp.ne.s32.totalorder %s232, %s233
      %p242 = scmp.eq.s32.totalorder %s33, 0
      %p243 = por %p241, %p242
      %p244 = scmp.ne.s32.totalorder %s232, %s233
      %p245 = scmp.eq.s32.totalorder %s34, 1
      %p246 = por %p244, %p245
      %p248 = scmp.ne.s32.totalorder %s233, %s247
      %p249 = scmp.eq.s32.totalorder %s34, 0
      %p250 = por %p248, %p249
      %s252 = sadd.s32 %s251, 1
      %p255 = scmp.eq.s32.totalorder %s28, 1
      %p256 = scmp.ne.s32.totalorder %s251, %s253
      %p257 = scmp.eq.s32.totalorder %s28, 0
      %p258 = por %p256, %p257
      %p259 = scmp.ne.s32.totalorder %s251, %s253
      %p260 = scmp.eq.s32.totalorder %s33, 1
      %p261 = por %p259, %p260
      %p262 = scmp.ne.s32.totalorder %s253, %s254
      %p263 = scmp.eq.s32.totalorder %s33, 0
      %p264 = por %p262, %p263
      %p265 = scmp.ne.s32.totalorder %s253, %s254
      %p266 = scmp.eq.s32.totalorder %s34, 1
      %p267 = por %p265, %p266
      %p269 = scmp.ne.s32.totalorder %s254, %s268
      %p270 = scmp.eq.s32.totalorder %s34, 0
      %p271 = por %p269, %p270
      %s273 = sadd.s32 %s272, 1
      %p276 = scmp.eq.s32.totalorder %s28, 1
      %p277 = scmp.ne.s32.totalorder %s272, %s274
      %p278 = scmp.eq.s32.totalorder %s28, 0
      %p279 = por %p277, %p278
      %p280 = scmp.ne.s32.totalorder %s272, %s274
      %p281 = scmp.eq.s32.totalorder %s33, 1
      %p282 = por %p280, %p281
      %p283 = scmp.ne.s32.totalorder %s274, %s275
      %p284 = scmp.eq.s32.totalorder %s33, 0
      %p285 = por %p283, %p284
      %p286 = scmp.ne.s32.totalorder %s274, %s275
      %p287 = scmp.eq.s32.totalorder %s34, 1
      %p288 = por %p286, %p287
      %p290 = scmp.ne.s32.totalorder %s275, %s289
      %p291 = scmp.eq.s32.totalorder %s34, 0
      %p292 = por %p290, %p291
      %s294 = sadd.s32 %s293, 1
      %p297 = scmp.eq.s32.totalorder %s28, 1
      %p298 = scmp.ne.s32.totalorder %s293, %s295
      %p299 = scmp.eq.s32.totalorder %s28, 0
      %p300 = por %p298, %p299
      %p301 = scmp.ne.s32.totalorder %s293, %s295
      %p302 = scmp.eq.s32.totalorder %s33, 1
      %p303 = por %p301, %p302
      %p304 = scmp.ne.s32.totalorder %s295, %s296
      %p305 = scmp.eq.s32.totalorder %s33, 0
      %p306 = por %p304, %p305
      %p307 = scmp.ne.s32.totalorder %s295, %s296
      %p308 = scmp.eq.s32.totalorder %s34, 1
      %p309 = por %p307, %p308
      %p311 = scmp.ne.s32.totalorder %s296, %s310
      %p312 = scmp.eq.s32.totalorder %s34, 0
      %p313 = por %p311, %p312
      %s315 = sadd.s32 %s314, 1
      %p318 = scmp.eq.s32.totalorder %s28, 1
      %p319 = scmp.ne.s32.totalorder %s314, %s316
      %p320 = scmp.eq.s32.totalorder %s28, 0
      %p321 = por %p319, %p320
      %p322 = scmp.ne.s32.totalorder %s314, %s316
      %p323 = scmp.eq.s32.totalorder %s33, 1
      %p324 = por %p322, %p323
      %p325 = scmp.ne.s32.totalorder %s316, %s317
      %p326 = scmp.eq.s32.totalorder %s33, 0
      %p327 = por %p325, %p326
      %p328 = scmp.ne.s32.totalorder %s316, %s317
      %p329 = scmp.eq.s32.totalorder %s34, 1
      %p330 = por %p328, %p329
      %p332 = scmp.ne.s32.totalorder %s317, %s331
      %p333 = scmp.eq.s32.totalorder %s34, 0
      %p334 = por %p332, %p333
      %s336 = sadd.s32 %s335, 1
      %p339 = scmp.eq.s32.totalorder %s28, 1
      %p340 = scmp.ne.s32.totalorder %s335, %s337
      %p341 = scmp.eq.s32.totalorder %s28, 0
      %p342 = por %p340, %p341
      %p343 = scmp.ne.s32.totalorder %s335, %s337
      %p344 = scmp.eq.s32.totalorder %s33, 1
      %p345 = por %p343, %p344
      %p346 = scmp.ne.s32.totalorder %s337, %s338
      %p347 = scmp.eq.s32.totalorder %s33, 0
      %p348 = por %p346, %p347
      %p349 = scmp.ne.s32.totalorder %s337, %s338
      %p350 = scmp.eq.s32.totalorder %s34, 1
      %p351 = por %p349, %p350
      %p353 = scmp.ne.s32.totalorder %s338, %s352
      %p354 = scmp.eq.s32.totalorder %s34, 0
      %p355 = por %p353, %p354
      %s357 = sadd.s32 %s356, 1
      %p360 = scmp.eq.s32.totalorder %s28, 1
      %p361 = scmp.ne.s32.totalorder %s356, %s358
      %p362 = scmp.eq.s32.totalorder %s28, 0
      %p363 = por %p361, %p362
      %p364 = scmp.ne.s32.totalorder %s356, %s358
      %p365 = scmp.eq.s32.totalorder %s33, 1
      %p366 = por %p364, %p365
      %p367 = scmp.ne.s32.totalorder %s358, %s359
      %p368 = scmp.eq.s32.totalorder %s33, 0
      %p369 = por %p367, %p368
      %p370 = scmp.ne.s32.totalorder %s358, %s359
      %p371 = scmp.eq.s32.totalorder %s34, 1
      %p372 = por %p370, %p371
      %p374 = scmp.ne.s32.totalorder %s359, %s373
      %p375 = scmp.eq.s32.totalorder %s34, 0
      %p376 = por %p374, %p375
      %s377 = ssub.s32 %s28, %s35
      %p378 = scmp.eq.s32.totalorder %s377, 0
      %s380 = sadd.s32 %s379, 1
      %s381 = scalar_select %p378, %s379, %s380
      %p384 = pneg %p378
      %p385 = scmp.eq.s32.totalorder %s28, 1
      %p386 = por %p384, %p385
      %p387 = scmp.ne.s32.totalorder %s379, %s382
      %p388 = scmp.eq.s32.totalorder %s28, 0
      %p389 = por %p387, %p388
      %p390 = scmp.ne.s32.totalorder %s379, %s382
      %p391 = scmp.eq.s32.totalorder %s33, 1
      %p392 = por %p390, %p391
      %p393 = scmp.ne.s32.totalorder %s382, %s383
      %p394 = scmp.eq.s32.totalorder %s33, 0
      %p395 = por %p393, %p394
      %p396 = scmp.ne.s32.totalorder %s382, %s383
      %p397 = scmp.eq.s32.totalorder %s34, 1
      %p398 = por %p396, %p397
      %p400 = scmp.ne.s32.totalorder %s383, %s399
      %p401 = scmp.eq.s32.totalorder %s34, 0
      %p402 = por %p400, %p401
      %p403 = scmp.le.s32.totalorder 1, %s28
      %p404 = scmp.lt.s32.totalorder %s28, 3
      %p405 = pnand %p403, %p404
      %p406 = pneg %p405
      // Predicated region
      $region9: #{tpu_custom_call.1} parent=5 // pred_check
        _
      $region10: #{tpu_custom_call.1} parent=5 // pred_check_branch
        %408 = sbr.rel (%p405) target = $region12
      $region11: #{tpu_custom_call.1} parent=5 // pred_region
        %s409 = ssub.s32 %s28, 1
        // Predicated region
        $region13: #{tpu_custom_call.1} parent=11 // pred_check
          %p410 = pneg %p75
        $region14: #{tpu_custom_call.1} parent=11 // pred_check_branch
          %412 = sbr.rel (%p410) target = $region16
        $region15: #{tpu_custom_call.1} parent=11 // pred_region
          %s414 = ssub.s32 1024, 1024
          %415 = vsyncadd [#allocation3], %s414
          %s416 = sshll.u32 [#allocation2], 4
          %s417 = int_to_ptr.vmem [resolvable:$true] %s416
          %422 = dma.hbm_to_vmem [thread:$0]  %s1, 1024, %s417, [#allocation3], 128, 128, 8
        $region16: #{tpu_custom_call.1} parent=11 // pred_fallthru
          _
        // Predicated region
        $region17: #{tpu_custom_call.1} parent=11 // pred_check
          %p423 = pneg %p96
        $region18: #{tpu_custom_call.1} parent=11 // pred_check_branch
          %425 = sbr.rel (%p423) target = $region20
        $region19: #{tpu_custom_call.1} parent=11 // pred_region
          _
        $region20: #{tpu_custom_call.1} parent=11 // pred_fallthru
          _
        // Predicated region
        $region21: #{tpu_custom_call.1} parent=11 // pred_check
          %p426 = pneg %p117
        $region22: #{tpu_custom_call.1} parent=11 // pred_check_branch
          %428 = sbr.rel (%p426) target = $region24
        $region23: #{tpu_custom_call.1} parent=11 // pred_region
          _
        $region24: #{tpu_custom_call.1} parent=11 // pred_fallthru
          _
        // Predicated region
        $region25: #{tpu_custom_call.1} parent=11 // pred_check
          %p429 = pneg %p138
        $region26: #{tpu_custom_call.1} parent=11 // pred_check_branch
          %431 = sbr.rel (%p429) target = $region28
        $region27: #{tpu_custom_call.1} parent=11 // pred_region
          _
        $region28: #{tpu_custom_call.1} parent=11 // pred_fallthru
          _
        // Predicated region
        $region29: #{tpu_custom_call.1} parent=11 // pred_check
          %p432 = pneg %p159
        $region30: #{tpu_custom_call.1} parent=11 // pred_check_branch
          %434 = sbr.rel (%p432) target = $region32
        $region31: #{tpu_custom_call.1} parent=11 // pred_region
          %s436 = ssub.s32 16, 16
          %437 = vsyncadd [#allocation5], %s436
          %s439 = sshll.u32 %s5, 4
          %s440 = int_to_ptr.vmem [resolvable:$true] %s439
          %442 = dma.vmem_to_smem %s440, 16, [#allocation6], [#allocation5]
        $region32: #{tpu_custom_call.1} parent=11 // pred_fallthru
          _
        // Predicated region
        $region33: #{tpu_custom_call.1} parent=11 // pred_check
          %p443 = pneg %p180
        $region34: #{tpu_custom_call.1} parent=11 // pred_check_branch
          %445 = sbr.rel (%p443) target = $region36
        $region35: #{tpu_custom_call.1} parent=11 // pred_region
          _
        $region36: #{tpu_custom_call.1} parent=11 // pred_fallthru
          _
        // Predicated region
        $region37: #{tpu_custom_call.1} parent=11 // pred_check
          %p446 = pneg %p201
        $region38: #{tpu_custom_call.1} parent=11 // pred_check_branch
          %448 = sbr.rel (%p446) target = $region40
        $region39: #{tpu_custom_call.1} parent=11 // pred_region
          _
        $region40: #{tpu_custom_call.1} parent=11 // pred_fallthru
          _
        // Predicated region
        $region41: #{tpu_custom_call.1} parent=11 // pred_check
          %p449 = pneg %p222
        $region42: #{tpu_custom_call.1} parent=11 // pred_check_branch
          %451 = sbr.rel (%p449) target = $region44
        $region43: #{tpu_custom_call.1} parent=11 // pred_region
          _
        $region44: #{tpu_custom_call.1} parent=11 // pred_fallthru
          _
        // Predicated region
        $region45: #{tpu_custom_call.1} parent=11 // pred_check
          %p452 = pneg %p243
        $region46: #{tpu_custom_call.1} parent=11 // pred_check_branch
          %454 = sbr.rel (%p452) target = $region48
        $region47: #{tpu_custom_call.1} parent=11 // pred_region
          _
        $region48: #{tpu_custom_call.1} parent=11 // pred_fallthru
          _
        // Predicated region
        $region49: #{tpu_custom_call.1} parent=11 // pred_check
          %p455 = pneg %p264
        $region50: #{tpu_custom_call.1} parent=11 // pred_check_branch
          %457 = sbr.rel (%p455) target = $region52
        $region51: #{tpu_custom_call.1} parent=11 // pred_region
          %s459 = ssub.s32 16, 16
          %460 = vsyncadd [#allocation8], %s459
          %s462 = sshll.u32 %s10, 4
          %s463 = int_to_ptr.vmem [resolvable:$true] %s462
          %465 = dma.vmem_to_smem %s463, 16, [#allocation7], [#allocation8]
        $region52: #{tpu_custom_call.1} parent=11 // pred_fallthru
          _
        // Predicated region
        $region53: #{tpu_custom_call.1} parent=11 // pred_check
          %p466 = pneg %p285
        $region54: #{tpu_custom_call.1} parent=11 // pred_check_branch
          %468 = sbr.rel (%p466) target = $region56
        $region55: #{tpu_custom_call.1} parent=11 // pred_region
          _
        $region56: #{tpu_custom_call.1} parent=11 // pred_fallthru
          _
        // Predicated region
        $region57: #{tpu_custom_call.1} parent=11 // pred_check
          %p469 = pneg %p306
        $region58: #{tpu_custom_call.1} parent=11 // pred_check_branch
          %471 = sbr.rel (%p469) target = $region60
        $region59: #{tpu_custom_call.1} parent=11 // pred_region
          _
        $region60: #{tpu_custom_call.1} parent=11 // pred_fallthru
          _
        // Predicated region
        $region61: #{tpu_custom_call.1} parent=11 // pred_check
          %p472 = pneg %p327
        $region62: #{tpu_custom_call.1} parent=11 // pred_check_branch
          %474 = sbr.rel (%p472) target = $region64
        $region63: #{tpu_custom_call.1} parent=11 // pred_region
          _
        $region64: #{tpu_custom_call.1} parent=11 // pred_fallthru
          _
        // Predicated region
        $region65: #{tpu_custom_call.1} parent=11 // pred_check
          %p475 = pneg %p348
        $region66: #{tpu_custom_call.1} parent=11 // pred_check_branch
          %477 = sbr.rel (%p475) target = $region68
        $region67: #{tpu_custom_call.1} parent=11 // pred_region
          _
        $region68: #{tpu_custom_call.1} parent=11 // pred_fallthru
          _
        // Predicated region
        $region69: #{tpu_custom_call.1} parent=11 // pred_check
          %p478 = pneg %p369
        $region70: #{tpu_custom_call.1} parent=11 // pred_check_branch
          %480 = sbr.rel (%p478) target = $region72
        $region71: #{tpu_custom_call.1} parent=11 // pred_region
          _
        $region72: #{tpu_custom_call.1} parent=11 // pred_fallthru
          _
      $region12: #{tpu_custom_call.1} parent=5 // pred_fallthru
        _
      %p481 = scmp.lt.s32.totalorder %s28, 2
      // Predicated region
      $region73: #{tpu_custom_call.1} parent=5 // pred_check
        %p482 = pneg %p481
      $region74: #{tpu_custom_call.1} parent=5 // pred_check_branch
        %484 = sbr.rel (%p482) target = $region76
      $region75: #{tpu_custom_call.1} parent=5 // pred_region
        // Predicated region
        $region77: #{tpu_custom_call.1} parent=75 // pred_check
          %p485 = pneg %p48
        $region78: #{tpu_custom_call.1} parent=75 // pred_check_branch
          %487 = sbr.rel (%p485) target = $region80
        $region79: #{tpu_custom_call.1} parent=75 // pred_region
          %p488 = scmp.lt.s32.totalorder %s28, 1
          %s489 = scalar_select %p488, %s28, 1
          %s490 = smul.addr %s489, 32
          %s491 = smul.addr %s490, 8
          %s492 = scalar_lea.vmem %s0, %s491
        $region80: #{tpu_custom_call.1} parent=75 // pred_fallthru
          _
      $region76: #{tpu_custom_call.1} parent=5 // pred_fallthru
        _
      %p493 = scmp.le.s32.totalorder 1, %s28
      %p494 = scmp.lt.s32.totalorder %s28, 3
      %p495 = pnand %p493, %p494
      %p496 = pneg %p495
      // Predicated region
      $region81: #{tpu_custom_call.1} parent=5 // pred_check
        _
      $region82: #{tpu_custom_call.1} parent=5 // pred_check_branch
        %498 = sbr.rel (%p495) target = $region84
      $region83: #{tpu_custom_call.1} parent=5 // pred_region
        %s499 = ssub.s32 %s28, 1
        // Predicated region
        $region85: #{tpu_custom_call.1} parent=83 // pred_check
          %p500 = pneg %p75
        $region86: #{tpu_custom_call.1} parent=83 // pred_check_branch
          %502 = sbr.rel (%p500) target = $region88
        $region87: #{tpu_custom_call.1} parent=83 // pred_region
          %503 = dma.done [#allocation3], 1024
        $region88: #{tpu_custom_call.1} parent=83 // pred_fallthru
          _
        // Predicated region
        $region89: #{tpu_custom_call.1} parent=83 // pred_check
          %p504 = pneg %p159
        $region90: #{tpu_custom_call.1} parent=83 // pred_check_branch
          %506 = sbr.rel (%p504) target = $region92
        $region91: #{tpu_custom_call.1} parent=83 // pred_region
          %507 = dma.done [#allocation5], 16
        $region92: #{tpu_custom_call.1} parent=83 // pred_fallthru
          _
        // Predicated region
        $region93: #{tpu_custom_call.1} parent=83 // pred_check
          %p508 = pneg %p264
        $region94: #{tpu_custom_call.1} parent=83 // pred_check_branch
          %510 = sbr.rel (%p508) target = $region96
        $region95: #{tpu_custom_call.1} parent=83 // pred_region
          %511 = dma.done [#allocation8], 16
        $region96: #{tpu_custom_call.1} parent=83 // pred_fallthru
          _
        %512 = sfence
        %p513 = scmp.lt.s32.totalorder %s33, 1
        %s514 = scalar_select %p513, %s33, 1
        %s515 = smul.addr %s514, 32
        %s516 = smul.addr %s515, 8
        %s517 = scalar_lea.vmem %s0, %s516
        %p518 = pneg %p54
        %p519 = pneg %p51
        %p520 = pneg %p75
        %p521 = pneg %p72
        %p522 = pneg %p96
        %p523 = pneg %p93
        %p524 = pneg %p117
        %p525 = pneg %p114
        %p526 = pneg %p138
        %p527 = pneg %p135
        %p528 = pneg %p159
        %p529 = pneg %p156
        %p530 = pneg %p180
        %p531 = pneg %p177
        %p532 = pneg %p201
        %p533 = pneg %p198
        %p534 = pneg %p222
        %p535 = pneg %p219
        %p536 = pneg %p243
        %p537 = pneg %p240
        %p538 = pneg %p264
        %p539 = pneg %p261
        %p540 = pneg %p285
        %p541 = pneg %p282
        %p542 = pneg %p306
        %p543 = pneg %p303
        %p544 = pneg %p327
        %p545 = pneg %p324
        %p546 = pneg %p348
        %p547 = pneg %p345
        %p548 = pneg %p369
        %p549 = pneg %p366
        %p550 = pneg %p395
        %p551 = pneg %p392
        %s552 = sand.u32 %s382, 1
        %s553 = scalar_lea.sflag [#allocation4], %s552
        %s554 = sand.u32 %s382, 1
        %s555 = smul.addr %s554, 256
        %s556 = scalar_lea.vmem [#allocation9], %s555
        %p557 = scmp.lt.s32.totalorder %s33, 1
        %s558 = scalar_select %p557, %s33, 1
        %s559 = smul.addr %s558, 32
        %s560 = smul.addr %s559, 8
        %s561 = scalar_lea.vmem %s0, %s560
        %v563 = vlaneseq
        %v564 = vand.u32 %v563, 127
        %vm565 = vcmp.lt.s32.totalorder %v564, 32
        %v566 = vsel %vm565, 1, 0
        %v567 = vcvt.s32.f32 %v566
        %v568 = vld [vmem:[%s561] sm:$0xff]
        %v569 = vld [vmem:[%s561 + $0x8] sm:$0xff]
        %v570 = vld [vmem:[%s561 + $0x10] sm:$0xff]
        %v571 = vld [vmem:[%s561 + $0x18] sm:$0xff]
        %v572 = vld [vmem:[%s561 + $0x20] sm:$0xff]
        %v573 = vld [vmem:[%s561 + $0x28] sm:$0xff]
        %v574 = vld [vmem:[%s561 + $0x30] sm:$0xff]
        %v575 = vld [vmem:[%s561 + $0x38] sm:$0xff]
        %v576 = vld [vmem:[%s561 + $0x40] sm:$0xff]
        %v577 = vld [vmem:[%s561 + $0x48] sm:$0xff]
        %v578 = vld [vmem:[%s561 + $0x50] sm:$0xff]
        %v579 = vld [vmem:[%s561 + $0x58] sm:$0xff]
        %v580 = vld [vmem:[%s561 + $0x60] sm:$0xff]
        %v581 = vld [vmem:[%s561 + $0x68] sm:$0xff]
        %v582 = vld [vmem:[%s561 + $0x70] sm:$0xff]
        %v583 = vld [vmem:[%s561 + $0x78] sm:$0xff]
        %v584 = vld [vmem:[%s561 + $0x80] sm:$0xff]
        %v585 = vld [vmem:[%s561 + $0x88] sm:$0xff]
        %v586 = vld [vmem:[%s561 + $0x90] sm:$0xff]
        %v587 = vld [vmem:[%s561 + $0x98] sm:$0xff]
        %v588 = vld [vmem:[%s561 + $0xa0] sm:$0xff]
        %v589 = vld [vmem:[%s561 + $0xa8] sm:$0xff]
        %v590 = vld [vmem:[%s561 + $0xb0] sm:$0xff]
        %v591 = vld [vmem:[%s561 + $0xb8] sm:$0xff]
        %v592 = vld [vmem:[%s561 + $0xc0] sm:$0xff]
        %v593 = vld [vmem:[%s561 + $0xc8] sm:$0xff]
        %v594 = vld [vmem:[%s561 + $0xd0] sm:$0xff]
        %v595 = vld [vmem:[%s561 + $0xd8] sm:$0xff]
        %v596 = vld [vmem:[%s561 + $0xe0] sm:$0xff]
        %v597 = vld [vmem:[%s561 + $0xe8] sm:$0xff]
        %v598 = vld [vmem:[%s561 + $0xf0] sm:$0xff]
        %v599 = vld [vmem:[%s561 + $0xf8] sm:$0xff]
        %v600 = vld [vmem:[#allocation2] sm:$0xff]
        %v601 = vld [vmem:[#allocation2 + $0x8] sm:$0xff]
        %v602 = vld [vmem:[#allocation2 + $0x10] sm:$0xff]
        %v603 = vld [vmem:[#allocation2 + $0x18] sm:$0xff]
        %v604 = vld [vmem:[#allocation2 + $0x20] sm:$0xff]
        %v605 = vld [vmem:[#allocation2 + $0x28] sm:$0xff]
        %v606 = vld [vmem:[#allocation2 + $0x30] sm:$0xff]
        %v607 = vld [vmem:[#allocation2 + $0x38] sm:$0xff]
        %v608 = vpack.c.bf16 %v569, %v568
        %v609 = vpack.c.bf16 %v571, %v570
        %v610 = vpack.c.bf16 %v573, %v572
        %v611 = vpack.c.bf16 %v575, %v574
        %v612 = vpack.c.bf16 %v577, %v576
        %v613 = vpack.c.bf16 %v579, %v578
        %v614 = vpack.c.bf16 %v581, %v580
        %v615 = vpack.c.bf16 %v583, %v582
        %v616 = vpack.c.bf16 %v585, %v584
        %v617 = vpack.c.bf16 %v587, %v586
        %v618 = vpack.c.bf16 %v589, %v588
        %v619 = vpack.c.bf16 %v591, %v590
        %v620 = vpack.c.bf16 %v593, %v592
        %v621 = vpack.c.bf16 %v595, %v594
        %v622 = vpack.c.bf16 %v597, %v596
        %v623 = vpack.c.bf16 %v599, %v598
        %v632 = vunpack.c.l.b16 %v600
        %v633 = vunpack.c.h.b16 %v600
        %v634 = vunpack.c.l.b16 %v601
        %v635 = vunpack.c.h.b16 %v601
        %v636 = vunpack.c.l.b16 %v602
        %v637 = vunpack.c.h.b16 %v602
        %v638 = vunpack.c.l.b16 %v603
        %v639 = vunpack.c.h.b16 %v603
        %v640 = vunpack.c.l.b16 %v604
        %v641 = vunpack.c.h.b16 %v604
        %v642 = vunpack.c.l.b16 %v605
        %v643 = vunpack.c.h.b16 %v605
        %v644 = vunpack.c.l.b16 %v606
        %v645 = vunpack.c.h.b16 %v606
        %v646 = vunpack.c.l.b16 %v607
        %v647 = vunpack.c.h.b16 %v607
        %v648 = vpack.c.b16 %v634, %v632
        %v649 = vpack.c.b16 %v635, %v633
        %v650 = vpack.c.b16 %v638, %v636
        %v651 = vpack.c.b16 %v639, %v637
        %v652 = vpack.c.b16 %v642, %v640
        %v653 = vpack.c.b16 %v643, %v641
        %v654 = vpack.c.b16 %v646, %v644
        %v655 = vpack.c.b16 %v647, %v645
        %664 = vmatprep.subr.bf16.mxu0 0
        %665 = vmatpush1.bf16.msra.mxu0 %v608
        %666 = vmatprep.subr.bf16.mxu0 0
        %667 = vmatpush1.bf16.msra.mxu0 %v609
        %668 = vmatprep.subr.bf16.mxu0 0
        %669 = vmatpush1.bf16.msra.mxu0 %v610
        %670 = vmatprep.subr.bf16.mxu0 0
        %671 = vmatpush1.bf16.msra.mxu0 %v611
        %672 = vmatprep.subr.bf16.mxu0 0
        %673 = vmatpush1.bf16.msra.mxu0 %v612
        %674 = vmatprep.subr.bf16.mxu0 0
        %675 = vmatpush1.bf16.msra.mxu0 %v613
        %676 = vmatprep.subr.bf16.mxu0 0
        %677 = vmatpush1.bf16.msra.mxu0 %v614
        %678 = vmatprep.subr.bf16.mxu0 0
        %679 = vmatpush1.bf16.msra.mxu0 %v615
        %680 = vmatprep.subr.bf16.mxu0 0
        %681 = vmatpush1.bf16.msra.mxu0 %v616
        %682 = vmatprep.subr.bf16.mxu0 0
        %683 = vmatpush1.bf16.msra.mxu0 %v617
        %684 = vmatprep.subr.bf16.mxu0 0
        %685 = vmatpush1.bf16.msra.mxu0 %v618
        %686 = vmatprep.subr.bf16.mxu0 0
        %687 = vmatpush1.bf16.msra.mxu0 %v619
        %688 = vmatprep.subr.bf16.mxu0 0
        %689 = vmatpush1.bf16.msra.mxu0 %v620
        %690 = vmatprep.subr.bf16.mxu0 0
        %691 = vmatpush1.bf16.msra.mxu0 %v621
        %692 = vmatprep.subr.bf16.mxu0 0
        %693 = vmatpush1.bf16.msra.mxu0 %v622
        %694 = vmatprep.subr.bf16.mxu0 0
        %695 = vmatpush1.bf16.msra.mxu0 %v623
        %696 = vmatprep.mubr.bf16.mxu0 %v649
        %697 = vmatmul.mubr.bf16.gmra.mrb[0].mxu0 %v648
        %v698 = vpop.f32.mrb[0].mxu0
        %v699 = vadd.f32 0.0, %v698
        %v700 = vpop.f32.mrb[0].mxu0
        %v701 = vpop.f32.mrb[0].mxu0
        %v702 = vadd.f32 0.0, %v701
        %v703 = vpop.f32.mrb[0].mxu0
        %704 = vmatprep.mubr.bf16.mxu0 %v651
        %705 = vmatmul.mubr.bf16.gmra.mrb[0].mxu0 %v650
        %v706 = vpop.f32.mrb[0].mxu0
        %v707 = vadd.f32 0.0, %v706
        %v708 = vpop.f32.mrb[0].mxu0
        %v709 = vpop.f32.mrb[0].mxu0
        %v710 = vadd.f32 0.0, %v709
        %v711 = vpop.f32.mrb[0].mxu0
        %712 = vmatprep.mubr.bf16.mxu0 %v653
        %713 = vmatmul.mubr.bf16.gmra.mrb[0].mxu0 %v652
        %v714 = vpop.f32.mrb[0].mxu0
        %v715 = vadd.f32 0.0, %v714
        %v716 = vpop.f32.mrb[0].mxu0
        %v717 = vpop.f32.mrb[0].mxu0
        %v718 = vadd.f32 0.0, %v717
        %v719 = vpop.f32.mrb[0].mxu0
        %720 = vmatprep.mubr.bf16.mxu0 %v655
        %721 = vmatmul.mubr.bf16.gmra.mrb[0].mxu0 %v654
        %v722 = vpop.f32.mrb[0].mxu0
        %v723 = vadd.f32 0.0, %v722
        %v724 = vpop.f32.mrb[0].mxu0
        %v725 = vpop.f32.mrb[0].mxu0
        %v726 = vadd.f32 0.0, %v725
        %v727 = vpop.f32.mrb[0].mxu0
        %728 = vdwg.mxu0
        %v729 = vld [vmem:[%s2] sm:$0xff]
        %v730 = vld [vmem:[%s2 + $0x8] sm:$0xff]
        %v731 = vld [vmem:[%s2 + $0x10] sm:$0xff]
        %v732 = vld [vmem:[%s2 + $0x18] sm:$0xff]
        %v733 = vld [vmem:[%s2 + $0x20] sm:$0xff]
        %v734 = vld [vmem:[%s2 + $0x28] sm:$0xff]
        %v735 = vld [vmem:[%s2 + $0x30] sm:$0xff]
        %v736 = vld [vmem:[%s2 + $0x38] sm:$0xff]
        %vm737 = vcmp.gt.f32.partialorder %v699, 0.0
        %vm738 = vcmp.gt.f32.partialorder %v702, 0.0
        %vm739 = vcmp.gt.f32.partialorder %v707, 0.0
        %vm740 = vcmp.gt.f32.partialorder %v710, 0.0
        %vm741 = vcmp.gt.f32.partialorder %v715, 0.0
        %vm742 = vcmp.gt.f32.partialorder %v718, 0.0
        %vm743 = vcmp.gt.f32.partialorder %v723, 0.0
        %vm744 = vcmp.gt.f32.partialorder %v726, 0.0
        %746 = vset.pattern.permute.xlu0 0
        %747 = vperm.xlu0 %746, %v729
        %v748 = vpop.permute.xlu0 %747
        %751 = vset.pattern.permute.xlu0 0
        %752 = vperm.xlu0 %751, %v730
        %v753 = vpop.permute.xlu0 %752
        %756 = vset.pattern.permute.xlu0 0
        %757 = vperm.xlu0 %756, %v731
        %v758 = vpop.permute.xlu0 %757
        %761 = vset.pattern.permute.xlu0 0
        %762 = vperm.xlu0 %761, %v732
        %v763 = vpop.permute.xlu0 %762
        %766 = vset.pattern.permute.xlu0 0
        %767 = vperm.xlu0 %766, %v733
        %v768 = vpop.permute.xlu0 %767
        %771 = vset.pattern.permute.xlu0 0
        %772 = vperm.xlu0 %771, %v734
        %v773 = vpop.permute.xlu0 %772
        %776 = vset.pattern.permute.xlu0 0
        %777 = vperm.xlu0 %776, %v735
        %v778 = vpop.permute.xlu0 %777
        %781 = vset.pattern.permute.xlu0 0
        %782 = vperm.xlu0 %781, %v736
        %v783 = vpop.permute.xlu0 %782
        %v785 = vmul.f32 %v748, %v699
        %v786 = vmul.f32 %v753, %v702
        %v787 = vmul.f32 %v758, %v707
        %v788 = vmul.f32 %v763, %v710
        %v789 = vmul.f32 %v768, %v715
        %v790 = vmul.f32 %v773, %v718
        %v791 = vmul.f32 %v778, %v723
        %v792 = vmul.f32 %v783, %v726
        %v793 = vsel %vm737, %v699, %v785
        %v794 = vsel %vm738, %v702, %v786
        %v795 = vsel %vm739, %v707, %v787
        %v796 = vsel %vm740, %v710, %v788
        %v797 = vsel %vm741, %v715, %v789
        %v798 = vsel %vm742, %v718, %v790
        %v799 = vsel %vm743, %v723, %v791
        %v800 = vsel %vm744, %v726, %v792
        %v801 = vld [vmem:[%s3] sm:$0xff]
        %v802 = vld [vmem:[%s3 + $0x8] sm:$0xff]
        %v803 = vld [vmem:[%s3 + $0x10] sm:$0xff]
        %v804 = vld [vmem:[%s3 + $0x18] sm:$0xff]
        %v805 = vld [vmem:[%s3 + $0x20] sm:$0xff]
        %v806 = vld [vmem:[%s3 + $0x28] sm:$0xff]
        %v807 = vld [vmem:[%s3 + $0x30] sm:$0xff]
        %v808 = vld [vmem:[%s3 + $0x38] sm:$0xff]
        %v809 = vld [vmem:[%s4] sm:$0xff]
        %v810 = vld [vmem:[%s4 + $0x8] sm:$0xff]
        %v811 = vld [vmem:[%s4 + $0x10] sm:$0xff]
        %v812 = vld [vmem:[%s4 + $0x18] sm:$0xff]
        %v813 = vld [vmem:[%s4 + $0x20] sm:$0xff]
        %v814 = vld [vmem:[%s4 + $0x28] sm:$0xff]
        %v815 = vld [vmem:[%s4 + $0x30] sm:$0xff]
        %v816 = vld [vmem:[%s4 + $0x38] sm:$0xff]
        %v817 = vmul.f32 %v793, %v567
        %v818 = vmul.f32 %v794, %v567
        %v819 = vmul.f32 %v795, %v567
        %v820 = vmul.f32 %v796, %v567
        %v821 = vmul.f32 %v797, %v567
        %v822 = vmul.f32 %v798, %v567
        %v823 = vmul.f32 %v799, %v567
        %v824 = vmul.f32 %v800, %v567
        %825 = vadd.xlane.f32.xlu0 %v817
        %v826 = vpop.xlane.xlu0 %825
        %827 = vadd.xlane.f32.xlu0 %v818
        %v828 = vpop.xlane.xlu0 %827
        %829 = vadd.xlane.f32.xlu0 %v819
        %v830 = vpop.xlane.xlu0 %829
        %831 = vadd.xlane.f32.xlu0 %v820
        %v832 = vpop.xlane.xlu0 %831
        %833 = vadd.xlane.f32.xlu0 %v821
        %v834 = vpop.xlane.xlu0 %833
        %835 = vadd.xlane.f32.xlu0 %v822
        %v836 = vpop.xlane.xlu0 %835
        %837 = vadd.xlane.f32.xlu0 %v823
        %v838 = vpop.xlane.xlu0 %837
        %839 = vadd.xlane.f32.xlu0 %v824
        %v840 = vpop.xlane.xlu0 %839
        %v841 = vmul.f32 %v826, 0.03125
        %v842 = vmul.f32 %v828, 0.03125
        %v843 = vmul.f32 %v830, 0.03125
        %v844 = vmul.f32 %v832, 0.03125
        %v845 = vmul.f32 %v834, 0.03125
        %v846 = vmul.f32 %v836, 0.03125
        %v847 = vmul.f32 %v838, 0.03125
        %v848 = vmul.f32 %v840, 0.03125
        %v849 = vsub.f32 %v793, %v841
        %v850 = vsub.f32 %v794, %v842
        %v851 = vsub.f32 %v795, %v843
        %v852 = vsub.f32 %v796, %v844
        %v853 = vsub.f32 %v797, %v845
        %v854 = vsub.f32 %v798, %v846
        %v855 = vsub.f32 %v799, %v847
        %v856 = vsub.f32 %v800, %v848
        %v857 = vmul.f32 %v849, %v567
        %v858 = vmul.f32 %v850, %v567
        %v859 = vmul.f32 %v851, %v567
        %v860 = vmul.f32 %v852, %v567
        %v861 = vmul.f32 %v853, %v567
        %v862 = vmul.f32 %v854, %v567
        %v863 = vmul.f32 %v855, %v567
        %v864 = vmul.f32 %v856, %v567
        %v865 = vmul.f32 %v857, %v857
        %v866 = vmul.f32 %v858, %v858
        %v867 = vmul.f32 %v859, %v859
        %v868 = vmul.f32 %v860, %v860
        %v869 = vmul.f32 %v861, %v861
        %v870 = vmul.f32 %v862, %v862
        %v871 = vmul.f32 %v863, %v863
        %v872 = vmul.f32 %v864, %v864
        %873 = vadd.xlane.f32.xlu0 %v865
        %v874 = vpop.xlane.xlu0 %873
        %875 = vadd.xlane.f32.xlu0 %v866
        %v876 = vpop.xlane.xlu0 %875
        %877 = vadd.xlane.f32.xlu0 %v867
        %v878 = vpop.xlane.xlu0 %877
        %879 = vadd.xlane.f32.xlu0 %v868
        %v880 = vpop.xlane.xlu0 %879
        %881 = vadd.xlane.f32.xlu0 %v869
        %v882 = vpop.xlane.xlu0 %881
        %883 = vadd.xlane.f32.xlu0 %v870
        %v884 = vpop.xlane.xlu0 %883
        %885 = vadd.xlane.f32.xlu0 %v871
        %v886 = vpop.xlane.xlu0 %885
        %887 = vadd.xlane.f32.xlu0 %v872
        %v888 = vpop.xlane.xlu0 %887
        %v889 = vmul.f32 %v874, 0.03125
        %v890 = vmul.f32 %v876, 0.03125
        %v891 = vmul.f32 %v878, 0.03125
        %v892 = vmul.f32 %v880, 0.03125
        %v893 = vmul.f32 %v882, 0.03125
        %v894 = vmul.f32 %v884, 0.03125
        %v895 = vmul.f32 %v886, 0.03125
        %v896 = vmul.f32 %v888, 0.03125
        %v897 = vadd.f32 %v889, 1e-05
        %v898 = vadd.f32 %v890, 1e-05
        %v899 = vadd.f32 %v891, 1e-05
        %v900 = vadd.f32 %v892, 1e-05
        %v901 = vadd.f32 %v893, 1e-05
        %v902 = vadd.f32 %v894, 1e-05
        %v903 = vadd.f32 %v895, 1e-05
        %v904 = vadd.f32 %v896, 1e-05
        %v905 = vrsqrt.pop %v897
        %v906 = vrsqrt.pop %v898
        %v907 = vrsqrt.pop %v899
        %v908 = vrsqrt.pop %v900
        %v909 = vrsqrt.pop %v901
        %v910 = vrsqrt.pop %v902
        %v911 = vrsqrt.pop %v903
        %v912 = vrsqrt.pop %v904
        %v913 = vmul.f32 %v849, %v905
        %v914 = vmul.f32 %v850, %v906
        %v915 = vmul.f32 %v851, %v907
        %v916 = vmul.f32 %v852, %v908
        %v917 = vmul.f32 %v853, %v909
        %v918 = vmul.f32 %v854, %v910
        %v919 = vmul.f32 %v855, %v911
        %v920 = vmul.f32 %v856, %v912
        %922 = vset.pattern.permute.xlu0 0
        %923 = vperm.xlu0 %922, %v801
        %v924 = vpop.permute.xlu0 %923
        %927 = vset.pattern.permute.xlu0 0
        %928 = vperm.xlu0 %927, %v802
        %v929 = vpop.permute.xlu0 %928
        %932 = vset.pattern.permute.xlu0 0
        %933 = vperm.xlu0 %932, %v803
        %v934 = vpop.permute.xlu0 %933
        %937 = vset.pattern.permute.xlu0 0
        %938 = vperm.xlu0 %937, %v804
        %v939 = vpop.permute.xlu0 %938
        %942 = vset.pattern.permute.xlu0 0
        %943 = vperm.xlu0 %942, %v805
        %v944 = vpop.permute.xlu0 %943
        %947 = vset.pattern.permute.xlu0 0
        %948 = vperm.xlu0 %947, %v806
        %v949 = vpop.permute.xlu0 %948
        %952 = vset.pattern.permute.xlu0 0
        %953 = vperm.xlu0 %952, %v807
        %v954 = vpop.permute.xlu0 %953
        %957 = vset.pattern.permute.xlu0 0
        %958 = vperm.xlu0 %957, %v808
        %v959 = vpop.permute.xlu0 %958
        %v961 = vmul.f32 %v913, %v924
        %v962 = vmul.f32 %v914, %v929
        %v963 = vmul.f32 %v915, %v934
        %v964 = vmul.f32 %v916, %v939
        %v965 = vmul.f32 %v917, %v944
        %v966 = vmul.f32 %v918, %v949
        %v967 = vmul.f32 %v919, %v954
        %v968 = vmul.f32 %v920, %v959
        %970 = vset.pattern.permute.xlu0 0
        %971 = vperm.xlu0 %970, %v809
        %v972 = vpop.permute.xlu0 %971
        %975 = vset.pattern.permute.xlu0 0
        %976 = vperm.xlu0 %975, %v810
        %v977 = vpop.permute.xlu0 %976
        %980 = vset.pattern.permute.xlu0 0
        %981 = vperm.xlu0 %980, %v811
        %v982 = vpop.permute.xlu0 %981
        %985 = vset.pattern.permute.xlu0 0
        %986 = vperm.xlu0 %985, %v812
        %v987 = vpop.permute.xlu0 %986
        %990 = vset.pattern.permute.xlu0 0
        %991 = vperm.xlu0 %990, %v813
        %v992 = vpop.permute.xlu0 %991
        %995 = vset.pattern.permute.xlu0 0
        %996 = vperm.xlu0 %995, %v814
        %v997 = vpop.permute.xlu0 %996
        %1000 = vset.pattern.permute.xlu0 0
        %1001 = vperm.xlu0 %1000, %v815
        %v1002 = vpop.permute.xlu0 %1001
        %1005 = vset.pattern.permute.xlu0 0
        %1006 = vperm.xlu0 %1005, %v816
        %v1007 = vpop.permute.xlu0 %1006
        %v1009 = vadd.f32 %v961, %v972
        %v1010 = vadd.f32 %v962, %v977
        %v1011 = vadd.f32 %v963, %v982
        %v1012 = vadd.f32 %v964, %v987
        %v1013 = vadd.f32 %v965, %v992
        %v1014 = vadd.f32 %v966, %v997
        %v1015 = vadd.f32 %v967, %v1002
        %v1016 = vadd.f32 %v968, %v1007
        %s1017 = sld [smem:[#allocation6 + $0x2]]
        %v1018 = vstv %s1017
        %v1019 = vmul.f32 %v1018, %v1009
        %v1020 = vmul.f32 %v1018, %v1010
        %v1021 = vmul.f32 %v1018, %v1011
        %v1022 = vmul.f32 %v1018, %v1012
        %v1023 = vmul.f32 %v1018, %v1013
        %v1024 = vmul.f32 %v1018, %v1014
        %v1025 = vmul.f32 %v1018, %v1015
        %v1026 = vmul.f32 %v1018, %v1016
        %s1027 = sld [smem:[#allocation6]]
        %vm1028 = vcmp.ge.s32.totalorder %v564, 2
        %1029 = vrot.lane.b32.xlu0 %v1009, 2
        %v1030 = vpop.permute.xlu0 %1029
        %1031 = vrot.lane.b32.xlu0 %v1010, 2
        %v1032 = vpop.permute.xlu0 %1031
        %1033 = vrot.lane.b32.xlu0 %v1011, 2
        %v1034 = vpop.permute.xlu0 %1033
        %1035 = vrot.lane.b32.xlu0 %v1012, 2
        %v1036 = vpop.permute.xlu0 %1035
        %1037 = vrot.lane.b32.xlu0 %v1013, 2
        %v1038 = vpop.permute.xlu0 %1037
        %1039 = vrot.lane.b32.xlu0 %v1014, 2
        %v1040 = vpop.permute.xlu0 %1039
        %1041 = vrot.lane.b32.xlu0 %v1015, 2
        %v1042 = vpop.permute.xlu0 %1041
        %1043 = vrot.lane.b32.xlu0 %v1016, 2
        %v1044 = vpop.permute.xlu0 %1043
        %v1045 = vsel %vm1028, 1, 0
        %vm1046 = vcmp.eq.s32.totalorder %v1045, 1
        %v1047 = vsel %vm1046, %v1030, 0.0
        %v1048 = vsel %vm1046, %v1032, 0.0
        %v1049 = vsel %vm1046, %v1034, 0.0
        %v1050 = vsel %vm1046, %v1036, 0.0
        %v1051 = vsel %vm1046, %v1038, 0.0
        %v1052 = vsel %vm1046, %v1040, 0.0
        %v1053 = vsel %vm1046, %v1042, 0.0
        %v1054 = vsel %vm1046, %v1044, 0.0
        %v1055 = vstv %s1027
        %v1056 = vmul.f32 %v1055, %v1047
        %v1057 = vmul.f32 %v1055, %v1048
        %v1058 = vmul.f32 %v1055, %v1049
        %v1059 = vmul.f32 %v1055, %v1050
        %v1060 = vmul.f32 %v1055, %v1051
        %v1061 = vmul.f32 %v1055, %v1052
        %v1062 = vmul.f32 %v1055, %v1053
        %v1063 = vmul.f32 %v1055, %v1054
        %v1064 = vadd.f32 %v1019, %v1056
        %v1065 = vadd.f32 %v1020, %v1057
        %v1066 = vadd.f32 %v1021, %v1058
        %v1067 = vadd.f32 %v1022, %v1059
        %v1068 = vadd.f32 %v1023, %v1060
        %v1069 = vadd.f32 %v1024, %v1061
        %v1070 = vadd.f32 %v1025, %v1062
        %v1071 = vadd.f32 %v1026, %v1063
        %s1072 = sld [smem:[#allocation6 + $0x1]]
        %vm1073 = vcmp.ge.s32.totalorder %v564, 1
        %1074 = vrot.lane.b32.xlu0 %v1009, 1
        %v1075 = vpop.permute.xlu0 %1074
        %1076 = vrot.lane.b32.xlu0 %v1010, 1
        %v1077 = vpop.permute.xlu0 %1076
        %1078 = vrot.lane.b32.xlu0 %v1011, 1
        %v1079 = vpop.permute.xlu0 %1078
        %1080 = vrot.lane.b32.xlu0 %v1012, 1
        %v1081 = vpop.permute.xlu0 %1080
        %1082 = vrot.lane.b32.xlu0 %v1013, 1
        %v1083 = vpop.permute.xlu0 %1082
        %1084 = vrot.lane.b32.xlu0 %v1014, 1
        %v1085 = vpop.permute.xlu0 %1084
        %1086 = vrot.lane.b32.xlu0 %v1015, 1
        %v1087 = vpop.permute.xlu0 %1086
        %1088 = vrot.lane.b32.xlu0 %v1016, 1
        %v1089 = vpop.permute.xlu0 %1088
        %v1090 = vsel %vm1073, 1, 0
        %vm1091 = vcmp.eq.s32.totalorder %v1090, 1
        %v1092 = vsel %vm1091, %v1075, 0.0
        %v1093 = vsel %vm1091, %v1077, 0.0
        %v1094 = vsel %vm1091, %v1079, 0.0
        %v1095 = vsel %vm1091, %v1081, 0.0
        %v1096 = vsel %vm1091, %v1083, 0.0
        %v1097 = vsel %vm1091, %v1085, 0.0
        %v1098 = vsel %vm1091, %v1087, 0.0
        %v1099 = vsel %vm1091, %v1089, 0.0
        %v1100 = vstv %s1072
        %v1101 = vmul.f32 %v1100, %v1092
        %v1102 = vmul.f32 %v1100, %v1093
        %v1103 = vmul.f32 %v1100, %v1094
        %v1104 = vmul.f32 %v1100, %v1095
        %v1105 = vmul.f32 %v1100, %v1096
        %v1106 = vmul.f32 %v1100, %v1097
        %v1107 = vmul.f32 %v1100, %v1098
        %v1108 = vmul.f32 %v1100, %v1099
        %v1109 = vadd.f32 %v1064, %v1101
        %v1110 = vadd.f32 %v1065, %v1102
        %v1111 = vadd.f32 %v1066, %v1103
        %v1112 = vadd.f32 %v1067, %v1104
        %v1113 = vadd.f32 %v1068, %v1105
        %v1114 = vadd.f32 %v1069, %v1106
        %v1115 = vadd.f32 %v1070, %v1107
        %v1116 = vadd.f32 %v1071, %v1108
        %vm1117 = vcmp.ge.s32.totalorder %v564, 8
        %1118 = vrot.lane.b32.xlu0 %v1109, 8
        %v1119 = vpop.permute.xlu0 %1118
        %1120 = vrot.lane.b32.xlu0 %v1110, 8
        %v1121 = vpop.permute.xlu0 %1120
        %1122 = vrot.lane.b32.xlu0 %v1111, 8
        %v1123 = vpop.permute.xlu0 %1122
        %1124 = vrot.lane.b32.xlu0 %v1112, 8
        %v1125 = vpop.permute.xlu0 %1124
        %1126 = vrot.lane.b32.xlu0 %v1113, 8
        %v1127 = vpop.permute.xlu0 %1126
        %1128 = vrot.lane.b32.xlu0 %v1114, 8
        %v1129 = vpop.permute.xlu0 %1128
        %1130 = vrot.lane.b32.xlu0 %v1115, 8
        %v1131 = vpop.permute.xlu0 %1130
        %1132 = vrot.lane.b32.xlu0 %v1116, 8
        %v1133 = vpop.permute.xlu0 %1132
        %v1134 = vsel %vm1117, 1, 0
        %vm1135 = vcmp.eq.s32.totalorder %v1134, 1
        %v1136 = vsel %vm1135, %v1119, 0.0
        %v1137 = vsel %vm1135, %v1121, 0.0
        %v1138 = vsel %vm1135, %v1123, 0.0
        %v1139 = vsel %vm1135, %v1125, 0.0
        %v1140 = vsel %vm1135, %v1127, 0.0
        %v1141 = vsel %vm1135, %v1129, 0.0
        %v1142 = vsel %vm1135, %v1131, 0.0
        %v1143 = vsel %vm1135, %v1133, 0.0
        %vm1144 = vcmp.ge.s32.totalorder %v564, 6
        %1145 = vrot.lane.b32.xlu0 %v1109, 6
        %v1146 = vpop.permute.xlu0 %1145
        %1147 = vrot.lane.b32.xlu0 %v1110, 6
        %v1148 = vpop.permute.xlu0 %1147
        %1149 = vrot.lane.b32.xlu0 %v1111, 6
        %v1150 = vpop.permute.xlu0 %1149
        %1151 = vrot.lane.b32.xlu0 %v1112, 6
        %v1152 = vpop.permute.xlu0 %1151
        %1153 = vrot.lane.b32.xlu0 %v1113, 6
        %v1154 = vpop.permute.xlu0 %1153
        %1155 = vrot.lane.b32.xlu0 %v1114, 6
        %v1156 = vpop.permute.xlu0 %1155
        %1157 = vrot.lane.b32.xlu0 %v1115, 6
        %v1158 = vpop.permute.xlu0 %1157
        %1159 = vrot.lane.b32.xlu0 %v1116, 6
        %v1160 = vpop.permute.xlu0 %1159
        %v1161 = vsel %vm1144, 1, 0
        %vm1162 = vcmp.eq.s32.totalorder %v1161, 1
        %v1163 = vsel %vm1162, %v1146, 0.0
        %v1164 = vsel %vm1162, %v1148, 0.0
        %v1165 = vsel %vm1162, %v1150, 0.0
        %v1166 = vsel %vm1162, %v1152, 0.0
        %v1167 = vsel %vm1162, %v1154, 0.0
        %v1168 = vsel %vm1162, %v1156, 0.0
        %v1169 = vsel %vm1162, %v1158, 0.0
        %v1170 = vsel %vm1162, %v1160, 0.0
        %vm1171 = vcmp.ge.s32.totalorder %v564, 4
        %1172 = vrot.lane.b32.xlu0 %v1109, 4
        %v1173 = vpop.permute.xlu0 %1172
        %1174 = vrot.lane.b32.xlu0 %v1110, 4
        %v1175 = vpop.permute.xlu0 %1174
        %1176 = vrot.lane.b32.xlu0 %v1111, 4
        %v1177 = vpop.permute.xlu0 %1176
        %1178 = vrot.lane.b32.xlu0 %v1112, 4
        %v1179 = vpop.permute.xlu0 %1178
        %1180 = vrot.lane.b32.xlu0 %v1113, 4
        %v1181 = vpop.permute.xlu0 %1180
        %1182 = vrot.lane.b32.xlu0 %v1114, 4
        %v1183 = vpop.permute.xlu0 %1182
        %1184 = vrot.lane.b32.xlu0 %v1115, 4
        %v1185 = vpop.permute.xlu0 %1184
        %1186 = vrot.lane.b32.xlu0 %v1116, 4
        %v1187 = vpop.permute.xlu0 %1186
        %v1188 = vsel %vm1171, 1, 0
        %vm1189 = vcmp.eq.s32.totalorder %v1188, 1
        %v1190 = vsel %vm1189, %v1173, 0.0
        %v1191 = vsel %vm1189, %v1175, 0.0
        %v1192 = vsel %vm1189, %v1177, 0.0
        %v1193 = vsel %vm1189, %v1179, 0.0
        %v1194 = vsel %vm1189, %v1181, 0.0
        %v1195 = vsel %vm1189, %v1183, 0.0
        %v1196 = vsel %vm1189, %v1185, 0.0
        %v1197 = vsel %vm1189, %v1187, 0.0
        %1198 = vrot.lane.b32.xlu0 %v1109, 2
        %v1199 = vpop.permute.xlu0 %1198
        %1200 = vrot.lane.b32.xlu0 %v1110, 2
        %v1201 = vpop.permute.xlu0 %1200
        %1202 = vrot.lane.b32.xlu0 %v1111, 2
        %v1203 = vpop.permute.xlu0 %1202
        %1204 = vrot.lane.b32.xlu0 %v1112, 2
        %v1205 = vpop.permute.xlu0 %1204
        %1206 = vrot.lane.b32.xlu0 %v1113, 2
        %v1207 = vpop.permute.xlu0 %1206
        %1208 = vrot.lane.b32.xlu0 %v1114, 2
        %v1209 = vpop.permute.xlu0 %1208
        %1210 = vrot.lane.b32.xlu0 %v1115, 2
        %v1211 = vpop.permute.xlu0 %1210
        %1212 = vrot.lane.b32.xlu0 %v1116, 2
        %v1213 = vpop.permute.xlu0 %1212
        %v1214 = vsel %vm1046, %v1199, 0.0
        %v1215 = vsel %vm1046, %v1201, 0.0
        %v1216 = vsel %vm1046, %v1203, 0.0
        %v1217 = vsel %vm1046, %v1205, 0.0
        %v1218 = vsel %vm1046, %v1207, 0.0
        %v1219 = vsel %vm1046, %v1209, 0.0
        %v1220 = vsel %vm1046, %v1211, 0.0
        %v1221 = vsel %vm1046, %v1213, 0.0
        %v1222 = vpack.c.bf16 %v1137, %v1136
        %v1223 = vpack.c.bf16 %v1139, %v1138
        %v1224 = vpack.c.bf16 %v1141, %v1140
        %v1225 = vpack.c.bf16 %v1143, %v1142
        %v1226 = vpack.c.bf16 %v1164, %v1163
        %v1227 = vpack.c.bf16 %v1166, %v1165
        %v1228 = vpack.c.bf16 %v1168, %v1167
        %v1229 = vpack.c.bf16 %v1170, %v1169
        %v1230 = vpack.c.bf16 %v1191, %v1190
        %v1231 = vpack.c.bf16 %v1193, %v1192
        %v1232 = vpack.c.bf16 %v1195, %v1194
        %v1233 = vpack.c.bf16 %v1197, %v1196
        %v1234 = vpack.c.bf16 %v1215, %v1214
        %v1235 = vpack.c.bf16 %v1217, %v1216
        %v1236 = vpack.c.bf16 %v1219, %v1218
        %v1237 = vpack.c.bf16 %v1221, %v1220
        %v1238 = vpack.c.bf16 %v1110, %v1109
        %v1239 = vpack.c.bf16 %v1112, %v1111
        %v1240 = vpack.c.bf16 %v1114, %v1113
        %v1241 = vpack.c.bf16 %v1116, %v1115
        %v1242 = vld [vmem:[%s6] sm:$0xff]
        %v1243 = vld [vmem:[%s6 + $0x8] sm:$0xf]
        %v1244 = vld [vmem:[%s6 + $0xc] sm:$0xff]
        %v1245 = vld [vmem:[%s6 + $0x14] sm:$0xf]
        %v1246 = vld [vmem:[%s6 + $0x18] sm:$0xff]
        %v1247 = vld [vmem:[%s6 + $0x20] sm:$0xf]
        %v1248 = vld [vmem:[%s6 + $0x24] sm:$0xff]
        %v1249 = vld [vmem:[%s6 + $0x2c] sm:$0xf]
        %v1250 = vld [vmem:[%s6 + $0x30] sm:$0xff]
        %v1251 = vld [vmem:[%s6 + $0x38] sm:$0xf]
        %v1252 = vld [vmem:[%s6 + $0x3c] sm:$0xff]
        %v1253 = vld [vmem:[%s6 + $0x44] sm:$0xf]
        %v1254 = vld [vmem:[%s6 + $0x48] sm:$0xff]
        %v1255 = vld [vmem:[%s6 + $0x50] sm:$0xf]
        %v1256 = vld [vmem:[%s6 + $0x54] sm:$0xff]
        %v1257 = vld [vmem:[%s6 + $0x5c] sm:$0xf]
        %v1274 = vunpack.c.l.b16 %v1242
        %v1275 = vunpack.c.h.b16 %v1242
        %v1276 = vunpack.c.l.b16 %v1243
        %v1277 = vunpack.c.l.b16 %v1244
        %v1278 = vunpack.c.h.b16 %v1244
        %v1279 = vunpack.c.l.b16 %v1245
        %v1280 = vunpack.c.l.b16 %v1246
        %v1281 = vunpack.c.h.b16 %v1246
        %v1282 = vunpack.c.l.b16 %v1247
        %v1283 = vunpack.c.l.b16 %v1248
        %v1284 = vunpack.c.h.b16 %v1248
        %v1285 = vunpack.c.l.b16 %v1249
        %v1286 = vunpack.c.l.b16 %v1250
        %v1287 = vunpack.c.h.b16 %v1250
        %v1288 = vunpack.c.l.b16 %v1251
        %v1289 = vunpack.c.l.b16 %v1252
        %v1290 = vunpack.c.h.b16 %v1252
        %v1291 = vunpack.c.l.b16 %v1253
        %v1292 = vunpack.c.l.b16 %v1254
        %v1293 = vunpack.c.h.b16 %v1254
        %v1294 = vunpack.c.l.b16 %v1255
        %v1295 = vunpack.c.l.b16 %v1256
        %v1296 = vunpack.c.h.b16 %v1256
        %v1297 = vunpack.c.l.b16 %v1257
        %v1298 = vpack.c.b16 %v1277, %v1274
        %v1299 = vpack.c.b16 %v1278, %v1275
        %v1300 = vpack.c.b16 %v1279, %v1276
        %v1301 = vpack.c.b16 %v1283, %v1280
        %v1302 = vpack.c.b16 %v1284, %v1281
        %v1303 = vpack.c.b16 %v1285, %v1282
        %v1304 = vpack.c.b16 %v1289, %v1286
        %v1305 = vpack.c.b16 %v1290, %v1287
        %v1306 = vpack.c.b16 %v1291, %v1288
        %v1307 = vpack.c.b16 %v1295, %v1292
        %v1308 = vpack.c.b16 %v1296, %v1293
        %v1309 = vpack.c.b16 %v1297, %v1294
        %vm1318 = vcmask 523264
        %v1320 = vsel %vm1318, %v1300, 0
        %v1323 = vsel %vm1318, %v1303, 0
        %v1326 = vsel %vm1318, %v1306, 0
        %v1329 = vsel %vm1318, %v1309, 0
        %1331 = vmatprep.subr.bf16.mxu0 0
        %1332 = vmatpush1.bf16.msra.mxu0 %v1222
        %1333 = vmatprep.subr.bf16.mxu0 0
        %1334 = vmatpush1.bf16.msra.mxu0 %v1223
        %1335 = vmatprep.subr.bf16.mxu0 0
        %1336 = vmatpush1.bf16.msra.mxu0 %v1224
        %1337 = vmatprep.subr.bf16.mxu0 0
        %1338 = vmatpush1.bf16.msra.mxu0 %v1225
        %1339 = vmatprep.subr.bf16.mxu0 0
        %1340 = vmatpush1.bf16.msra.mxu0 %v1226
        %1341 = vmatprep.subr.bf16.mxu0 0
        %1342 = vmatpush1.bf16.msra.mxu0 %v1227
        %1343 = vmatprep.subr.bf16.mxu0 0
        %1344 = vmatpush1.bf16.msra.mxu0 %v1228
        %1345 = vmatprep.subr.bf16.mxu0 0
        %1346 = vmatpush1.bf16.msra.mxu0 %v1229
        %1347 = vmatprep.subr.bf16.mxu0 0
        %1348 = vmatpush1.bf16.msra.mxu0 %v1230
        %1349 = vmatprep.subr.bf16.mxu0 0
        %1350 = vmatpush1.bf16.msra.mxu0 %v1231
        %1351 = vmatprep.subr.bf16.mxu0 0
        %1352 = vmatpush1.bf16.msra.mxu0 %v1232
        %1353 = vmatprep.subr.bf16.mxu0 0
        %1354 = vmatpush1.bf16.msra.mxu0 %v1233
        %1355 = vmatprep.subr.bf16.mxu0 0
        %1356 = vmatpush1.bf16.msra.mxu0 %v1234
        %1357 = vmatprep.subr.bf16.mxu0 0
        %1358 = vmatpush1.bf16.msra.mxu0 %v1235
        %1359 = vmatprep.subr.bf16.mxu0 0
        %1360 = vmatpush1.bf16.msra.mxu0 %v1236
        %1361 = vmatprep.subr.bf16.mxu0 0
        %1362 = vmatpush1.bf16.msra.mxu0 %v1237
        %1363 = vmatprep.mubr.bf16.mxu0 %v1299
        %1364 = vmatmul.mubr.bf16.gmra.mrb[0].mxu0 %v1298
        %v1365 = vpop.f32.mrb[0].mxu0
        %v1366 = vadd.f32 0.0, %v1365
        %v1367 = vpop.f32.mrb[0].mxu0
        %v1368 = vpop.f32.mrb[0].mxu0
        %v1369 = vadd.f32 0.0, %v1368
        %v1370 = vpop.f32.mrb[0].mxu0
        %1371 = vmatprep.mubr.bf16.mxu0 %v1302
        %1372 = vmatmul.mubr.bf16.gmra.mrb[0].mxu0 %v1301
        %v1373 = vpop.f32.mrb[0].mxu0
        %v1374 = vadd.f32 0.0, %v1373
        %v1375 = vpop.f32.mrb[0].mxu0
        %v1376 = vpop.f32.mrb[0].mxu0
        %v1377 = vadd.f32 0.0, %v1376
        %v1378 = vpop.f32.mrb[0].mxu0
        %1379 = vmatprep.mubr.bf16.mxu0 %v1305
        %1380 = vmatmul.mubr.bf16.gmra.mrb[0].mxu0 %v1304
        %v1381 = vpop.f32.mrb[0].mxu0
        %v1382 = vadd.f32 0.0, %v1381
        %v1383 = vpop.f32.mrb[0].mxu0
        %v1384 = vpop.f32.mrb[0].mxu0
        %v1385 = vadd.f32 0.0, %v1384
        %v1386 = vpop.f32.mrb[0].mxu0
        %1387 = vmatprep.mubr.bf16.mxu0 %v1308
        %1388 = vmatmul.mubr.bf16.gmra.mrb[0].mxu0 %v1307
        %v1389 = vpop.f32.mrb[0].mxu0
        %v1390 = vadd.f32 0.0, %v1389
        %v1391 = vpop.f32.mrb[0].mxu0
        %v1392 = vpop.f32.mrb[0].mxu0
        %v1393 = vadd.f32 0.0, %v1392
        %v1394 = vpop.f32.mrb[0].mxu0
        %1395 = vdwg.mxu0
        %1396 = vmatprep.subr.bf16.mxu0 0
        %1397 = vmatpush1.bf16.msra.mxu0 %v1238
        %1398 = vmatprep.subr.bf16.mxu0 0
        %1399 = vmatpush1.bf16.msra.mxu0 %v1239
        %1400 = vmatprep.subr.bf16.mxu0 0
        %1401 = vmatpush1.bf16.msra.mxu0 %v1240
        %1402 = vmatprep.subr.bf16.mxu0 0
        %1403 = vmatpush1.bf16.msra.mxu0 %v1241
        %1404 = vmatprep.subr.bf16.mxu0 0
        %1405 = vmatpush1.bf16.msra.mxu0 0
        %1406 = vmatprep.subr.bf16.mxu0 0
        %1407 = vmatpush1.bf16.msra.mxu0 0
        %1408 = vmatprep.subr.bf16.mxu0 0
        %1409 = vmatpush1.bf16.msra.mxu0 0
        %1410 = vmatprep.subr.bf16.mxu0 0
        %1411 = vmatpush1.bf16.msra.mxu0 0
        %1412 = vmatprep.subr.bf16.mxu0 0
        %1413 = vmatpush1.bf16.msra.mxu0 0
        %1414 = vmatprep.subr.bf16.mxu0 0
        %1415 = vmatpush1.bf16.msra.mxu0 0
        %1416 = vmatprep.subr.bf16.mxu0 0
        %1417 = vmatpush1.bf16.msra.mxu0 0
        %1418 = vmatprep.subr.bf16.mxu0 0
        %1419 = vmatpush1.bf16.msra.mxu0 0
        %1420 = vmatprep.subr.bf16.mxu0 0
        %1421 = vmatpush1.bf16.msra.mxu0 0
        %1422 = vmatprep.subr.bf16.mxu0 0
        %1423 = vmatpush1.bf16.msra.mxu0 0
        %1424 = vmatprep.subr.bf16.mxu0 0
        %1425 = vmatpush1.bf16.msra.mxu0 0
        %1426 = vmatprep.subr.bf16.mxu0 0
        %1427 = vmatpush1.bf16.msra.mxu0 0
        %1428 = vmatprep.mubr.bf16.mxu0 0
        %1429 = vmatmul.mubr.bf16.gmra.mrb[0].mxu0 %v1320
        %v1430 = vpop.f32.mrb[0].mxu0
        %v1431 = vadd.f32 %v1366, %v1430
        %v1432 = vpop.f32.mrb[0].mxu0
        %v1433 = vpop.f32.mrb[0].mxu0
        %v1434 = vadd.f32 %v1369, %v1433
        %v1435 = vpop.f32.mrb[0].mxu0
        %1436 = vmatprep.mubr.bf16.mxu0 0
        %1437 = vmatmul.mubr.bf16.gmra.mrb[0].mxu0 %v1323
        %v1438 = vpop.f32.mrb[0].mxu0
        %v1439 = vadd.f32 %v1374, %v1438
        %v1440 = vpop.f32.mrb[0].mxu0
        %v1441 = vpop.f32.mrb[0].mxu0
        %v1442 = vadd.f32 %v1377, %v1441
        %v1443 = vpop.f32.mrb[0].mxu0
        %1444 = vmatprep.mubr.bf16.mxu0 0
        %1445 = vmatmul.mubr.bf16.gmra.mrb[0].mxu0 %v1326
        %v1446 = vpop.f32.mrb[0].mxu0
        %v1447 = vadd.f32 %v1382, %v1446
        %v1448 = vpop.f32.mrb[0].mxu0
        %v1449 = vpop.f32.mrb[0].mxu0
        %v1450 = vadd.f32 %v1385, %v1449
        %v1451 = vpop.f32.mrb[0].mxu0
        %1452 = vmatprep.mubr.bf16.mxu0 0
        %1453 = vmatmul.mubr.bf16.gmra.mrb[0].mxu0 %v1329
        %v1454 = vpop.f32.mrb[0].mxu0
        %v1455 = vadd.f32 %v1390, %v1454
        %v1456 = vpop.f32.mrb[0].mxu0
        %v1457 = vpop.f32.mrb[0].mxu0
        %v1458 = vadd.f32 %v1393, %v1457
        %v1459 = vpop.f32.mrb[0].mxu0
        %1460 = vdwg.mxu0
        %v1461 = vld [vmem:[%s7] sm:$0xff]
        %v1462 = vld [vmem:[%s7 + $0x8] sm:$0xff]
        %v1463 = vld [vmem:[%s7 + $0x10] sm:$0xff]
        %v1464 = vld [vmem:[%s7 + $0x18] sm:$0xff]
        %v1465 = vld [vmem:[%s7 + $0x20] sm:$0xff]
        %v1466 = vld [vmem:[%s7 + $0x28] sm:$0xff]
        %v1467 = vld [vmem:[%s7 + $0x30] sm:$0xff]
        %v1468 = vld [vmem:[%s7 + $0x38] sm:$0xff]
        %1470 = vset.pattern.permute.xlu0 0
        %1471 = vperm.xlu0 %1470, %v1461
        %v1472 = vpop.permute.xlu0 %1471
        %1475 = vset.pattern.permute.xlu0 0
        %1476 = vperm.xlu0 %1475, %v1462
        %v1477 = vpop.permute.xlu0 %1476
        %1480 = vset.pattern.permute.xlu0 0
        %1481 = vperm.xlu0 %1480, %v1463
        %v1482 = vpop.permute.xlu0 %1481
        %1485 = vset.pattern.permute.xlu0 0
        %1486 = vperm.xlu0 %1485, %v1464
        %v1487 = vpop.permute.xlu0 %1486
        %1490 = vset.pattern.permute.xlu0 0
        %1491 = vperm.xlu0 %1490, %v1465
        %v1492 = vpop.permute.xlu0 %1491
        %1495 = vset.pattern.permute.xlu0 0
        %1496 = vperm.xlu0 %1495, %v1466
        %v1497 = vpop.permute.xlu0 %1496
        %1500 = vset.pattern.permute.xlu0 0
        %1501 = vperm.xlu0 %1500, %v1467
        %v1502 = vpop.permute.xlu0 %1501
        %1505 = vset.pattern.permute.xlu0 0
        %1506 = vperm.xlu0 %1505, %v1468
        %v1507 = vpop.permute.xlu0 %1506
        %v1509 = vmul.f32 %v1472, %v699
        %v1510 = vmul.f32 %v1477, %v702
        %v1511 = vmul.f32 %v1482, %v707
        %v1512 = vmul.f32 %v1487, %v710
        %v1513 = vmul.f32 %v1492, %v715
        %v1514 = vmul.f32 %v1497, %v718
        %v1515 = vmul.f32 %v1502, %v723
        %v1516 = vmul.f32 %v1507, %v726
        %v1517 = vsel %vm737, %v699, %v1509
        %v1518 = vsel %vm738, %v702, %v1510
        %v1519 = vsel %vm739, %v707, %v1511
        %v1520 = vsel %vm740, %v710, %v1512
        %v1521 = vsel %vm741, %v715, %v1513
        %v1522 = vsel %vm742, %v718, %v1514
        %v1523 = vsel %vm743, %v723, %v1515
        %v1524 = vsel %vm744, %v726, %v1516
        %v1525 = vld [vmem:[%s8] sm:$0xff]
        %v1526 = vld [vmem:[%s8 + $0x8] sm:$0xff]
        %v1527 = vld [vmem:[%s8 + $0x10] sm:$0xff]
        %v1528 = vld [vmem:[%s8 + $0x18] sm:$0xff]
        %v1529 = vld [vmem:[%s8 + $0x20] sm:$0xff]
        %v1530 = vld [vmem:[%s8 + $0x28] sm:$0xff]
        %v1531 = vld [vmem:[%s8 + $0x30] sm:$0xff]
        %v1532 = vld [vmem:[%s8 + $0x38] sm:$0xff]
        %v1533 = vld [vmem:[%s9] sm:$0xff]
        %v1534 = vld [vmem:[%s9 + $0x8] sm:$0xff]
        %v1535 = vld [vmem:[%s9 + $0x10] sm:$0xff]
        %v1536 = vld [vmem:[%s9 + $0x18] sm:$0xff]
        %v1537 = vld [vmem:[%s9 + $0x20] sm:$0xff]
        %v1538 = vld [vmem:[%s9 + $0x28] sm:$0xff]
        %v1539 = vld [vmem:[%s9 + $0x30] sm:$0xff]
        %v1540 = vld [vmem:[%s9 + $0x38] sm:$0xff]
        %v1541 = vmul.f32 %v1517, %v567
        %v1542 = vmul.f32 %v1518, %v567
        %v1543 = vmul.f32 %v1519, %v567
        %v1544 = vmul.f32 %v1520, %v567
        %v1545 = vmul.f32 %v1521, %v567
        %v1546 = vmul.f32 %v1522, %v567
        %v1547 = vmul.f32 %v1523, %v567
        %v1548 = vmul.f32 %v1524, %v567
        %1549 = vadd.xlane.f32.xlu0 %v1541
        %v1550 = vpop.xlane.xlu0 %1549
        %1551 = vadd.xlane.f32.xlu0 %v1542
        %v1552 = vpop.xlane.xlu0 %1551
        %1553 = vadd.xlane.f32.xlu0 %v1543
        %v1554 = vpop.xlane.xlu0 %1553
        %1555 = vadd.xlane.f32.xlu0 %v1544
        %v1556 = vpop.xlane.xlu0 %1555
        %1557 = vadd.xlane.f32.xlu0 %v1545
        %v1558 = vpop.xlane.xlu0 %1557
        %1559 = vadd.xlane.f32.xlu0 %v1546
        %v1560 = vpop.xlane.xlu0 %1559
        %1561 = vadd.xlane.f32.xlu0 %v1547
        %v1562 = vpop.xlane.xlu0 %1561
        %1563 = vadd.xlane.f32.xlu0 %v1548
        %v1564 = vpop.xlane.xlu0 %1563
        %v1565 = vmul.f32 %v1550, 0.03125
        %v1566 = vmul.f32 %v1552, 0.03125
        %v1567 = vmul.f32 %v1554, 0.03125
        %v1568 = vmul.f32 %v1556, 0.03125
        %v1569 = vmul.f32 %v1558, 0.03125
        %v1570 = vmul.f32 %v1560, 0.03125
        %v1571 = vmul.f32 %v1562, 0.03125
        %v1572 = vmul.f32 %v1564, 0.03125
        %v1573 = vsub.f32 %v1517, %v1565
        %v1574 = vsub.f32 %v1518, %v1566
        %v1575 = vsub.f32 %v1519, %v1567
        %v1576 = vsub.f32 %v1520, %v1568
        %v1577 = vsub.f32 %v1521, %v1569
        %v1578 = vsub.f32 %v1522, %v1570
        %v1579 = vsub.f32 %v1523, %v1571
        %v1580 = vsub.f32 %v1524, %v1572
        %v1581 = vmul.f32 %v1573, %v567
        %v1582 = vmul.f32 %v1574, %v567
        %v1583 = vmul.f32 %v1575, %v567
        %v1584 = vmul.f32 %v1576, %v567
        %v1585 = vmul.f32 %v1577, %v567
        %v1586 = vmul.f32 %v1578, %v567
        %v1587 = vmul.f32 %v1579, %v567
        %v1588 = vmul.f32 %v1580, %v567
        %v1589 = vmul.f32 %v1581, %v1581
        %v1590 = vmul.f32 %v1582, %v1582
        %v1591 = vmul.f32 %v1583, %v1583
        %v1592 = vmul.f32 %v1584, %v1584
        %v1593 = vmul.f32 %v1585, %v1585
        %v1594 = vmul.f32 %v1586, %v1586
        %v1595 = vmul.f32 %v1587, %v1587
        %v1596 = vmul.f32 %v1588, %v1588
        %1597 = vadd.xlane.f32.xlu0 %v1589
        %v1598 = vpop.xlane.xlu0 %1597
        %1599 = vadd.xlane.f32.xlu0 %v1590
        %v1600 = vpop.xlane.xlu0 %1599
        %1601 = vadd.xlane.f32.xlu0 %v1591
        %v1602 = vpop.xlane.xlu0 %1601
        %1603 = vadd.xlane.f32.xlu0 %v1592
        %v1604 = vpop.xlane.xlu0 %1603
        %1605 = vadd.xlane.f32.xlu0 %v1593
        %v1606 = vpop.xlane.xlu0 %1605
        %1607 = vadd.xlane.f32.xlu0 %v1594
        %v1608 = vpop.xlane.xlu0 %1607
        %1609 = vadd.xlane.f32.xlu0 %v1595
        %v1610 = vpop.xlane.xlu0 %1609
        %1611 = vadd.xlane.f32.xlu0 %v1596
        %v1612 = vpop.xlane.xlu0 %1611
        %v1613 = vmul.f32 %v1598, 0.03125
        %v1614 = vmul.f32 %v1600, 0.03125
        %v1615 = vmul.f32 %v1602, 0.03125
        %v1616 = vmul.f32 %v1604, 0.03125
        %v1617 = vmul.f32 %v1606, 0.03125
        %v1618 = vmul.f32 %v1608, 0.03125
        %v1619 = vmul.f32 %v1610, 0.03125
        %v1620 = vmul.f32 %v1612, 0.03125
        %v1621 = vadd.f32 %v1613, 1e-05
        %v1622 = vadd.f32 %v1614, 1e-05
        %v1623 = vadd.f32 %v1615, 1e-05
        %v1624 = vadd.f32 %v1616, 1e-05
        %v1625 = vadd.f32 %v1617, 1e-05
        %v1626 = vadd.f32 %v1618, 1e-05
        %v1627 = vadd.f32 %v1619, 1e-05
        %v1628 = vadd.f32 %v1620, 1e-05
        %v1629 = vrsqrt.pop %v1621
        %v1630 = vrsqrt.pop %v1622
        %v1631 = vrsqrt.pop %v1623
        %v1632 = vrsqrt.pop %v1624
        %v1633 = vrsqrt.pop %v1625
        %v1634 = vrsqrt.pop %v1626
        %v1635 = vrsqrt.pop %v1627
        %v1636 = vrsqrt.pop %v1628
        %v1637 = vmul.f32 %v1573, %v1629
        %v1638 = vmul.f32 %v1574, %v1630
        %v1639 = vmul.f32 %v1575, %v1631
        %v1640 = vmul.f32 %v1576, %v1632
        %v1641 = vmul.f32 %v1577, %v1633
        %v1642 = vmul.f32 %v1578, %v1634
        %v1643 = vmul.f32 %v1579, %v1635
        %v1644 = vmul.f32 %v1580, %v1636
        %1646 = vset.pattern.permute.xlu0 0
        %1647 = vperm.xlu0 %1646, %v1525
        %v1648 = vpop.permute.xlu0 %1647
        %1651 = vset.pattern.permute.xlu0 0
        %1652 = vperm.xlu0 %1651, %v1526
        %v1653 = vpop.permute.xlu0 %1652
        %1656 = vset.pattern.permute.xlu0 0
        %1657 = vperm.xlu0 %1656, %v1527
        %v1658 = vpop.permute.xlu0 %1657
        %1661 = vset.pattern.permute.xlu0 0
        %1662 = vperm.xlu0 %1661, %v1528
        %v1663 = vpop.permute.xlu0 %1662
        %1666 = vset.pattern.permute.xlu0 0
        %1667 = vperm.xlu0 %1666, %v1529
        %v1668 = vpop.permute.xlu0 %1667
        %1671 = vset.pattern.permute.xlu0 0
        %1672 = vperm.xlu0 %1671, %v1530
        %v1673 = vpop.permute.xlu0 %1672
        %1676 = vset.pattern.permute.xlu0 0
        %1677 = vperm.xlu0 %1676, %v1531
        %v1678 = vpop.permute.xlu0 %1677
        %1681 = vset.pattern.permute.xlu0 0
        %1682 = vperm.xlu0 %1681, %v1532
        %v1683 = vpop.permute.xlu0 %1682
        %v1685 = vmul.f32 %v1637, %v1648
        %v1686 = vmul.f32 %v1638, %v1653
        %v1687 = vmul.f32 %v1639, %v1658
        %v1688 = vmul.f32 %v1640, %v1663
        %v1689 = vmul.f32 %v1641, %v1668
        %v1690 = vmul.f32 %v1642, %v1673
        %v1691 = vmul.f32 %v1643, %v1678
        %v1692 = vmul.f32 %v1644, %v1683
        %1694 = vset.pattern.permute.xlu0 0
        %1695 = vperm.xlu0 %1694, %v1533
        %v1696 = vpop.permute.xlu0 %1695
        %1699 = vset.pattern.permute.xlu0 0
        %1700 = vperm.xlu0 %1699, %v1534
        %v1701 = vpop.permute.xlu0 %1700
        %1704 = vset.pattern.permute.xlu0 0
        %1705 = vperm.xlu0 %1704, %v1535
        %v1706 = vpop.permute.xlu0 %1705
        %1709 = vset.pattern.permute.xlu0 0
        %1710 = vperm.xlu0 %1709, %v1536
        %v1711 = vpop.permute.xlu0 %1710
        %1714 = vset.pattern.permute.xlu0 0
        %1715 = vperm.xlu0 %1714, %v1537
        %v1716 = vpop.permute.xlu0 %1715
        %1719 = vset.pattern.permute.xlu0 0
        %1720 = vperm.xlu0 %1719, %v1538
        %v1721 = vpop.permute.xlu0 %1720
        %1724 = vset.pattern.permute.xlu0 0
        %1725 = vperm.xlu0 %1724, %v1539
        %v1726 = vpop.permute.xlu0 %1725
        %1729 = vset.pattern.permute.xlu0 0
        %1730 = vperm.xlu0 %1729, %v1540
        %v1731 = vpop.permute.xlu0 %1730
        %v1733 = vadd.f32 %v1685, %v1696
        %v1734 = vadd.f32 %v1686, %v1701
        %v1735 = vadd.f32 %v1687, %v1706
        %v1736 = vadd.f32 %v1688, %v1711
        %v1737 = vadd.f32 %v1689, %v1716
        %v1738 = vadd.f32 %v1690, %v1721
        %v1739 = vadd.f32 %v1691, %v1726
        %v1740 = vadd.f32 %v1692, %v1731
        %s1741 = sld [smem:[#allocation7 + $0x2]]
        %v1742 = vstv %s1741
        %v1743 = vmul.f32 %v1742, %v1733
        %v1744 = vmul.f32 %v1742, %v1734
        %v1745 = vmul.f32 %v1742, %v1735
        %v1746 = vmul.f32 %v1742, %v1736
        %v1747 = vmul.f32 %v1742, %v1737
        %v1748 = vmul.f32 %v1742, %v1738
        %v1749 = vmul.f32 %v1742, %v1739
        %v1750 = vmul.f32 %v1742, %v1740
        %s1751 = sld [smem:[#allocation7]]
        %1752 = vrot.lane.b32.xlu0 %v1733, 2
        %v1753 = vpop.permute.xlu0 %1752
        %1754 = vrot.lane.b32.xlu0 %v1734, 2
        %v1755 = vpop.permute.xlu0 %1754
        %1756 = vrot.lane.b32.xlu0 %v1735, 2
        %v1757 = vpop.permute.xlu0 %1756
        %1758 = vrot.lane.b32.xlu0 %v1736, 2
        %v1759 = vpop.permute.xlu0 %1758
        %1760 = vrot.lane.b32.xlu0 %v1737, 2
        %v1761 = vpop.permute.xlu0 %1760
        %1762 = vrot.lane.b32.xlu0 %v1738, 2
        %v1763 = vpop.permute.xlu0 %1762
        %1764 = vrot.lane.b32.xlu0 %v1739, 2
        %v1765 = vpop.permute.xlu0 %1764
        %1766 = vrot.lane.b32.xlu0 %v1740, 2
        %v1767 = vpop.permute.xlu0 %1766
        %v1768 = vsel %vm1046, %v1753, 0.0
        %v1769 = vsel %vm1046, %v1755, 0.0
        %v1770 = vsel %vm1046, %v1757, 0.0
        %v1771 = vsel %vm1046, %v1759, 0.0
        %v1772 = vsel %vm1046, %v1761, 0.0
        %v1773 = vsel %vm1046, %v1763, 0.0
        %v1774 = vsel %vm1046, %v1765, 0.0
        %v1775 = vsel %vm1046, %v1767, 0.0
        %v1776 = vstv %s1751
        %v1777 = vmul.f32 %v1776, %v1768
        %v1778 = vmul.f32 %v1776, %v1769
        %v1779 = vmul.f32 %v1776, %v1770
        %v1780 = vmul.f32 %v1776, %v1771
        %v1781 = vmul.f32 %v1776, %v1772
        %v1782 = vmul.f32 %v1776, %v1773
        %v1783 = vmul.f32 %v1776, %v1774
        %v1784 = vmul.f32 %v1776, %v1775
        %v1785 = vadd.f32 %v1743, %v1777
        %v1786 = vadd.f32 %v1744, %v1778
        %v1787 = vadd.f32 %v1745, %v1779
        %v1788 = vadd.f32 %v1746, %v1780
        %v1789 = vadd.f32 %v1747, %v1781
        %v1790 = vadd.f32 %v1748, %v1782
        %v1791 = vadd.f32 %v1749, %v1783
        %v1792 = vadd.f32 %v1750, %v1784
        %s1793 = sld [smem:[#allocation7 + $0x1]]
        %1794 = vrot.lane.b32.xlu0 %v1733, 1
        %v1795 = vpop.permute.xlu0 %1794
        %1796 = vrot.lane.b32.xlu0 %v1734, 1
        %v1797 = vpop.permute.xlu0 %1796
        %1798 = vrot.lane.b32.xlu0 %v1735, 1
        %v1799 = vpop.permute.xlu0 %1798
        %1800 = vrot.lane.b32.xlu0 %v1736, 1
        %v1801 = vpop.permute.xlu0 %1800
        %1802 = vrot.lane.b32.xlu0 %v1737, 1
        %v1803 = vpop.permute.xlu0 %1802
        %1804 = vrot.lane.b32.xlu0 %v1738, 1
        %v1805 = vpop.permute.xlu0 %1804
        %1806 = vrot.lane.b32.xlu0 %v1739, 1
        %v1807 = vpop.permute.xlu0 %1806
        %1808 = vrot.lane.b32.xlu0 %v1740, 1
        %v1809 = vpop.permute.xlu0 %1808
        %v1810 = vsel %vm1091, %v1795, 0.0
        %v1811 = vsel %vm1091, %v1797, 0.0
        %v1812 = vsel %vm1091, %v1799, 0.0
        %v1813 = vsel %vm1091, %v1801, 0.0
        %v1814 = vsel %vm1091, %v1803, 0.0
        %v1815 = vsel %vm1091, %v1805, 0.0
        %v1816 = vsel %vm1091, %v1807, 0.0
        %v1817 = vsel %vm1091, %v1809, 0.0
        %v1818 = vstv %s1793
        %v1819 = vmul.f32 %v1818, %v1810
        %v1820 = vmul.f32 %v1818, %v1811
        %v1821 = vmul.f32 %v1818, %v1812
        %v1822 = vmul.f32 %v1818, %v1813
        %v1823 = vmul.f32 %v1818, %v1814
        %v1824 = vmul.f32 %v1818, %v1815
        %v1825 = vmul.f32 %v1818, %v1816
        %v1826 = vmul.f32 %v1818, %v1817
        %v1827 = vadd.f32 %v1785, %v1819
        %v1828 = vadd.f32 %v1786, %v1820
        %v1829 = vadd.f32 %v1787, %v1821
        %v1830 = vadd.f32 %v1788, %v1822
        %v1831 = vadd.f32 %v1789, %v1823
        %v1832 = vadd.f32 %v1790, %v1824
        %v1833 = vadd.f32 %v1791, %v1825
        %v1834 = vadd.f32 %v1792, %v1826
        %1835 = vrot.lane.b32.xlu0 %v1827, 8
        %v1836 = vpop.permute.xlu0 %1835
        %1837 = vrot.lane.b32.xlu0 %v1828, 8
        %v1838 = vpop.permute.xlu0 %1837
        %1839 = vrot.lane.b32.xlu0 %v1829, 8
        %v1840 = vpop.permute.xlu0 %1839
        %1841 = vrot.lane.b32.xlu0 %v1830, 8
        %v1842 = vpop.permute.xlu0 %1841
        %1843 = vrot.lane.b32.xlu0 %v1831, 8
        %v1844 = vpop.permute.xlu0 %1843
        %1845 = vrot.lane.b32.xlu0 %v1832, 8
        %v1846 = vpop.permute.xlu0 %1845
        %1847 = vrot.lane.b32.xlu0 %v1833, 8
        %v1848 = vpop.permute.xlu0 %1847
        %1849 = vrot.lane.b32.xlu0 %v1834, 8
        %v1850 = vpop.permute.xlu0 %1849
        %v1851 = vsel %vm1135, %v1836, 0.0
        %v1852 = vsel %vm1135, %v1838, 0.0
        %v1853 = vsel %vm1135, %v1840, 0.0
        %v1854 = vsel %vm1135, %v1842, 0.0
        %v1855 = vsel %vm1135, %v1844, 0.0
        %v1856 = vsel %vm1135, %v1846, 0.0
        %v1857 = vsel %vm1135, %v1848, 0.0
        %v1858 = vsel %vm1135, %v1850, 0.0
        %1859 = vrot.lane.b32.xlu0 %v1827, 6
        %v1860 = vpop.permute.xlu0 %1859
        %1861 = vrot.lane.b32.xlu0 %v1828, 6
        %v1862 = vpop.permute.xlu0 %1861
        %1863 = vrot.lane.b32.xlu0 %v1829, 6
        %v1864 = vpop.permute.xlu0 %1863
        %1865 = vrot.lane.b32.xlu0 %v1830, 6
        %v1866 = vpop.permute.xlu0 %1865
        %1867 = vrot.lane.b32.xlu0 %v1831, 6
        %v1868 = vpop.permute.xlu0 %1867
        %1869 = vrot.lane.b32.xlu0 %v1832, 6
        %v1870 = vpop.permute.xlu0 %1869
        %1871 = vrot.lane.b32.xlu0 %v1833, 6
        %v1872 = vpop.permute.xlu0 %1871
        %1873 = vrot.lane.b32.xlu0 %v1834, 6
        %v1874 = vpop.permute.xlu0 %1873
        %v1875 = vsel %vm1162, %v1860, 0.0
        %v1876 = vsel %vm1162, %v1862, 0.0
        %v1877 = vsel %vm1162, %v1864, 0.0
        %v1878 = vsel %vm1162, %v1866, 0.0
        %v1879 = vsel %vm1162, %v1868, 0.0
        %v1880 = vsel %vm1162, %v1870, 0.0
        %v1881 = vsel %vm1162, %v1872, 0.0
        %v1882 = vsel %vm1162, %v1874, 0.0
        %1883 = vrot.lane.b32.xlu0 %v1827, 4
        %v1884 = vpop.permute.xlu0 %1883
        %1885 = vrot.lane.b32.xlu0 %v1828, 4
        %v1886 = vpop.permute.xlu0 %1885
        %1887 = vrot.lane.b32.xlu0 %v1829, 4
        %v1888 = vpop.permute.xlu0 %1887
        %1889 = vrot.lane.b32.xlu0 %v1830, 4
        %v1890 = vpop.permute.xlu0 %1889
        %1891 = vrot.lane.b32.xlu0 %v1831, 4
        %v1892 = vpop.permute.xlu0 %1891
        %1893 = vrot.lane.b32.xlu0 %v1832, 4
        %v1894 = vpop.permute.xlu0 %1893
        %1895 = vrot.lane.b32.xlu0 %v1833, 4
        %v1896 = vpop.permute.xlu0 %1895
        %1897 = vrot.lane.b32.xlu0 %v1834, 4
        %v1898 = vpop.permute.xlu0 %1897
        %v1899 = vsel %vm1189, %v1884, 0.0
        %v1900 = vsel %vm1189, %v1886, 0.0
        %v1901 = vsel %vm1189, %v1888, 0.0
        %v1902 = vsel %vm1189, %v1890, 0.0
        %v1903 = vsel %vm1189, %v1892, 0.0
        %v1904 = vsel %vm1189, %v1894, 0.0
        %v1905 = vsel %vm1189, %v1896, 0.0
        %v1906 = vsel %vm1189, %v1898, 0.0
        %1907 = vrot.lane.b32.xlu0 %v1827, 2
        %v1908 = vpop.permute.xlu0 %1907
        %1909 = vrot.lane.b32.xlu0 %v1828, 2
        %v1910 = vpop.permute.xlu0 %1909
        %1911 = vrot.lane.b32.xlu0 %v1829, 2
        %v1912 = vpop.permute.xlu0 %1911
        %1913 = vrot.lane.b32.xlu0 %v1830, 2
        %v1914 = vpop.permute.xlu0 %1913
        %1915 = vrot.lane.b32.xlu0 %v1831, 2
        %v1916 = vpop.permute.xlu0 %1915
        %1917 = vrot.lane.b32.xlu0 %v1832, 2
        %v1918 = vpop.permute.xlu0 %1917
        %1919 = vrot.lane.b32.xlu0 %v1833, 2
        %v1920 = vpop.permute.xlu0 %1919
        %1921 = vrot.lane.b32.xlu0 %v1834, 2
        %v1922 = vpop.permute.xlu0 %1921
        %v1923 = vsel %vm1046, %v1908, 0.0
        %v1924 = vsel %vm1046, %v1910, 0.0
        %v1925 = vsel %vm1046, %v1912, 0.0
        %v1926 = vsel %vm1046, %v1914, 0.0
        %v1927 = vsel %vm1046, %v1916, 0.0
        %v1928 = vsel %vm1046, %v1918, 0.0
        %v1929 = vsel %vm1046, %v1920, 0.0
        %v1930 = vsel %vm1046, %v1922, 0.0
        %v1931 = vpack.c.bf16 %v1852, %v1851
        %v1932 = vpack.c.bf16 %v1854, %v1853
        %v1933 = vpack.c.bf16 %v1856, %v1855
        %v1934 = vpack.c.bf16 %v1858, %v1857
        %v1935 = vpack.c.bf16 %v1876, %v1875
        %v1936 = vpack.c.bf16 %v1878, %v1877
        %v1937 = vpack.c.bf16 %v1880, %v1879
        %v1938 = vpack.c.bf16 %v1882, %v1881
        %v1939 = vpack.c.bf16 %v1900, %v1899
        %v1940 = vpack.c.bf16 %v1902, %v1901
        %v1941 = vpack.c.bf16 %v1904, %v1903
        %v1942 = vpack.c.bf16 %v1906, %v1905
        %v1943 = vpack.c.bf16 %v1924, %v1923
        %v1944 = vpack.c.bf16 %v1926, %v1925
        %v1945 = vpack.c.bf16 %v1928, %v1927
        %v1946 = vpack.c.bf16 %v1930, %v1929
        %v1947 = vpack.c.bf16 %v1828, %v1827
        %v1948 = vpack.c.bf16 %v1830, %v1829
        %v1949 = vpack.c.bf16 %v1832, %v1831
        %v1950 = vpack.c.bf16 %v1834, %v1833
        %v1951 = vld [vmem:[%s11] sm:$0xff]
        %v1952 = vld [vmem:[%s11 + $0x8] sm:$0xf]
        %v1953 = vld [vmem:[%s11 + $0xc] sm:$0xff]
        %v1954 = vld [vmem:[%s11 + $0x14] sm:$0xf]
        %v1955 = vld [vmem:[%s11 + $0x18] sm:$0xff]
        %v1956 = vld [vmem:[%s11 + $0x20] sm:$0xf]
        %v1957 = vld [vmem:[%s11 + $0x24] sm:$0xff]
        %v1958 = vld [vmem:[%s11 + $0x2c] sm:$0xf]
        %v1959 = vld [vmem:[%s11 + $0x30] sm:$0xff]
        %v1960 = vld [vmem:[%s11 + $0x38] sm:$0xf]
        %v1961 = vld [vmem:[%s11 + $0x3c] sm:$0xff]
        %v1962 = vld [vmem:[%s11 + $0x44] sm:$0xf]
        %v1963 = vld [vmem:[%s11 + $0x48] sm:$0xff]
        %v1964 = vld [vmem:[%s11 + $0x50] sm:$0xf]
        %v1965 = vld [vmem:[%s11 + $0x54] sm:$0xff]
        %v1966 = vld [vmem:[%s11 + $0x5c] sm:$0xf]
        %v1983 = vunpack.c.l.b16 %v1951
        %v1984 = vunpack.c.h.b16 %v1951
        %v1985 = vunpack.c.l.b16 %v1952
        %v1986 = vunpack.c.l.b16 %v1953
        %v1987 = vunpack.c.h.b16 %v1953
        %v1988 = vunpack.c.l.b16 %v1954
        %v1989 = vunpack.c.l.b16 %v1955
        %v1990 = vunpack.c.h.b16 %v1955
        %v1991 = vunpack.c.l.b16 %v1956
        %v1992 = vunpack.c.l.b16 %v1957
        %v1993 = vunpack.c.h.b16 %v1957
        %v1994 = vunpack.c.l.b16 %v1958
        %v1995 = vunpack.c.l.b16 %v1959
        %v1996 = vunpack.c.h.b16 %v1959
        %v1997 = vunpack.c.l.b16 %v1960
        %v1998 = vunpack.c.l.b16 %v1961
        %v1999 = vunpack.c.h.b16 %v1961
        %v2000 = vunpack.c.l.b16 %v1962
        %v2001 = vunpack.c.l.b16 %v1963
        %v2002 = vunpack.c.h.b16 %v1963
        %v2003 = vunpack.c.l.b16 %v1964
        %v2004 = vunpack.c.l.b16 %v1965
        %v2005 = vunpack.c.h.b16 %v1965
        %v2006 = vunpack.c.l.b16 %v1966
        %v2007 = vpack.c.b16 %v1986, %v1983
        %v2008 = vpack.c.b16 %v1987, %v1984
        %v2009 = vpack.c.b16 %v1988, %v1985
        %v2010 = vpack.c.b16 %v1992, %v1989
        %v2011 = vpack.c.b16 %v1993, %v1990
        %v2012 = vpack.c.b16 %v1994, %v1991
        %v2013 = vpack.c.b16 %v1998, %v1995
        %v2014 = vpack.c.b16 %v1999, %v1996
        %v2015 = vpack.c.b16 %v2000, %v1997
        %v2016 = vpack.c.b16 %v2004, %v2001
        %v2017 = vpack.c.b16 %v2005, %v2002
        %v2018 = vpack.c.b16 %v2006, %v2003
        %v2028 = vsel %vm1318, %v2009, 0
        %v2031 = vsel %vm1318, %v2012, 0
        %v2034 = vsel %vm1318, %v2015, 0
        %v2037 = vsel %vm1318, %v2018, 0
        %2039 = vmatprep.subr.bf16.mxu0 0
        %2040 = vmatpush1.bf16.msra.mxu0 %v1931
        %2041 = vmatprep.subr.bf16.mxu0 0
        %2042 = vmatpush1.bf16.msra.mxu0 %v1932
        %2043 = vmatprep.subr.bf16.mxu0 0
        %2044 = vmatpush1.bf16.msra.mxu0 %v1933
        %2045 = vmatprep.subr.bf16.mxu0 0
        %2046 = vmatpush1.bf16.msra.mxu0 %v1934
        %2047 = vmatprep.subr.bf16.mxu0 0
        %2048 = vmatpush1.bf16.msra.mxu0 %v1935
        %2049 = vmatprep.subr.bf16.mxu0 0
        %2050 = vmatpush1.bf16.msra.mxu0 %v1936
        %2051 = vmatprep.subr.bf16.mxu0 0
        %2052 = vmatpush1.bf16.msra.mxu0 %v1937
        %2053 = vmatprep.subr.bf16.mxu0 0
        %2054 = vmatpush1.bf16.msra.mxu0 %v1938
        %2055 = vmatprep.subr.bf16.mxu0 0
        %2056 = vmatpush1.bf16.msra.mxu0 %v1939
        %2057 = vmatprep.subr.bf16.mxu0 0
        %2058 = vmatpush1.bf16.msra.mxu0 %v1940
        %2059 = vmatprep.subr.bf16.mxu0 0
        %2060 = vmatpush1.bf16.msra.mxu0 %v1941
        %2061 = vmatprep.subr.bf16.mxu0 0
        %2062 = vmatpush1.bf16.msra.mxu0 %v1942
        %2063 = vmatprep.subr.bf16.mxu0 0
        %2064 = vmatpush1.bf16.msra.mxu0 %v1943
        %2065 = vmatprep.subr.bf16.mxu0 0
        %2066 = vmatpush1.bf16.msra.mxu0 %v1944
        %2067 = vmatprep.subr.bf16.mxu0 0
        %2068 = vmatpush1.bf16.msra.mxu0 %v1945
        %2069 = vmatprep.subr.bf16.mxu0 0
        %2070 = vmatpush1.bf16.msra.mxu0 %v1946
        %2071 = vmatprep.mubr.bf16.mxu0 %v2008
        %2072 = vmatmul.mubr.bf16.gmra.mrb[0].mxu0 %v2007
        %v2073 = vpop.f32.mrb[0].mxu0
        %v2074 = vadd.f32 0.0, %v2073
        %v2075 = vpop.f32.mrb[0].mxu0
        %v2076 = vpop.f32.mrb[0].mxu0
        %v2077 = vadd.f32 0.0, %v2076
        %v2078 = vpop.f32.mrb[0].mxu0
        %2079 = vmatprep.mubr.bf16.mxu0 %v2011
        %2080 = vmatmul.mubr.bf16.gmra.mrb[0].mxu0 %v2010
        %v2081 = vpop.f32.mrb[0].mxu0
        %v2082 = vadd.f32 0.0, %v2081
        %v2083 = vpop.f32.mrb[0].mxu0
        %v2084 = vpop.f32.mrb[0].mxu0
        %v2085 = vadd.f32 0.0, %v2084
        %v2086 = vpop.f32.mrb[0].mxu0
        %2087 = vmatprep.mubr.bf16.mxu0 %v2014
        %2088 = vmatmul.mubr.bf16.gmra.mrb[0].mxu0 %v2013
        %v2089 = vpop.f32.mrb[0].mxu0
        %v2090 = vadd.f32 0.0, %v2089
        %v2091 = vpop.f32.mrb[0].mxu0
        %v2092 = vpop.f32.mrb[0].mxu0
        %v2093 = vadd.f32 0.0, %v2092
        %v2094 = vpop.f32.mrb[0].mxu0
        %2095 = vmatprep.mubr.bf16.mxu0 %v2017
        %2096 = vmatmul.mubr.bf16.gmra.mrb[0].mxu0 %v2016
        %v2097 = vpop.f32.mrb[0].mxu0
        %v2098 = vadd.f32 0.0, %v2097
        %v2099 = vpop.f32.mrb[0].mxu0
        %v2100 = vpop.f32.mrb[0].mxu0
        %v2101 = vadd.f32 0.0, %v2100
        %v2102 = vpop.f32.mrb[0].mxu0
        %2103 = vdwg.mxu0
        %2104 = vmatprep.subr.bf16.mxu0 0
        %2105 = vmatpush1.bf16.msra.mxu0 %v1947
        %2106 = vmatprep.subr.bf16.mxu0 0
        %2107 = vmatpush1.bf16.msra.mxu0 %v1948
        %2108 = vmatprep.subr.bf16.mxu0 0
        %2109 = vmatpush1.bf16.msra.mxu0 %v1949
        %2110 = vmatprep.subr.bf16.mxu0 0
        %2111 = vmatpush1.bf16.msra.mxu0 %v1950
        %2112 = vmatprep.subr.bf16.mxu0 0
        %2113 = vmatpush1.bf16.msra.mxu0 0
        %2114 = vmatprep.subr.bf16.mxu0 0
        %2115 = vmatpush1.bf16.msra.mxu0 0
        %2116 = vmatprep.subr.bf16.mxu0 0
        %2117 = vmatpush1.bf16.msra.mxu0 0
        %2118 = vmatprep.subr.bf16.mxu0 0
        %2119 = vmatpush1.bf16.msra.mxu0 0
        %2120 = vmatprep.subr.bf16.mxu0 0
        %2121 = vmatpush1.bf16.msra.mxu0 0
        %2122 = vmatprep.subr.bf16.mxu0 0
        %2123 = vmatpush1.bf16.msra.mxu0 0
        %2124 = vmatprep.subr.bf16.mxu0 0
        %2125 = vmatpush1.bf16.msra.mxu0 0
        %2126 = vmatprep.subr.bf16.mxu0 0
        %2127 = vmatpush1.bf16.msra.mxu0 0
        %2128 = vmatprep.subr.bf16.mxu0 0
        %2129 = vmatpush1.bf16.msra.mxu0 0
        %2130 = vmatprep.subr.bf16.mxu0 0
        %2131 = vmatpush1.bf16.msra.mxu0 0
        %2132 = vmatprep.subr.bf16.mxu0 0
        %2133 = vmatpush1.bf16.msra.mxu0 0
        %2134 = vmatprep.subr.bf16.mxu0 0
        %2135 = vmatpush1.bf16.msra.mxu0 0
        %2136 = vmatprep.mubr.bf16.mxu0 0
        %2137 = vmatmul.mubr.bf16.gmra.mrb[0].mxu0 %v2028
        %v2138 = vpop.f32.mrb[0].mxu0
        %v2139 = vadd.f32 %v2074, %v2138
        %v2140 = vpop.f32.mrb[0].mxu0
        %v2141 = vpop.f32.mrb[0].mxu0
        %v2142 = vadd.f32 %v2077, %v2141
        %v2143 = vpop.f32.mrb[0].mxu0
        %2144 = vmatprep.mubr.bf16.mxu0 0
        %2145 = vmatmul.mubr.bf16.gmra.mrb[0].mxu0 %v2031
        %v2146 = vpop.f32.mrb[0].mxu0
        %v2147 = vadd.f32 %v2082, %v2146
        %v2148 = vpop.f32.mrb[0].mxu0
        %v2149 = vpop.f32.mrb[0].mxu0
        %v2150 = vadd.f32 %v2085, %v2149
        %v2151 = vpop.f32.mrb[0].mxu0
        %2152 = vmatprep.mubr.bf16.mxu0 0
        %2153 = vmatmul.mubr.bf16.gmra.mrb[0].mxu0 %v2034
        %v2154 = vpop.f32.mrb[0].mxu0
        %v2155 = vadd.f32 %v2090, %v2154
        %v2156 = vpop.f32.mrb[0].mxu0
        %v2157 = vpop.f32.mrb[0].mxu0
        %v2158 = vadd.f32 %v2093, %v2157
        %v2159 = vpop.f32.mrb[0].mxu0
        %2160 = vmatprep.mubr.bf16.mxu0 0
        %2161 = vmatmul.mubr.bf16.gmra.mrb[0].mxu0 %v2037
        %v2162 = vpop.f32.mrb[0].mxu0
        %v2163 = vadd.f32 %v2098, %v2162
        %v2164 = vpop.f32.mrb[0].mxu0
        %v2165 = vpop.f32.mrb[0].mxu0
        %v2166 = vadd.f32 %v2101, %v2165
        %v2167 = vpop.f32.mrb[0].mxu0
        %2168 = vdwg.mxu0
        %v2169 = vxor.u32 %v2139, 2147483648
        %v2170 = vxor.u32 %v2142, 2147483648
        %v2171 = vxor.u32 %v2147, 2147483648
        %v2172 = vxor.u32 %v2150, 2147483648
        %v2173 = vxor.u32 %v2155, 2147483648
        %v2174 = vxor.u32 %v2158, 2147483648
        %v2175 = vxor.u32 %v2163, 2147483648
        %v2176 = vxor.u32 %v2166, 2147483648
        %v2177 = vmul.f32 %v2169, 1.442695
        %v2178 = vpow.pop %v2177
        %v2179 = vmul.f32 %v2170, 1.442695
        %v2180 = vpow.pop %v2179
        %v2181 = vmul.f32 %v2171, 1.442695
        %v2182 = vpow.pop %v2181
        %v2183 = vmul.f32 %v2172, 1.442695
        %v2184 = vpow.pop %v2183
        %v2185 = vmul.f32 %v2173, 1.442695
        %v2186 = vpow.pop %v2185
        %v2187 = vmul.f32 %v2174, 1.442695
        %v2188 = vpow.pop %v2187
        %v2189 = vmul.f32 %v2175, 1.442695
        %v2190 = vpow.pop %v2189
        %v2191 = vmul.f32 %v2176, 1.442695
        %v2192 = vpow.pop %v2191
        %v2193 = vadd.f32 %v2178, 1.0
        %v2194 = vadd.f32 %v2180, 1.0
        %v2195 = vadd.f32 %v2182, 1.0
        %v2196 = vadd.f32 %v2184, 1.0
        %v2197 = vadd.f32 %v2186, 1.0
        %v2198 = vadd.f32 %v2188, 1.0
        %v2199 = vadd.f32 %v2190, 1.0
        %v2200 = vadd.f32 %v2192, 1.0
        %v2201 = vrcp.pop %v2193
        %v2202 = vmul.f32 1.0, %v2201
        %v2203 = vrcp.pop %v2194
        %v2204 = vmul.f32 1.0, %v2203
        %v2205 = vrcp.pop %v2195
        %v2206 = vmul.f32 1.0, %v2205
        %v2207 = vrcp.pop %v2196
        %v2208 = vmul.f32 1.0, %v2207
        %v2209 = vrcp.pop %v2197
        %v2210 = vmul.f32 1.0, %v2209
        %v2211 = vrcp.pop %v2198
        %v2212 = vmul.f32 1.0, %v2211
        %v2213 = vrcp.pop %v2199
        %v2214 = vmul.f32 1.0, %v2213
        %v2215 = vrcp.pop %v2200
        %v2216 = vmul.f32 1.0, %v2215
        %v2217 = vmul.f32 %v1431, %v2202
        %v2218 = vmul.f32 %v1434, %v2204
        %v2219 = vmul.f32 %v1439, %v2206
        %v2220 = vmul.f32 %v1442, %v2208
        %v2221 = vmul.f32 %v1447, %v2210
        %v2222 = vmul.f32 %v1450, %v2212
        %v2223 = vmul.f32 %v1455, %v2214
        %v2224 = vmul.f32 %v1458, %v2216
        %v2225 = vld [vmem:[%s12] sm:$0xff]
        %v2226 = vld [vmem:[%s12 + $0x8] sm:$0xff]
        %v2227 = vld [vmem:[%s12 + $0x10] sm:$0xff]
        %v2228 = vld [vmem:[%s12 + $0x18] sm:$0xff]
        %v2229 = vld [vmem:[%s12 + $0x20] sm:$0xff]
        %v2230 = vld [vmem:[%s12 + $0x28] sm:$0xff]
        %v2231 = vld [vmem:[%s12 + $0x30] sm:$0xff]
        %v2232 = vld [vmem:[%s12 + $0x38] sm:$0xff]
        %vm2233 = vcmp.gt.f32.partialorder %v2217, 0.0
        %vm2234 = vcmp.gt.f32.partialorder %v2218, 0.0
        %vm2235 = vcmp.gt.f32.partialorder %v2219, 0.0
        %vm2236 = vcmp.gt.f32.partialorder %v2220, 0.0
        %vm2237 = vcmp.gt.f32.partialorder %v2221, 0.0
        %vm2238 = vcmp.gt.f32.partialorder %v2222, 0.0
        %vm2239 = vcmp.gt.f32.partialorder %v2223, 0.0
        %vm2240 = vcmp.gt.f32.partialorder %v2224, 0.0
        %2242 = vset.pattern.permute.xlu0 0
        %2243 = vperm.xlu0 %2242, %v2225
        %v2244 = vpop.permute.xlu0 %2243
        %2247 = vset.pattern.permute.xlu0 0
        %2248 = vperm.xlu0 %2247, %v2226
        %v2249 = vpop.permute.xlu0 %2248
        %2252 = vset.pattern.permute.xlu0 0
        %2253 = vperm.xlu0 %2252, %v2227
        %v2254 = vpop.permute.xlu0 %2253
        %2257 = vset.pattern.permute.xlu0 0
        %2258 = vperm.xlu0 %2257, %v2228
        %v2259 = vpop.permute.xlu0 %2258
        %2262 = vset.pattern.permute.xlu0 0
        %2263 = vperm.xlu0 %2262, %v2229
        %v2264 = vpop.permute.xlu0 %2263
        %2267 = vset.pattern.permute.xlu0 0
        %2268 = vperm.xlu0 %2267, %v2230
        %v2269 = vpop.permute.xlu0 %2268
        %2272 = vset.pattern.permute.xlu0 0
        %2273 = vperm.xlu0 %2272, %v2231
        %v2274 = vpop.permute.xlu0 %2273
        %2277 = vset.pattern.permute.xlu0 0
        %2278 = vperm.xlu0 %2277, %v2232
        %v2279 = vpop.permute.xlu0 %2278
        %v2281 = vmul.f32 %v2244, %v2217
        %v2282 = vmul.f32 %v2249, %v2218
        %v2283 = vmul.f32 %v2254, %v2219
        %v2284 = vmul.f32 %v2259, %v2220
        %v2285 = vmul.f32 %v2264, %v2221
        %v2286 = vmul.f32 %v2269, %v2222
        %v2287 = vmul.f32 %v2274, %v2223
        %v2288 = vmul.f32 %v2279, %v2224
        %v2289 = vsel %vm2233, %v2217, %v2281
        %v2290 = vsel %vm2234, %v2218, %v2282
        %v2291 = vsel %vm2235, %v2219, %v2283
        %v2292 = vsel %vm2236, %v2220, %v2284
        %v2293 = vsel %vm2237, %v2221, %v2285
        %v2294 = vsel %vm2238, %v2222, %v2286
        %v2295 = vsel %vm2239, %v2223, %v2287
        %v2296 = vsel %vm2240, %v2224, %v2288
        %v2297 = vld [vmem:[%s13] sm:$0xff]
        %v2298 = vld [vmem:[%s13 + $0x8] sm:$0xff]
        %v2299 = vld [vmem:[%s13 + $0x10] sm:$0xff]
        %v2300 = vld [vmem:[%s13 + $0x18] sm:$0xff]
        %v2301 = vld [vmem:[%s13 + $0x20] sm:$0xff]
        %v2302 = vld [vmem:[%s13 + $0x28] sm:$0xff]
        %v2303 = vld [vmem:[%s13 + $0x30] sm:$0xff]
        %v2304 = vld [vmem:[%s13 + $0x38] sm:$0xff]
        %v2305 = vld [vmem:[%s14] sm:$0xff]
        %v2306 = vld [vmem:[%s14 + $0x8] sm:$0xff]
        %v2307 = vld [vmem:[%s14 + $0x10] sm:$0xff]
        %v2308 = vld [vmem:[%s14 + $0x18] sm:$0xff]
        %v2309 = vld [vmem:[%s14 + $0x20] sm:$0xff]
        %v2310 = vld [vmem:[%s14 + $0x28] sm:$0xff]
        %v2311 = vld [vmem:[%s14 + $0x30] sm:$0xff]
        %v2312 = vld [vmem:[%s14 + $0x38] sm:$0xff]
        %v2313 = vmul.f32 %v2289, %v567
        %v2314 = vmul.f32 %v2290, %v567
        %v2315 = vmul.f32 %v2291, %v567
        %v2316 = vmul.f32 %v2292, %v567
        %v2317 = vmul.f32 %v2293, %v567
        %v2318 = vmul.f32 %v2294, %v567
        %v2319 = vmul.f32 %v2295, %v567
        %v2320 = vmul.f32 %v2296, %v567
        %2321 = vadd.xlane.f32.xlu0 %v2313
        %v2322 = vpop.xlane.xlu0 %2321
        %2323 = vadd.xlane.f32.xlu0 %v2314
        %v2324 = vpop.xlane.xlu0 %2323
        %2325 = vadd.xlane.f32.xlu0 %v2315
        %v2326 = vpop.xlane.xlu0 %2325
        %2327 = vadd.xlane.f32.xlu0 %v2316
        %v2328 = vpop.xlane.xlu0 %2327
        %2329 = vadd.xlane.f32.xlu0 %v2317
        %v2330 = vpop.xlane.xlu0 %2329
        %2331 = vadd.xlane.f32.xlu0 %v2318
        %v2332 = vpop.xlane.xlu0 %2331
        %2333 = vadd.xlane.f32.xlu0 %v2319
        %v2334 = vpop.xlane.xlu0 %2333
        %2335 = vadd.xlane.f32.xlu0 %v2320
        %v2336 = vpop.xlane.xlu0 %2335
        %v2337 = vmul.f32 %v2322, 0.03125
        %v2338 = vmul.f32 %v2324, 0.03125
        %v2339 = vmul.f32 %v2326, 0.03125
        %v2340 = vmul.f32 %v2328, 0.03125
        %v2341 = vmul.f32 %v2330, 0.03125
        %v2342 = vmul.f32 %v2332, 0.03125
        %v2343 = vmul.f32 %v2334, 0.03125
        %v2344 = vmul.f32 %v2336, 0.03125
        %v2345 = vsub.f32 %v2289, %v2337
        %v2346 = vsub.f32 %v2290, %v2338
        %v2347 = vsub.f32 %v2291, %v2339
        %v2348 = vsub.f32 %v2292, %v2340
        %v2349 = vsub.f32 %v2293, %v2341
        %v2350 = vsub.f32 %v2294, %v2342
        %v2351 = vsub.f32 %v2295, %v2343
        %v2352 = vsub.f32 %v2296, %v2344
        %v2353 = vmul.f32 %v2345, %v567
        %v2354 = vmul.f32 %v2346, %v567
        %v2355 = vmul.f32 %v2347, %v567
        %v2356 = vmul.f32 %v2348, %v567
        %v2357 = vmul.f32 %v2349, %v567
        %v2358 = vmul.f32 %v2350, %v567
        %v2359 = vmul.f32 %v2351, %v567
        %v2360 = vmul.f32 %v2352, %v567
        %v2361 = vmul.f32 %v2353, %v2353
        %v2362 = vmul.f32 %v2354, %v2354
        %v2363 = vmul.f32 %v2355, %v2355
        %v2364 = vmul.f32 %v2356, %v2356
        %v2365 = vmul.f32 %v2357, %v2357
        %v2366 = vmul.f32 %v2358, %v2358
        %v2367 = vmul.f32 %v2359, %v2359
        %v2368 = vmul.f32 %v2360, %v2360
        %2369 = vadd.xlane.f32.xlu0 %v2361
        %v2370 = vpop.xlane.xlu0 %2369
        %2371 = vadd.xlane.f32.xlu0 %v2362
        %v2372 = vpop.xlane.xlu0 %2371
        %2373 = vadd.xlane.f32.xlu0 %v2363
        %v2374 = vpop.xlane.xlu0 %2373
        %2375 = vadd.xlane.f32.xlu0 %v2364
        %v2376 = vpop.xlane.xlu0 %2375
        %2377 = vadd.xlane.f32.xlu0 %v2365
        %v2378 = vpop.xlane.xlu0 %2377
        %2379 = vadd.xlane.f32.xlu0 %v2366
        %v2380 = vpop.xlane.xlu0 %2379
        %2381 = vadd.xlane.f32.xlu0 %v2367
        %v2382 = vpop.xlane.xlu0 %2381
        %2383 = vadd.xlane.f32.xlu0 %v2368
        %v2384 = vpop.xlane.xlu0 %2383
        %v2385 = vmul.f32 %v2370, 0.03125
        %v2386 = vmul.f32 %v2372, 0.03125
        %v2387 = vmul.f32 %v2374, 0.03125
        %v2388 = vmul.f32 %v2376, 0.03125
        %v2389 = vmul.f32 %v2378, 0.03125
        %v2390 = vmul.f32 %v2380, 0.03125
        %v2391 = vmul.f32 %v2382, 0.03125
        %v2392 = vmul.f32 %v2384, 0.03125
        %v2393 = vadd.f32 %v2385, 1e-05
        %v2394 = vadd.f32 %v2386, 1e-05
        %v2395 = vadd.f32 %v2387, 1e-05
        %v2396 = vadd.f32 %v2388, 1e-05
        %v2397 = vadd.f32 %v2389, 1e-05
        %v2398 = vadd.f32 %v2390, 1e-05
        %v2399 = vadd.f32 %v2391, 1e-05
        %v2400 = vadd.f32 %v2392, 1e-05
        %v2401 = vrsqrt.pop %v2393
        %v2402 = vrsqrt.pop %v2394
        %v2403 = vrsqrt.pop %v2395
        %v2404 = vrsqrt.pop %v2396
        %v2405 = vrsqrt.pop %v2397
        %v2406 = vrsqrt.pop %v2398
        %v2407 = vrsqrt.pop %v2399
        %v2408 = vrsqrt.pop %v2400
        %v2409 = vmul.f32 %v2345, %v2401
        %v2410 = vmul.f32 %v2346, %v2402
        %v2411 = vmul.f32 %v2347, %v2403
        %v2412 = vmul.f32 %v2348, %v2404
        %v2413 = vmul.f32 %v2349, %v2405
        %v2414 = vmul.f32 %v2350, %v2406
        %v2415 = vmul.f32 %v2351, %v2407
        %v2416 = vmul.f32 %v2352, %v2408
        %2418 = vset.pattern.permute.xlu0 0
        %2419 = vperm.xlu0 %2418, %v2297
        %v2420 = vpop.permute.xlu0 %2419
        %2423 = vset.pattern.permute.xlu0 0
        %2424 = vperm.xlu0 %2423, %v2298
        %v2425 = vpop.permute.xlu0 %2424
        %2428 = vset.pattern.permute.xlu0 0
        %2429 = vperm.xlu0 %2428, %v2299
        %v2430 = vpop.permute.xlu0 %2429
        %2433 = vset.pattern.permute.xlu0 0
        %2434 = vperm.xlu0 %2433, %v2300
        %v2435 = vpop.permute.xlu0 %2434
        %2438 = vset.pattern.permute.xlu0 0
        %2439 = vperm.xlu0 %2438, %v2301
        %v2440 = vpop.permute.xlu0 %2439
        %2443 = vset.pattern.permute.xlu0 0
        %2444 = vperm.xlu0 %2443, %v2302
        %v2445 = vpop.permute.xlu0 %2444
        %2448 = vset.pattern.permute.xlu0 0
        %2449 = vperm.xlu0 %2448, %v2303
        %v2450 = vpop.permute.xlu0 %2449
        %2453 = vset.pattern.permute.xlu0 0
        %2454 = vperm.xlu0 %2453, %v2304
        %v2455 = vpop.permute.xlu0 %2454
        %v2457 = vmul.f32 %v2409, %v2420
        %v2458 = vmul.f32 %v2410, %v2425
        %v2459 = vmul.f32 %v2411, %v2430
        %v2460 = vmul.f32 %v2412, %v2435
        %v2461 = vmul.f32 %v2413, %v2440
        %v2462 = vmul.f32 %v2414, %v2445
        %v2463 = vmul.f32 %v2415, %v2450
        %v2464 = vmul.f32 %v2416, %v2455
        %2466 = vset.pattern.permute.xlu0 0
        %2467 = vperm.xlu0 %2466, %v2305
        %v2468 = vpop.permute.xlu0 %2467
        %2471 = vset.pattern.permute.xlu0 0
        %2472 = vperm.xlu0 %2471, %v2306
        %v2473 = vpop.permute.xlu0 %2472
        %2476 = vset.pattern.permute.xlu0 0
        %2477 = vperm.xlu0 %2476, %v2307
        %v2478 = vpop.permute.xlu0 %2477
        %2481 = vset.pattern.permute.xlu0 0
        %2482 = vperm.xlu0 %2481, %v2308
        %v2483 = vpop.permute.xlu0 %2482
        %2486 = vset.pattern.permute.xlu0 0
        %2487 = vperm.xlu0 %2486, %v2309
        %v2488 = vpop.permute.xlu0 %2487
        %2491 = vset.pattern.permute.xlu0 0
        %2492 = vperm.xlu0 %2491, %v2310
        %v2493 = vpop.permute.xlu0 %2492
        %2496 = vset.pattern.permute.xlu0 0
        %2497 = vperm.xlu0 %2496, %v2311
        %v2498 = vpop.permute.xlu0 %2497
        %2501 = vset.pattern.permute.xlu0 0
        %2502 = vperm.xlu0 %2501, %v2312
        %v2503 = vpop.permute.xlu0 %2502
        %v2505 = vadd.f32 %v2457, %v2468
        %v2506 = vadd.f32 %v2458, %v2473
        %v2507 = vadd.f32 %v2459, %v2478
        %v2508 = vadd.f32 %v2460, %v2483
        %v2509 = vadd.f32 %v2461, %v2488
        %v2510 = vadd.f32 %v2462, %v2493
        %v2511 = vadd.f32 %v2463, %v2498
        %v2512 = vadd.f32 %v2464, %v2503
        %v2513 = vld [vmem:[%s15] sm:$0xf]
        %v2514 = vld [vmem:[%s15 + $0x4] sm:$0xf]
        %v2515 = vld [vmem:[%s15 + $0x8] sm:$0xf]
        %v2516 = vld [vmem:[%s15 + $0xc] sm:$0xf]
        %v2517 = vld [vmem:[%s15 + $0x10] sm:$0xf]
        %v2518 = vld [vmem:[%s15 + $0x14] sm:$0xf]
        %v2519 = vld [vmem:[%s15 + $0x18] sm:$0xf]
        %v2520 = vld [vmem:[%s15 + $0x1c] sm:$0xf]
        %v2521 = vld [vmem:[%s15 + $0x20] sm:$0xf]
        %v2522 = vld [vmem:[%s15 + $0x24] sm:$0xf]
        %v2523 = vld [vmem:[%s15 + $0x28] sm:$0xf]
        %v2524 = vld [vmem:[%s15 + $0x2c] sm:$0xf]
        %v2525 = vld [vmem:[%s15 + $0x30] sm:$0xf]
        %v2526 = vld [vmem:[%s15 + $0x34] sm:$0xf]
        %v2527 = vld [vmem:[%s15 + $0x38] sm:$0xf]
        %v2528 = vld [vmem:[%s15 + $0x3c] sm:$0xf]
        %v2529 = vld [vmem:[%s15 + $0x40] sm:$0xf]
        %v2530 = vld [vmem:[%s15 + $0x44] sm:$0xf]
        %v2531 = vld [vmem:[%s15 + $0x48] sm:$0xf]
        %v2532 = vld [vmem:[%s15 + $0x4c] sm:$0xf]
        %v2533 = vld [vmem:[%s15 + $0x50] sm:$0xf]
        %v2534 = vld [vmem:[%s15 + $0x54] sm:$0xf]
        %v2535 = vld [vmem:[%s15 + $0x58] sm:$0xf]
        %v2536 = vld [vmem:[%s15 + $0x5c] sm:$0xf]
        %v2537 = vld [vmem:[%s15 + $0x60] sm:$0xf]
        %v2538 = vld [vmem:[%s15 + $0x64] sm:$0xf]
        %v2539 = vld [vmem:[%s15 + $0x68] sm:$0xf]
        %v2540 = vld [vmem:[%s15 + $0x6c] sm:$0xf]
        %v2541 = vld [vmem:[%s15 + $0x70] sm:$0xf]
        %v2542 = vld [vmem:[%s15 + $0x74] sm:$0xf]
        %v2543 = vld [vmem:[%s15 + $0x78] sm:$0xf]
        %v2544 = vld [vmem:[%s15 + $0x7c] sm:$0xf]
        %v2545 = vpack.c.bf16 %v2506, %v2505
        %v2546 = vpack.c.bf16 %v2508, %v2507
        %v2547 = vpack.c.bf16 %v2510, %v2509
        %v2548 = vpack.c.bf16 %v2512, %v2511
        %v2581 = vunpack.c.l.b16 %v2513
        %v2582 = vunpack.c.l.b16 %v2514
        %v2583 = vunpack.c.l.b16 %v2515
        %v2584 = vunpack.c.l.b16 %v2516
        %v2585 = vunpack.c.l.b16 %v2517
        %v2586 = vunpack.c.l.b16 %v2518
        %v2587 = vunpack.c.l.b16 %v2519
        %v2588 = vunpack.c.l.b16 %v2520
        %v2589 = vunpack.c.l.b16 %v2521
        %v2590 = vunpack.c.l.b16 %v2522
        %v2591 = vunpack.c.l.b16 %v2523
        %v2592 = vunpack.c.l.b16 %v2524
        %v2593 = vunpack.c.l.b16 %v2525
        %v2594 = vunpack.c.l.b16 %v2526
        %v2595 = vunpack.c.l.b16 %v2527
        %v2596 = vunpack.c.l.b16 %v2528
        %v2597 = vunpack.c.l.b16 %v2529
        %v2598 = vunpack.c.l.b16 %v2530
        %v2599 = vunpack.c.l.b16 %v2531
        %v2600 = vunpack.c.l.b16 %v2532
        %v2601 = vunpack.c.l.b16 %v2533
        %v2602 = vunpack.c.l.b16 %v2534
        %v2603 = vunpack.c.l.b16 %v2535
        %v2604 = vunpack.c.l.b16 %v2536
        %v2605 = vunpack.c.l.b16 %v2537
        %v2606 = vunpack.c.l.b16 %v2538
        %v2607 = vunpack.c.l.b16 %v2539
        %v2608 = vunpack.c.l.b16 %v2540
        %v2609 = vunpack.c.l.b16 %v2541
        %v2610 = vunpack.c.l.b16 %v2542
        %v2611 = vunpack.c.l.b16 %v2543
        %v2612 = vunpack.c.l.b16 %v2544
        %v2613 = vpack.c.b16 %v2582, %v2581
        %v2614 = vpack.c.b16 %v2584, %v2583
        %v2615 = vpack.c.b16 %v2586, %v2585
        %v2616 = vpack.c.b16 %v2588, %v2587
        %v2617 = vpack.c.b16 %v2590, %v2589
        %v2618 = vpack.c.b16 %v2592, %v2591
        %v2619 = vpack.c.b16 %v2594, %v2593
        %v2620 = vpack.c.b16 %v2596, %v2595
        %v2621 = vpack.c.b16 %v2598, %v2597
        %v2622 = vpack.c.b16 %v2600, %v2599
        %v2623 = vpack.c.b16 %v2602, %v2601
        %v2624 = vpack.c.b16 %v2604, %v2603
        %v2625 = vpack.c.b16 %v2606, %v2605
        %v2626 = vpack.c.b16 %v2608, %v2607
        %v2627 = vpack.c.b16 %v2610, %v2609
        %v2628 = vpack.c.b16 %v2612, %v2611
        %v2630 = vsel %vm1318, %v2613, 0
        %v2633 = vsel %vm1318, %v2614, 0
        %v2636 = vsel %vm1318, %v2615, 0
        %v2639 = vsel %vm1318, %v2616, 0
        %v2642 = vsel %vm1318, %v2617, 0
        %v2645 = vsel %vm1318, %v2618, 0
        %v2648 = vsel %vm1318, %v2619, 0
        %v2651 = vsel %vm1318, %v2620, 0
        %v2654 = vsel %vm1318, %v2621, 0
        %v2657 = vsel %vm1318, %v2622, 0
        %v2660 = vsel %vm1318, %v2623, 0
        %v2663 = vsel %vm1318, %v2624, 0
        %v2666 = vsel %vm1318, %v2625, 0
        %v2669 = vsel %vm1318, %v2626, 0
        %v2672 = vsel %vm1318, %v2627, 0
        %v2675 = vsel %vm1318, %v2628, 0
        %2677 = vmatprep.subr.bf16.mxu0 0
        %2678 = vmatpush1.bf16.msra.mxu0 %v2545
        %2679 = vmatprep.subr.bf16.mxu0 0
        %2680 = vmatpush1.bf16.msra.mxu0 %v2546
        %2681 = vmatprep.subr.bf16.mxu0 0
        %2682 = vmatpush1.bf16.msra.mxu0 %v2547
        %2683 = vmatprep.subr.bf16.mxu0 0
        %2684 = vmatpush1.bf16.msra.mxu0 %v2548
        %2685 = vmatprep.subr.bf16.mxu0 0
        %2686 = vmatpush1.bf16.msra.mxu0 0
        %2687 = vmatprep.subr.bf16.mxu0 0
        %2688 = vmatpush1.bf16.msra.mxu0 0
        %2689 = vmatprep.subr.bf16.mxu0 0
        %2690 = vmatpush1.bf16.msra.mxu0 0
        %2691 = vmatprep.subr.bf16.mxu0 0
        %2692 = vmatpush1.bf16.msra.mxu0 0
        %2693 = vmatprep.subr.bf16.mxu0 0
        %2694 = vmatpush1.bf16.msra.mxu0 0
        %2695 = vmatprep.subr.bf16.mxu0 0
        %2696 = vmatpush1.bf16.msra.mxu0 0
        %2697 = vmatprep.subr.bf16.mxu0 0
        %2698 = vmatpush1.bf16.msra.mxu0 0
        %2699 = vmatprep.subr.bf16.mxu0 0
        %2700 = vmatpush1.bf16.msra.mxu0 0
        %2701 = vmatprep.subr.bf16.mxu0 0
        %2702 = vmatpush1.bf16.msra.mxu0 0
        %2703 = vmatprep.subr.bf16.mxu0 0
        %2704 = vmatpush1.bf16.msra.mxu0 0
        %2705 = vmatprep.subr.bf16.mxu0 0
        %2706 = vmatpush1.bf16.msra.mxu0 0
        %2707 = vmatprep.subr.bf16.mxu0 0
        %2708 = vmatpush1.bf16.msra.mxu0 0
        %2709 = vmatprep.mubr.bf16.mxu0 0
        %2710 = vmatmul.mubr.bf16.gmra.mrb[0].mxu0 %v2630
        %v2711 = vpop.f32.mrb[0].mxu0
        %v2712 = vadd.f32 %v568, %v2711
        %v2713 = vpop.f32.mrb[0].mxu0
        %v2714 = vpop.f32.mrb[0].mxu0
        %v2715 = vadd.f32 %v569, %v2714
        %v2716 = vpop.f32.mrb[0].mxu0
        %2717 = vmatprep.mubr.bf16.mxu0 0
        %2718 = vmatmul.mubr.bf16.gmra.mrb[0].mxu0 %v2633
        %v2719 = vpop.f32.mrb[0].mxu0
        %v2720 = vadd.f32 %v570, %v2719
        %v2721 = vpop.f32.mrb[0].mxu0
        %v2722 = vpop.f32.mrb[0].mxu0
        %v2723 = vadd.f32 %v571, %v2722
        %v2724 = vpop.f32.mrb[0].mxu0
        %2725 = vmatprep.mubr.bf16.mxu0 0
        %2726 = vmatmul.mubr.bf16.gmra.mrb[0].mxu0 %v2636
        %v2727 = vpop.f32.mrb[0].mxu0
        %v2728 = vadd.f32 %v572, %v2727
        %v2729 = vpop.f32.mrb[0].mxu0
        %v2730 = vpop.f32.mrb[0].mxu0
        %v2731 = vadd.f32 %v573, %v2730
        %v2732 = vpop.f32.mrb[0].mxu0
        %2733 = vmatprep.mubr.bf16.mxu0 0
        %2734 = vmatmul.mubr.bf16.gmra.mrb[0].mxu0 %v2639
        %v2735 = vpop.f32.mrb[0].mxu0
        %v2736 = vadd.f32 %v574, %v2735
        %v2737 = vpop.f32.mrb[0].mxu0
        %v2738 = vpop.f32.mrb[0].mxu0
        %v2739 = vadd.f32 %v575, %v2738
        %v2740 = vpop.f32.mrb[0].mxu0
        %2741 = vmatprep.mubr.bf16.mxu0 0
        %2742 = vmatmul.mubr.bf16.gmra.mrb[0].mxu0 %v2642
        %v2743 = vpop.f32.mrb[0].mxu0
        %v2744 = vadd.f32 %v576, %v2743
        %v2745 = vpop.f32.mrb[0].mxu0
        %v2746 = vpop.f32.mrb[0].mxu0
        %v2747 = vadd.f32 %v577, %v2746
        %v2748 = vpop.f32.mrb[0].mxu0
        %2749 = vmatprep.mubr.bf16.mxu0 0
        %2750 = vmatmul.mubr.bf16.gmra.mrb[0].mxu0 %v2645
        %v2751 = vpop.f32.mrb[0].mxu0
        %v2752 = vadd.f32 %v578, %v2751
        %v2753 = vpop.f32.mrb[0].mxu0
        %v2754 = vpop.f32.mrb[0].mxu0
        %v2755 = vadd.f32 %v579, %v2754
        %v2756 = vpop.f32.mrb[0].mxu0
        %2757 = vmatprep.mubr.bf16.mxu0 0
        %2758 = vmatmul.mubr.bf16.gmra.mrb[0].mxu0 %v2648
        %v2759 = vpop.f32.mrb[0].mxu0
        %v2760 = vadd.f32 %v580, %v2759
        %v2761 = vpop.f32.mrb[0].mxu0
        %v2762 = vpop.f32.mrb[0].mxu0
        %v2763 = vadd.f32 %v581, %v2762
        %v2764 = vpop.f32.mrb[0].mxu0
        %2765 = vmatprep.mubr.bf16.mxu0 0
        %2766 = vmatmul.mubr.bf16.gmra.mrb[0].mxu0 %v2651
        %v2767 = vpop.f32.mrb[0].mxu0
        %v2768 = vadd.f32 %v582, %v2767
        %v2769 = vpop.f32.mrb[0].mxu0
        %v2770 = vpop.f32.mrb[0].mxu0
        %v2771 = vadd.f32 %v583, %v2770
        %v2772 = vpop.f32.mrb[0].mxu0
        %2773 = vmatprep.mubr.bf16.mxu0 0
        %2774 = vmatmul.mubr.bf16.gmra.mrb[0].mxu0 %v2654
        %v2775 = vpop.f32.mrb[0].mxu0
        %v2776 = vadd.f32 %v584, %v2775
        %v2777 = vpop.f32.mrb[0].mxu0
        %v2778 = vpop.f32.mrb[0].mxu0
        %v2779 = vadd.f32 %v585, %v2778
        %v2780 = vpop.f32.mrb[0].mxu0
        %2781 = vmatprep.mubr.bf16.mxu0 0
        %2782 = vmatmul.mubr.bf16.gmra.mrb[0].mxu0 %v2657
        %v2783 = vpop.f32.mrb[0].mxu0
        %v2784 = vadd.f32 %v586, %v2783
        %v2785 = vpop.f32.mrb[0].mxu0
        %v2786 = vpop.f32.mrb[0].mxu0
        %v2787 = vadd.f32 %v587, %v2786
        %v2788 = vpop.f32.mrb[0].mxu0
        %2789 = vmatprep.mubr.bf16.mxu0 0
        %2790 = vmatmul.mubr.bf16.gmra.mrb[0].mxu0 %v2660
        %v2791 = vpop.f32.mrb[0].mxu0
        %v2792 = vadd.f32 %v588, %v2791
        %v2793 = vpop.f32.mrb[0].mxu0
        %v2794 = vpop.f32.mrb[0].mxu0
        %v2795 = vadd.f32 %v589, %v2794
        %v2796 = vpop.f32.mrb[0].mxu0
        %2797 = vmatprep.mubr.bf16.mxu0 0
        %2798 = vmatmul.mubr.bf16.gmra.mrb[0].mxu0 %v2663
        %v2799 = vpop.f32.mrb[0].mxu0
        %v2800 = vadd.f32 %v590, %v2799
        %v2801 = vpop.f32.mrb[0].mxu0
        %v2802 = vpop.f32.mrb[0].mxu0
        %v2803 = vadd.f32 %v591, %v2802
        %v2804 = vpop.f32.mrb[0].mxu0
        %2805 = vmatprep.mubr.bf16.mxu0 0
        %2806 = vmatmul.mubr.bf16.gmra.mrb[0].mxu0 %v2666
        %v2807 = vpop.f32.mrb[0].mxu0
        %v2808 = vadd.f32 %v592, %v2807
        %v2809 = vpop.f32.mrb[0].mxu0
        %v2810 = vpop.f32.mrb[0].mxu0
        %v2811 = vadd.f32 %v593, %v2810
        %v2812 = vpop.f32.mrb[0].mxu0
        %2813 = vmatprep.mubr.bf16.mxu0 0
        %2814 = vmatmul.mubr.bf16.gmra.mrb[0].mxu0 %v2669
        %v2815 = vpop.f32.mrb[0].mxu0
        %v2816 = vadd.f32 %v594, %v2815
        %v2817 = vpop.f32.mrb[0].mxu0
        %v2818 = vpop.f32.mrb[0].mxu0
        %v2819 = vadd.f32 %v595, %v2818
        %v2820 = vpop.f32.mrb[0].mxu0
        %2821 = vmatprep.mubr.bf16.mxu0 0
        %2822 = vmatmul.mubr.bf16.gmra.mrb[0].mxu0 %v2672
        %v2823 = vpop.f32.mrb[0].mxu0
        %v2824 = vadd.f32 %v596, %v2823
        %v2825 = vpop.f32.mrb[0].mxu0
        %v2826 = vpop.f32.mrb[0].mxu0
        %v2827 = vadd.f32 %v597, %v2826
        %v2828 = vpop.f32.mrb[0].mxu0
        %2829 = vmatprep.mubr.bf16.mxu0 0
        %2830 = vmatmul.mubr.bf16.gmra.mrb[0].mxu0 %v2675
        %v2831 = vpop.f32.mrb[0].mxu0
        %v2832 = vadd.f32 %v598, %v2831
        %v2833 = vpop.f32.mrb[0].mxu0
        %v2834 = vpop.f32.mrb[0].mxu0
        %v2835 = vadd.f32 %v599, %v2834
        %v2836 = vpop.f32.mrb[0].mxu0
        %2837 = vdwg.mxu0
        %2838 = vst [vmem:[%s556] sm:$0xff] %v2712
        %2839 = vst [vmem:[%s556 + $0x8] sm:$0xff] %v2715
        %2840 = vst [vmem:[%s556 + $0x10] sm:$0xff] %v2720
        %2841 = vst [vmem:[%s556 + $0x18] sm:$0xff] %v2723
        %2842 = vst [vmem:[%s556 + $0x20] sm:$0xff] %v2728
        %2843 = vst [vmem:[%s556 + $0x28] sm:$0xff] %v2731
        %2844 = vst [vmem:[%s556 + $0x30] sm:$0xff] %v2736
        %2845 = vst [vmem:[%s556 + $0x38] sm:$0xff] %v2739
        %2846 = vst [vmem:[%s556 + $0x40] sm:$0xff] %v2744
        %2847 = vst [vmem:[%s556 + $0x48] sm:$0xff] %v2747
        %2848 = vst [vmem:[%s556 + $0x50] sm:$0xff] %v2752
        %2849 = vst [vmem:[%s556 + $0x58] sm:$0xff] %v2755
        %2850 = vst [vmem:[%s556 + $0x60] sm:$0xff] %v2760
        %2851 = vst [vmem:[%s556 + $0x68] sm:$0xff] %v2763
        %2852 = vst [vmem:[%s556 + $0x70] sm:$0xff] %v2768
        %2853 = vst [vmem:[%s556 + $0x78] sm:$0xff] %v2771
        %2854 = vst [vmem:[%s556 + $0x80] sm:$0xff] %v2776
        %2855 = vst [vmem:[%s556 + $0x88] sm:$0xff] %v2779
        %2856 = vst [vmem:[%s556 + $0x90] sm:$0xff] %v2784
        %2857 = vst [vmem:[%s556 + $0x98] sm:$0xff] %v2787
        %2858 = vst [vmem:[%s556 + $0xa0] sm:$0xff] %v2792
        %2859 = vst [vmem:[%s556 + $0xa8] sm:$0xff] %v2795
        %2860 = vst [vmem:[%s556 + $0xb0] sm:$0xff] %v2800
        %2861 = vst [vmem:[%s556 + $0xb8] sm:$0xff] %v2803
        %2862 = vst [vmem:[%s556 + $0xc0] sm:$0xff] %v2808
        %2863 = vst [vmem:[%s556 + $0xc8] sm:$0xff] %v2811
        %2864 = vst [vmem:[%s556 + $0xd0] sm:$0xff] %v2816
        %2865 = vst [vmem:[%s556 + $0xd8] sm:$0xff] %v2819
        %2866 = vst [vmem:[%s556 + $0xe0] sm:$0xff] %v2824
        %2867 = vst [vmem:[%s556 + $0xe8] sm:$0xff] %v2827
        %2868 = vst [vmem:[%s556 + $0xf0] sm:$0xff] %v2832
        %2869 = vst [vmem:[%s556 + $0xf8] sm:$0xff] %v2835
        %s2870 = sand.u32 %s382, 1
        %s2871 = scalar_lea.sflag [#allocation4], %s2870
        %s2872 = sand.u32 %s382, 1
        %s2873 = smul.addr %s2872, 256
        %s2874 = scalar_lea.vmem [#allocation9], %s2873
        // Predicated region
        $region97: #{tpu_custom_call.1} parent=83 // pred_check
          %p2875 = pneg %p392
        $region98: #{tpu_custom_call.1} parent=83 // pred_check_branch
          %2877 = sbr.rel (%p2875) target = $region100
        $region99: #{tpu_custom_call.1} parent=83 // pred_region
          %s2879 = ssub.s32 4096, 4096
          %2880 = vsyncadd %s2871, %s2879
          %s2881 = smul.addr %s33, 32
          %s2882 = smul.addr %s2881, 128
          %s2883 = scalar_lea.hbm %s16, %s2882
          %s2884 = sshll.u32 %s2874, 4
          %s2885 = int_to_ptr.vmem [resolvable:$true] %s2884
          %2890 = dma.vmem_to_hbm [thread:$0]  %s2885, 4096, %s2883, %s2871, 128, 128, 8
        $region100: #{tpu_custom_call.1} parent=83 // pred_fallthru
          _
      $region84: #{tpu_custom_call.1} parent=5 // pred_fallthru
        _
      %p2891 = scmp.le.s32.totalorder 2, %s28
      // Predicated region
      $region101: #{tpu_custom_call.1} parent=5 // pred_check
        %p2892 = pneg %p2891
      $region102: #{tpu_custom_call.1} parent=5 // pred_check_branch
        %2894 = sbr.rel (%p2892) target = $region104
      $region103: #{tpu_custom_call.1} parent=5 // pred_region
        %s2895 = ssub.s32 %s28, 2
        // Predicated region
        $region105: #{tpu_custom_call.1} parent=103 // pred_check
          %p2896 = pneg %p398
        $region106: #{tpu_custom_call.1} parent=103 // pred_check_branch
          %2898 = sbr.rel (%p2896) target = $region108
        $region107: #{tpu_custom_call.1} parent=103 // pred_region
          %s2899 = sand.u32 %s383, 1
          %s2900 = scalar_lea.sflag [#allocation4], %s2899
          %s2901 = sand.u32 %s383, 1
          %s2902 = smul.addr %s2901, 256
          %s2903 = scalar_lea.vmem [#allocation9], %s2902
          %2904 = dma.done %s2900, 4096
        $region108: #{tpu_custom_call.1} parent=103 // pred_fallthru
          _
      $region104: #{tpu_custom_call.1} parent=5 // pred_fallthru
        _
    $region6: #{tpu_custom_call.1} parent=1 // loop_footer
      %s32 = sadd.s32 1, %s28
    $region7: #{tpu_custom_call.1} parent=1 // loop_footer_branch
      %27 = sbr.rel target = $region3
    $region8: #{tpu_custom_call.1} parent=1 // loop_exit
      _
    %2905 = vsyncpa [#allocation3], 1
    %s2906 = scalar_lea.sflag [#allocation3], 1
    %2907 = vsyncpa %s2906, 1
    %2908 = vsyncpa [#allocation4], 1
    %s2909 = scalar_lea.sflag [#allocation4], 1
    %2910 = vsyncpa %s2909, 1
    %2911 = vsyncpa [#allocation5], 1
    %s2912 = scalar_lea.sflag [#allocation5], 1
    %2913 = vsyncpa %s2912, 1
    %2914 = vsyncpa [#allocation8], 1

</llo_original>
